<compile_context>
chip_gen: v7x
topology: tpu7x:2x2x1
jax: 0.10.0
libtpu: 0.0.40
codegen_flags: <defaults>
</compile_context>

<pallas_src>
import math

import jax
import jax.numpy as jnp
from jax.experimental import pallas as pl
from jax.experimental.pallas import tpu as pltpu

# ----------------------------- model sizes (synthetic, small) ----------------
B, L, D, H, NLAYERS, EMBED = 2, 8, 32, 4, 2, 16
DH = D // H
FF = 4 * D
EPS = 1e-5
NEG_INF = -1e9  # equivalent to -inf after softmax, avoids inf arithmetic in-kernel


def _layer_norm(x, w, b):
    mu = jnp.mean(x, axis=-1, keepdims=True)
    var = jnp.mean((x - mu) ** 2, axis=-1, keepdims=True)
    return (x - mu) * jax.lax.rsqrt(var + EPS) * w + b


# ----------------------------- fused Pallas kernel ----------------------------
def fused_text_encoder_kernel(prompts_ref, pos_ref, mask_ref, eot_ref,
                              wqkv_ref, wo_ref, w1_ref, w2_ref, vecs_ref,
                              proj_ref, o_ref):
    x = prompts_ref[...] + pos_ref[...]            # (B, L, D) += positional embedding
    mask = mask_ref[...]                           # (L, L) causal mask

    # Static unroll over layers (NLAYERS is small).
    for layer in range(NLAYERS):
        vec = vecs_ref[layer]                      # (8, FF) packed per-layer vectors
        ln1_w, ln1_b = vec[0, :D], vec[1, :D]
        ln2_w, ln2_b = vec[2, :D], vec[3, :D]
        bo, b2 = vec[4, :D], vec[5, :D]
        bqkv = vec[6, :3 * D]                      # q-part already has 1/sqrt(DH) folded
        b1 = vec[7, :]

        # --- attention branch: dense fused qkv projection, dense out_proj ---
        h = _layer_norm(x, ln1_w, ln1_b)           # ln_1, (B, L, D)
        h2d = h.reshape(B * L, D)
        qkv = jnp.dot(h2d, wqkv_ref[layer],
                      preferred_element_type=jnp.float32) + bqkv      # (B*L, 3D)

        ctx_heads = []
        for hd in range(H):                        # per-head core only (DH=8 intrinsic)
            q_h = qkv[:, hd * DH:(hd + 1) * DH].reshape(B, L, DH)
            k_h = qkv[:, D + hd * DH:D + (hd + 1) * DH].reshape(B, L, DH)
            v_h = qkv[:, 2 * D + hd * DH:2 * D + (hd + 1) * DH].reshape(B, L, DH)
            s = jnp.einsum('bqe,bke->bqk', q_h, k_h,
                           preferred_element_type=jnp.float32) + mask
            s = s - jnp.max(s, axis=-1, keepdims=True)
            p = jnp.exp(s)
            p = p / jnp.sum(p, axis=-1, keepdims=True)   # exact divide (tolerance)
            ctx_heads.append(jnp.einsum('bqk,bke->bqe', p, v_h,
                                        preferred_element_type=jnp.float32))
        ctx2d = jnp.concatenate(ctx_heads, axis=-1).reshape(B * L, D)
        attn = jnp.dot(ctx2d, wo_ref[layer],
                       preferred_element_type=jnp.float32) + bo        # dense out_proj
        x = x + attn.reshape(B, L, D)              # residual 1

        # --- MLP branch (dense 2-D dots) ---
        h2 = _layer_norm(x, ln2_w, ln2_b).reshape(B * L, D)
        z = jnp.dot(h2, w1_ref[layer], preferred_element_type=jnp.float32) + b1
        z = z * jax.nn.sigmoid(1.702 * z)          # QuickGELU
        z = jnp.dot(z, w2_ref[layer], preferred_element_type=jnp.float32) + b2
        x = x + z.reshape(B, L, D)                 # residual 2

    # --- EOT-row selection (in-kernel one-hot from SMEM indices) ---
    rows = []
    for b in range(B):
        e = eot_ref[b]                                             # SMEM scalar
        iota_l = jax.lax.broadcasted_iota(jnp.int32, (L, 1), 0)
        oh = (iota_l == e).astype(jnp.float32)                     # (L, 1)
        rows.append(jnp.sum(x[b] * oh, axis=0, keepdims=True))     # (1, D)
    eot_x = jnp.concatenate(rows, axis=0)                          # (B, D)

    # --- ln_final + text_projection (row-select commutes with per-row LN) ---
    fvec = vecs_ref[NLAYERS]
    xn = _layer_norm(eot_x, fvec[0, :D], fvec[1, :D])
    o_ref[...] = jnp.dot(xn, proj_ref[...], preferred_element_type=jnp.float32)


# ----------------------------- parameter packing (once, outside kernel) ------
def _stack_params(params):
    """Stack lane-dense per-layer weights and pack all small vectors together."""
    scale = 1.0 / math.sqrt(DH)
    wqkv_l, wo_l, w1_l, w2_l, vec_l = [], [], [], [], []

    def pad_to_ff(v):
        return jnp.pad(v, (0, FF - v.shape[0]))

    for lp in params['layers']:
        wqkv = lp['wqkv_t'].at[:, :D].multiply(scale)    # fold attn scale into q cols
        bqkv = lp['bqkv'][0].at[:D].multiply(scale)
        wqkv_l.append(wqkv)                               # (D, 3D) lane-dense
        wo_l.append(lp['wo_t'])                           # (D, D)
        w1_l.append(lp['w1_t'])                           # (D, 4D)
        w2_l.append(lp['w2_t'])                           # (4D, D)
        vec_l.append(jnp.stack([                          # (8, 4D) packed vectors
            pad_to_ff(lp['ln1_w'][0]), pad_to_ff(lp['ln1_b'][0]),
            pad_to_ff(lp['ln2_w'][0]), pad_to_ff(lp['ln2_b'][0]),
            pad_to_ff(lp['bo'][0]), pad_to_ff(lp['b2'][0]),
            pad_to_ff(bqkv), lp['b1'][0],
        ]))
    # final "layer" slot carries ln_final weight/bias
    fvec = jnp.zeros((8, FF), jnp.float32)
    fvec = fvec.at[0, :D].set(params['lnf_w'][0])
    fvec = fvec.at[1, :D].set(params['lnf_b'][0])
    vec_l.append(fvec)

    return {
        'wqkv': jnp.stack(wqkv_l),    # (NLAYERS, D, 3D)
        'wo': jnp.stack(wo_l),        # (NLAYERS, D, D)
        'w1': jnp.stack(w1_l),        # (NLAYERS, D, 4D)
        'w2': jnp.stack(w2_l),        # (NLAYERS, 4D, D)
        'vecs': jnp.stack(vec_l),     # (NLAYERS+1, 8, 4D)
    }


# ----------------------------- wrapper -----------------------------------------
def text_encoder(params, stacked, prompts, tokenized_prompts):
    eot = jnp.argmax(tokenized_prompts, axis=-1).astype(jnp.int32)   # (B,) glue
    vmem = pl.BlockSpec(memory_space=pltpu.MemorySpace.VMEM)
    smem = pl.BlockSpec(memory_space=pltpu.MemorySpace.SMEM)
    # Single fused call: whole-array VMEM blocks, no grid (everything ~100 KB).
    return pl.pallas_call(
        fused_text_encoder_kernel,
        out_shape=jax.ShapeDtypeStruct((B, EMBED), jnp.float32),
        in_specs=[vmem, vmem, vmem, smem,
                  vmem, vmem, vmem, vmem, vmem, vmem],
    )(prompts, params['pos'], params['mask'], eot,
      stacked['wqkv'], stacked['wo'], stacked['w1'], stacked['w2'],
      stacked['vecs'], params['proj'])


# ----------------------------- deterministic parameter init -------------------
def init_params(key):
    k_iter = iter(jax.random.split(key, 64))
    nk = lambda: next(k_iter)
    params = {
        'pos': 0.01 * jax.random.normal(nk(), (L, D), jnp.float32),
        'mask': jnp.where(jnp.triu(jnp.ones((L, L), jnp.bool_), k=1),
                          jnp.float32(NEG_INF), jnp.float32(0.0)),
        'lnf_w': jnp.ones((1, D), jnp.float32),
        'lnf_b': jnp.zeros((1, D), jnp.float32),
        'proj': 0.02 * jax.random.normal(nk(), (D, EMBED), jnp.float32),
        'layers': [],
    }
    for _ in range(NLAYERS):
        params['layers'].append({
            'ln1_w': jnp.ones((1, D), jnp.float32),
            'ln1_b': jnp.zeros((1, D), jnp.float32),
            'wqkv_t': 0.02 * jax.random.normal(nk(), (D, 3 * D), jnp.float32),
            'bqkv': jnp.zeros((1, 3 * D), jnp.float32),
            'wo_t': 0.02 * jax.random.normal(nk(), (D, D), jnp.float32),
            'bo': jnp.zeros((1, D), jnp.float32),
            'ln2_w': jnp.ones((1, D), jnp.float32),
            'ln2_b': jnp.zeros((1, D), jnp.float32),
            'w1_t': 0.02 * jax.random.normal(nk(), (D, 4 * D), jnp.float32),
            'b1': jnp.zeros((1, 4 * D), jnp.float32),
            'w2_t': 0.02 * jax.random.normal(nk(), (4 * D, D), jnp.float32),
            'b2': jnp.zeros((1, D), jnp.float32),
        })
    return params


# ----------------------------- pure-JAX reference ------------------------------
def reference_forward(params, prompts, tokenized_prompts):
    x = prompts + params['pos'][None]
    for lp in params['layers']:
        xn = _layer_norm(x, lp['ln1_w'][0], lp['ln1_b'][0])
        qkv = xn @ lp['wqkv_t'] + lp['bqkv'][0]
        q, k, v = jnp.split(qkv, 3, axis=-1)
        q = q.reshape(B, L, H, DH).transpose(0, 2, 1, 3) / math.sqrt(DH)
        k = k.reshape(B, L, H, DH).transpose(0, 2, 1, 3)
        v = v.reshape(B, L, H, DH).transpose(0, 2, 1, 3)
        s = jnp.einsum('bhqd,bhkd->bhqk', q, k) + params['mask']
        p = jax.nn.softmax(s, axis=-1)
        a = jnp.einsum('bhqk,bhkd->bhqd', p, v).transpose(0, 2, 1, 3).reshape(B, L, D)
        x = x + a @ lp['wo_t'] + lp['bo'][0]
        xn2 = _layer_norm(x, lp['ln2_w'][0], lp['ln2_b'][0])
        z = xn2 @ lp['w1_t'] + lp['b1'][0]
        z = z * jax.nn.sigmoid(1.702 * z)
        x = x + z @ lp['w2_t'] + lp['b2'][0]
    xn = _layer_norm(x, params['lnf_w'][0], params['lnf_b'][0])
    eot = jnp.argmax(tokenized_prompts, axis=-1)
    return xn[jnp.arange(B), eot] @ params['proj']


if __name__ == "__main__":
    key = jax.random.PRNGKey(0)
    kp, kx, kt = jax.random.split(key, 3)
    params = init_params(kp)
    stacked = _stack_params(params)                 # one-time weight packing
    prompts = jax.random.normal(kx, (B, L, D), jnp.float32)       # learned prompt embeddings
    tokenized_prompts = jax.random.randint(kt, (B, L), 0, 1000, jnp.int32)

    fwd = jax.jit(lambda p, t: text_encoder(params, stacked, p, t))
    out = jax.block_until_ready(fwd(prompts, tokenized_prompts))

    ref = reference_forward(params, prompts, tokenized_prompts)
    assert out.shape == (B, EMBED)
    assert jnp.allclose(out, ref, atol=1e-4, rtol=1e-4), float(jnp.max(jnp.abs(out - ref)))
    print("KERNEL_OK")
</pallas_src>

<mosaic_0001>
module attributes {stable_mosaic.version = 11 : i64} {
  func.func @fused_text_encoder_kernel(%arg0: memref<2x8x32xf32, #tpu.memory_space<vmem>>, %arg1: memref<8x32xf32, #tpu.memory_space<vmem>>, %arg2: memref<8x8xf32, #tpu.memory_space<vmem>>, %arg3: memref<2xi32, #tpu.memory_space<smem>>, %arg4: memref<2x32x96xf32, #tpu.memory_space<vmem>>, %arg5: memref<2x32x32xf32, #tpu.memory_space<vmem>>, %arg6: memref<2x32x128xf32, #tpu.memory_space<vmem>>, %arg7: memref<2x128x32xf32, #tpu.memory_space<vmem>>, %arg8: memref<3x8x128xf32, #tpu.memory_space<vmem>>, %arg9: memref<32x16xf32, #tpu.memory_space<vmem>>, %arg10: memref<2x16xf32, #tpu.memory_space<vmem>>) attributes {dimension_semantics = [], scalar_prefetch = 0 : i64, scratch_operands = 0 : i64, tpu.core_type = #tpu.core_type<tc>} {
    %c0 = arith.constant 0 : index
    %c0_0 = arith.constant 0 : index
    %c0_1 = arith.constant 0 : index
    %0 = vector.load %arg0[%c0, %c0_0, %c0_1] : memref<2x8x32xf32, #tpu.memory_space<vmem>>, vector<2x8x32xf32>
    %c0_2 = arith.constant 0 : index
    %c0_3 = arith.constant 0 : index
    %1 = vector.load %arg1[%c0_2, %c0_3] : memref<8x32xf32, #tpu.memory_space<vmem>>, vector<8x32xf32>
    %2 = vector.shape_cast %1 : vector<8x32xf32> to vector<1x8x32xf32>
    %3 = vector.broadcast %2 : vector<1x8x32xf32> to vector<2x8x32xf32>
    %4 = arith.addf %0, %3 : vector<2x8x32xf32>
    %c0_4 = arith.constant 0 : index
    %c0_5 = arith.constant 0 : index
    %5 = vector.load %arg2[%c0_4, %c0_5] : memref<8x8xf32, #tpu.memory_space<vmem>>, vector<8x8xf32>
    %c0_6 = arith.constant 0 : index
    %c0_7 = arith.constant 0 : index
    %c0_8 = arith.constant 0 : index
    %6 = vector.load %arg8[%c0_6, %c0_7, %c0_8] : memref<3x8x128xf32, #tpu.memory_space<vmem>>, vector<1x8x128xf32>
    %7 = vector.shape_cast %6 : vector<1x8x128xf32> to vector<8x128xf32>
    %8 = vector.extract_strided_slice %7 {offsets = [0, 0], sizes = [1, 32], strides = [1, 1]} : vector<8x128xf32> to vector<1x32xf32>
    %9 = vector.shape_cast %8 : vector<1x32xf32> to vector<32xf32>
    %10 = vector.extract_strided_slice %7 {offsets = [1, 0], sizes = [1, 32], strides = [1, 1]} : vector<8x128xf32> to vector<1x32xf32>
    %11 = vector.shape_cast %10 : vector<1x32xf32> to vector<32xf32>
    %12 = vector.extract_strided_slice %7 {offsets = [2, 0], sizes = [1, 32], strides = [1, 1]} : vector<8x128xf32> to vector<1x32xf32>
    %13 = vector.shape_cast %12 : vector<1x32xf32> to vector<32xf32>
    %14 = vector.extract_strided_slice %7 {offsets = [3, 0], sizes = [1, 32], strides = [1, 1]} : vector<8x128xf32> to vector<1x32xf32>
    %15 = vector.shape_cast %14 : vector<1x32xf32> to vector<32xf32>
    %16 = vector.extract_strided_slice %7 {offsets = [4, 0], sizes = [1, 32], strides = [1, 1]} : vector<8x128xf32> to vector<1x32xf32>
    %17 = vector.shape_cast %16 : vector<1x32xf32> to vector<32xf32>
    %18 = vector.extract_strided_slice %7 {offsets = [5, 0], sizes = [1, 32], strides = [1, 1]} : vector<8x128xf32> to vector<1x32xf32>
    %19 = vector.shape_cast %18 : vector<1x32xf32> to vector<32xf32>
    %20 = vector.extract_strided_slice %7 {offsets = [6, 0], sizes = [1, 96], strides = [1, 1]} : vector<8x128xf32> to vector<1x96xf32>
    %21 = vector.shape_cast %20 : vector<1x96xf32> to vector<96xf32>
    %22 = vector.extract_strided_slice %7 {offsets = [7, 0], sizes = [1, 128], strides = [1, 1]} : vector<8x128xf32> to vector<1x128xf32>
    %23 = vector.shape_cast %22 : vector<1x128xf32> to vector<128xf32>
    %cst = arith.constant dense<0.000000e+00> : vector<2x8xf32>
    %24 = vector.multi_reduction <add>, %4, %cst [2] : vector<2x8x32xf32> to vector<2x8xf32>
    %25 = vector.shape_cast %24 : vector<2x8xf32> to vector<2x8x1xf32>
    %cst_9 = arith.constant 3.200000e+01 : f32
    %26 = vector.broadcast %cst_9 : f32 to vector<2x8x1xf32>
    %27 = arith.divf %25, %26 : vector<2x8x1xf32>
    %28 = vector.broadcast %27 : vector<2x8x1xf32> to vector<2x8x32xf32>
    %29 = arith.subf %4, %28 : vector<2x8x32xf32>
    %30 = arith.mulf %29, %29 : vector<2x8x32xf32>
    %cst_10 = arith.constant dense<0.000000e+00> : vector<2x8xf32>
    %31 = vector.multi_reduction <add>, %30, %cst_10 [2] : vector<2x8x32xf32> to vector<2x8xf32>
    %32 = vector.shape_cast %31 : vector<2x8xf32> to vector<2x8x1xf32>
    %cst_11 = arith.constant 3.200000e+01 : f32
    %33 = vector.broadcast %cst_11 : f32 to vector<2x8x1xf32>
    %34 = arith.divf %32, %33 : vector<2x8x1xf32>
    %35 = vector.broadcast %27 : vector<2x8x1xf32> to vector<2x8x32xf32>
    %36 = arith.subf %4, %35 : vector<2x8x32xf32>
    %cst_12 = arith.constant 9.99999974E-6 : f32
    %37 = vector.broadcast %cst_12 : f32 to vector<2x8x1xf32>
    %38 = arith.addf %34, %37 : vector<2x8x1xf32>
    %39 = math.rsqrt %38 : vector<2x8x1xf32>
    %40 = vector.broadcast %39 : vector<2x8x1xf32> to vector<2x8x32xf32>
    %41 = arith.mulf %36, %40 : vector<2x8x32xf32>
    %42 = vector.shape_cast %9 : vector<32xf32> to vector<1x1x32xf32>
    %43 = vector.broadcast %42 : vector<1x1x32xf32> to vector<2x8x32xf32>
    %44 = arith.mulf %41, %43 : vector<2x8x32xf32>
    %45 = vector.shape_cast %11 : vector<32xf32> to vector<1x1x32xf32>
    %46 = vector.broadcast %45 : vector<1x1x32xf32> to vector<2x8x32xf32>
    %47 = arith.addf %44, %46 : vector<2x8x32xf32>
    %48 = vector.shape_cast %47 : vector<2x8x32xf32> to vector<16x32xf32>
    %c0_13 = arith.constant 0 : index
    %c0_14 = arith.constant 0 : index
    %c0_15 = arith.constant 0 : index
    %49 = vector.load %arg4[%c0_13, %c0_14, %c0_15] : memref<2x32x96xf32, #tpu.memory_space<vmem>>, vector<1x32x96xf32>
    %50 = vector.shape_cast %49 : vector<1x32x96xf32> to vector<32x96xf32>
    %cst_16 = arith.constant dense<0.000000e+00> : vector<16x96xf32>
    %51 = tpu.matmul %48, %50, %cst_16 {dimension_numbers = #tpu.dot_dimension_numbers<[1], [0], [0], [1], [0, 0, 1, 1], [], []>} : vector<16x32xf32>, vector<32x96xf32>, vector<16x96xf32> -> vector<16x96xf32>
    %52 = vector.shape_cast %21 : vector<96xf32> to vector<1x96xf32>
    %53 = vector.broadcast %52 : vector<1x96xf32> to vector<16x96xf32>
    %54 = arith.addf %51, %53 : vector<16x96xf32>
    %55 = vector.extract_strided_slice %54 {offsets = [0, 0], sizes = [16, 8], strides = [1, 1]} : vector<16x96xf32> to vector<16x8xf32>
    %56 = vector.shape_cast %55 : vector<16x8xf32> to vector<2x8x8xf32>
    %57 = vector.extract_strided_slice %54 {offsets = [0, 32], sizes = [16, 8], strides = [1, 1]} : vector<16x96xf32> to vector<16x8xf32>
    %58 = vector.shape_cast %57 : vector<16x8xf32> to vector<2x8x8xf32>
    %59 = vector.extract_strided_slice %54 {offsets = [0, 64], sizes = [16, 8], strides = [1, 1]} : vector<16x96xf32> to vector<16x8xf32>
    %60 = vector.shape_cast %59 : vector<16x8xf32> to vector<2x8x8xf32>
    "tpu.trace_start"() <{level = 10 : i32, message = "bqe,bke->bqk"}> : () -> ()
    %cst_17 = arith.constant dense<0.000000e+00> : vector<2x8x8xf32>
    %61 = tpu.matmul %56, %58, %cst_17 {dimension_numbers = #tpu.dot_dimension_numbers<[2], [2], [1], [1], [0, 0, 0, 1, 1, 1], [0], [0]>} : vector<2x8x8xf32>, vector<2x8x8xf32>, vector<2x8x8xf32> -> vector<2x8x8xf32>
    "tpu.trace_stop"() : () -> ()
    %62 = vector.shape_cast %5 : vector<8x8xf32> to vector<1x8x8xf32>
    %63 = vector.broadcast %62 : vector<1x8x8xf32> to vector<2x8x8xf32>
    %64 = arith.addf %61, %63 : vector<2x8x8xf32>
    %cst_18 = arith.constant dense<0xFF800000> : vector<2x8xf32>
    %65 = vector.multi_reduction <maximumf>, %64, %cst_18 [2] : vector<2x8x8xf32> to vector<2x8xf32>
    %66 = vector.shape_cast %65 : vector<2x8xf32> to vector<2x8x1xf32>
    %67 = vector.broadcast %66 : vector<2x8x1xf32> to vector<2x8x8xf32>
    %68 = arith.subf %64, %67 : vector<2x8x8xf32>
    %69 = math.exp %68 : vector<2x8x8xf32>
    %cst_19 = arith.constant dense<0.000000e+00> : vector<2x8xf32>
    %70 = vector.multi_reduction <add>, %69, %cst_19 [2] : vector<2x8x8xf32> to vector<2x8xf32>
    %71 = vector.shape_cast %70 : vector<2x8xf32> to vector<2x8x1xf32>
    %72 = vector.broadcast %71 : vector<2x8x1xf32> to vector<2x8x8xf32>
    %73 = arith.divf %69, %72 : vector<2x8x8xf32>
    "tpu.trace_start"() <{level = 10 : i32, message = "bqk,bke->bqe"}> : () -> ()
    %cst_20 = arith.constant dense<0.000000e+00> : vector<2x8x8xf32>
    %74 = tpu.matmul %73, %60, %cst_20 {dimension_numbers = #tpu.dot_dimension_numbers<[2], [1], [1], [2], [0, 0, 0, 1, 1, 2], [0], [0]>} : vector<2x8x8xf32>, vector<2x8x8xf32>, vector<2x8x8xf32> -> vector<2x8x8xf32>
    "tpu.trace_stop"() : () -> ()
    %75 = vector.extract_strided_slice %54 {offsets = [0, 8], sizes = [16, 8], strides = [1, 1]} : vector<16x96xf32> to vector<16x8xf32>
    %76 = vector.shape_cast %75 : vector<16x8xf32> to vector<2x8x8xf32>
    %77 = vector.extract_strided_slice %54 {offsets = [0, 40], sizes = [16, 8], strides = [1, 1]} : vector<16x96xf32> to vector<16x8xf32>
    %78 = vector.shape_cast %77 : vector<16x8xf32> to vector<2x8x8xf32>
    %79 = vector.extract_strided_slice %54 {offsets = [0, 72], sizes = [16, 8], strides = [1, 1]} : vector<16x96xf32> to vector<16x8xf32>
    %80 = vector.shape_cast %79 : vector<16x8xf32> to vector<2x8x8xf32>
    "tpu.trace_start"() <{level = 10 : i32, message = "bqe,bke->bqk"}> : () -> ()
    %cst_21 = arith.constant dense<0.000000e+00> : vector<2x8x8xf32>
    %81 = tpu.matmul %76, %78, %cst_21 {dimension_numbers = #tpu.dot_dimension_numbers<[2], [2], [1], [1], [0, 0, 0, 1, 1, 1], [0], [0]>} : vector<2x8x8xf32>, vector<2x8x8xf32>, vector<2x8x8xf32> -> vector<2x8x8xf32>
    "tpu.trace_stop"() : () -> ()
    %82 = vector.shape_cast %5 : vector<8x8xf32> to vector<1x8x8xf32>
    %83 = vector.broadcast %82 : vector<1x8x8xf32> to vector<2x8x8xf32>
    %84 = arith.addf %81, %83 : vector<2x8x8xf32>
    %cst_22 = arith.constant dense<0xFF800000> : vector<2x8xf32>
    %85 = vector.multi_reduction <maximumf>, %84, %cst_22 [2] : vector<2x8x8xf32> to vector<2x8xf32>
    %86 = vector.shape_cast %85 : vector<2x8xf32> to vector<2x8x1xf32>
    %87 = vector.broadcast %86 : vector<2x8x1xf32> to vector<2x8x8xf32>
    %88 = arith.subf %84, %87 : vector<2x8x8xf32>
    %89 = math.exp %88 : vector<2x8x8xf32>
    %cst_23 = arith.constant dense<0.000000e+00> : vector<2x8xf32>
    %90 = vector.multi_reduction <add>, %89, %cst_23 [2] : vector<2x8x8xf32> to vector<2x8xf32>
    %91 = vector.shape_cast %90 : vector<2x8xf32> to vector<2x8x1xf32>
    %92 = vector.broadcast %91 : vector<2x8x1xf32> to vector<2x8x8xf32>
    %93 = arith.divf %89, %92 : vector<2x8x8xf32>
    "tpu.trace_start"() <{level = 10 : i32, message = "bqk,bke->bqe"}> : () -> ()
    %cst_24 = arith.constant dense<0.000000e+00> : vector<2x8x8xf32>
    %94 = tpu.matmul %93, %80, %cst_24 {dimension_numbers = #tpu.dot_dimension_numbers<[2], [1], [1], [2], [0, 0, 0, 1, 1, 2], [0], [0]>} : vector<2x8x8xf32>, vector<2x8x8xf32>, vector<2x8x8xf32> -> vector<2x8x8xf32>
    "tpu.trace_stop"() : () -> ()
    %95 = vector.extract_strided_slice %54 {offsets = [0, 16], sizes = [16, 8], strides = [1, 1]} : vector<16x96xf32> to vector<16x8xf32>
    %96 = vector.shape_cast %95 : vector<16x8xf32> to vector<2x8x8xf32>
    %97 = vector.extract_strided_slice %54 {offsets = [0, 48], sizes = [16, 8], strides = [1, 1]} : vector<16x96xf32> to vector<16x8xf32>
    %98 = vector.shape_cast %97 : vector<16x8xf32> to vector<2x8x8xf32>
    %99 = vector.extract_strided_slice %54 {offsets = [0, 80], sizes = [16, 8], strides = [1, 1]} : vector<16x96xf32> to vector<16x8xf32>
    %100 = vector.shape_cast %99 : vector<16x8xf32> to vector<2x8x8xf32>
    "tpu.trace_start"() <{level = 10 : i32, message = "bqe,bke->bqk"}> : () -> ()
    %cst_25 = arith.constant dense<0.000000e+00> : vector<2x8x8xf32>
    %101 = tpu.matmul %96, %98, %cst_25 {dimension_numbers = #tpu.dot_dimension_numbers<[2], [2], [1], [1], [0, 0, 0, 1, 1, 1], [0], [0]>} : vector<2x8x8xf32>, vector<2x8x8xf32>, vector<2x8x8xf32> -> vector<2x8x8xf32>
    "tpu.trace_stop"() : () -> ()
    %102 = vector.shape_cast %5 : vector<8x8xf32> to vector<1x8x8xf32>
    %103 = vector.broadcast %102 : vector<1x8x8xf32> to vector<2x8x8xf32>
    %104 = arith.addf %101, %103 : vector<2x8x8xf32>
    %cst_26 = arith.constant dense<0xFF800000> : vector<2x8xf32>
    %105 = vector.multi_reduction <maximumf>, %104, %cst_26 [2] : vector<2x8x8xf32> to vector<2x8xf32>
    %106 = vector.shape_cast %105 : vector<2x8xf32> to vector<2x8x1xf32>
    %107 = vector.broadcast %106 : vector<2x8x1xf32> to vector<2x8x8xf32>
    %108 = arith.subf %104, %107 : vector<2x8x8xf32>
    %109 = math.exp %108 : vector<2x8x8xf32>
    %cst_27 = arith.constant dense<0.000000e+00> : vector<2x8xf32>
    %110 = vector.multi_reduction <add>, %109, %cst_27 [2] : vector<2x8x8xf32> to vector<2x8xf32>
    %111 = vector.shape_cast %110 : vector<2x8xf32> to vector<2x8x1xf32>
    %112 = vector.broadcast %111 : vector<2x8x1xf32> to vector<2x8x8xf32>
    %113 = arith.divf %109, %112 : vector<2x8x8xf32>
    "tpu.trace_start"() <{level = 10 : i32, message = "bqk,bke->bqe"}> : () -> ()
    %cst_28 = arith.constant dense<0.000000e+00> : vector<2x8x8xf32>
    %114 = tpu.matmul %113, %100, %cst_28 {dimension_numbers = #tpu.dot_dimension_numbers<[2], [1], [1], [2], [0, 0, 0, 1, 1, 2], [0], [0]>} : vector<2x8x8xf32>, vector<2x8x8xf32>, vector<2x8x8xf32> -> vector<2x8x8xf32>
    "tpu.trace_stop"() : () -> ()
    %115 = vector.extract_strided_slice %54 {offsets = [0, 24], sizes = [16, 8], strides = [1, 1]} : vector<16x96xf32> to vector<16x8xf32>
    %116 = vector.shape_cast %115 : vector<16x8xf32> to vector<2x8x8xf32>
    %117 = vector.extract_strided_slice %54 {offsets = [0, 56], sizes = [16, 8], strides = [1, 1]} : vector<16x96xf32> to vector<16x8xf32>
    %118 = vector.shape_cast %117 : vector<16x8xf32> to vector<2x8x8xf32>
    %119 = vector.extract_strided_slice %54 {offsets = [0, 88], sizes = [16, 8], strides = [1, 1]} : vector<16x96xf32> to vector<16x8xf32>
    %120 = vector.shape_cast %119 : vector<16x8xf32> to vector<2x8x8xf32>
    "tpu.trace_start"() <{level = 10 : i32, message = "bqe,bke->bqk"}> : () -> ()
    %cst_29 = arith.constant dense<0.000000e+00> : vector<2x8x8xf32>
    %121 = tpu.matmul %116, %118, %cst_29 {dimension_numbers = #tpu.dot_dimension_numbers<[2], [2], [1], [1], [0, 0, 0, 1, 1, 1], [0], [0]>} : vector<2x8x8xf32>, vector<2x8x8xf32>, vector<2x8x8xf32> -> vector<2x8x8xf32>
    "tpu.trace_stop"() : () -> ()
    %122 = vector.shape_cast %5 : vector<8x8xf32> to vector<1x8x8xf32>
    %123 = vector.broadcast %122 : vector<1x8x8xf32> to vector<2x8x8xf32>
    %124 = arith.addf %121, %123 : vector<2x8x8xf32>
    %cst_30 = arith.constant dense<0xFF800000> : vector<2x8xf32>
    %125 = vector.multi_reduction <maximumf>, %124, %cst_30 [2] : vector<2x8x8xf32> to vector<2x8xf32>
    %126 = vector.shape_cast %125 : vector<2x8xf32> to vector<2x8x1xf32>
    %127 = vector.broadcast %126 : vector<2x8x1xf32> to vector<2x8x8xf32>
    %128 = arith.subf %124, %127 : vector<2x8x8xf32>
    %129 = math.exp %128 : vector<2x8x8xf32>
    %cst_31 = arith.constant dense<0.000000e+00> : vector<2x8xf32>
    %130 = vector.multi_reduction <add>, %129, %cst_31 [2] : vector<2x8x8xf32> to vector<2x8xf32>
    %131 = vector.shape_cast %130 : vector<2x8xf32> to vector<2x8x1xf32>
    %132 = vector.broadcast %131 : vector<2x8x1xf32> to vector<2x8x8xf32>
    %133 = arith.divf %129, %132 : vector<2x8x8xf32>
    "tpu.trace_start"() <{level = 10 : i32, message = "bqk,bke->bqe"}> : () -> ()
    %cst_32 = arith.constant dense<0.000000e+00> : vector<2x8x8xf32>
    %134 = tpu.matmul %133, %120, %cst_32 {dimension_numbers = #tpu.dot_dimension_numbers<[2], [1], [1], [2], [0, 0, 0, 1, 1, 2], [0], [0]>} : vector<2x8x8xf32>, vector<2x8x8xf32>, vector<2x8x8xf32> -> vector<2x8x8xf32>
    "tpu.trace_stop"() : () -> ()
    %135 = tpu.concatenate %74, %94, %114, %134 in 2 : vector<2x8x8xf32>, vector<2x8x8xf32>, vector<2x8x8xf32>, vector<2x8x8xf32> -> vector<2x8x32xf32>
    %136 = vector.shape_cast %135 : vector<2x8x32xf32> to vector<16x32xf32>
    %c0_33 = arith.constant 0 : index
    %c0_34 = arith.constant 0 : index
    %c0_35 = arith.constant 0 : index
    %137 = vector.load %arg5[%c0_33, %c0_34, %c0_35] : memref<2x32x32xf32, #tpu.memory_space<vmem>>, vector<1x32x32xf32>
    %138 = vector.shape_cast %137 : vector<1x32x32xf32> to vector<32x32xf32>
    %cst_36 = arith.constant dense<0.000000e+00> : vector<16x32xf32>
    %139 = tpu.matmul %136, %138, %cst_36 {dimension_numbers = #tpu.dot_dimension_numbers<[1], [0], [0], [1], [0, 0, 1, 1], [], []>} : vector<16x32xf32>, vector<32x32xf32>, vector<16x32xf32> -> vector<16x32xf32>
    %140 = vector.shape_cast %17 : vector<32xf32> to vector<1x32xf32>
    %141 = vector.broadcast %140 : vector<1x32xf32> to vector<16x32xf32>
    %142 = arith.addf %139, %141 : vector<16x32xf32>
    %143 = vector.shape_cast %142 : vector<16x32xf32> to vector<2x8x32xf32>
    %144 = arith.addf %4, %143 : vector<2x8x32xf32>
    %cst_37 = arith.constant dense<0.000000e+00> : vector<2x8xf32>
    %145 = vector.multi_reduction <add>, %144, %cst_37 [2] : vector<2x8x32xf32> to vector<2x8xf32>
    %146 = vector.shape_cast %145 : vector<2x8xf32> to vector<2x8x1xf32>
    %cst_38 = arith.constant 3.200000e+01 : f32
    %147 = vector.broadcast %cst_38 : f32 to vector<2x8x1xf32>
    %148 = arith.divf %146, %147 : vector<2x8x1xf32>
    %149 = vector.broadcast %148 : vector<2x8x1xf32> to vector<2x8x32xf32>
    %150 = arith.subf %144, %149 : vector<2x8x32xf32>
    %151 = arith.mulf %150, %150 : vector<2x8x32xf32>
    %cst_39 = arith.constant dense<0.000000e+00> : vector<2x8xf32>
    %152 = vector.multi_reduction <add>, %151, %cst_39 [2] : vector<2x8x32xf32> to vector<2x8xf32>
    %153 = vector.shape_cast %152 : vector<2x8xf32> to vector<2x8x1xf32>
    %cst_40 = arith.constant 3.200000e+01 : f32
    %154 = vector.broadcast %cst_40 : f32 to vector<2x8x1xf32>
    %155 = arith.divf %153, %154 : vector<2x8x1xf32>
    %156 = vector.broadcast %148 : vector<2x8x1xf32> to vector<2x8x32xf32>
    %157 = arith.subf %144, %156 : vector<2x8x32xf32>
    %cst_41 = arith.constant 9.99999974E-6 : f32
    %158 = vector.broadcast %cst_41 : f32 to vector<2x8x1xf32>
    %159 = arith.addf %155, %158 : vector<2x8x1xf32>
    %160 = math.rsqrt %159 : vector<2x8x1xf32>
    %161 = vector.broadcast %160 : vector<2x8x1xf32> to vector<2x8x32xf32>
    %162 = arith.mulf %157, %161 : vector<2x8x32xf32>
    %163 = vector.shape_cast %13 : vector<32xf32> to vector<1x1x32xf32>
    %164 = vector.broadcast %163 : vector<1x1x32xf32> to vector<2x8x32xf32>
    %165 = arith.mulf %162, %164 : vector<2x8x32xf32>
    %166 = vector.shape_cast %15 : vector<32xf32> to vector<1x1x32xf32>
    %167 = vector.broadcast %166 : vector<1x1x32xf32> to vector<2x8x32xf32>
    %168 = arith.addf %165, %167 : vector<2x8x32xf32>
    %169 = vector.shape_cast %168 : vector<2x8x32xf32> to vector<16x32xf32>
    %c0_42 = arith.constant 0 : index
    %c0_43 = arith.constant 0 : index
    %c0_44 = arith.constant 0 : index
    %170 = vector.load %arg6[%c0_42, %c0_43, %c0_44] : memref<2x32x128xf32, #tpu.memory_space<vmem>>, vector<1x32x128xf32>
    %171 = vector.shape_cast %170 : vector<1x32x128xf32> to vector<32x128xf32>
    %cst_45 = arith.constant dense<0.000000e+00> : vector<16x128xf32>
    %172 = tpu.matmul %169, %171, %cst_45 {dimension_numbers = #tpu.dot_dimension_numbers<[1], [0], [0], [1], [0, 0, 1, 1], [], []>} : vector<16x32xf32>, vector<32x128xf32>, vector<16x128xf32> -> vector<16x128xf32>
    %173 = vector.shape_cast %23 : vector<128xf32> to vector<1x128xf32>
    %174 = vector.broadcast %173 : vector<1x128xf32> to vector<16x128xf32>
    %175 = arith.addf %172, %174 : vector<16x128xf32>
    %cst_46 = arith.constant 1.702000e+00 : f32
    %176 = vector.broadcast %cst_46 : f32 to vector<16x128xf32>
    %177 = arith.mulf %176, %175 : vector<16x128xf32>
    %178 = arith.negf %177 : vector<16x128xf32>
    %179 = math.exp %178 : vector<16x128xf32>
    %cst_47 = arith.constant 1.000000e+00 : f32
    %180 = vector.broadcast %cst_47 : f32 to vector<16x128xf32>
    %181 = arith.addf %180, %179 : vector<16x128xf32>
    %182 = arith.divf %180, %181 : vector<16x128xf32>
    %183 = arith.mulf %175, %182 : vector<16x128xf32>
    %c0_48 = arith.constant 0 : index
    %c0_49 = arith.constant 0 : index
    %c0_50 = arith.constant 0 : index
    %184 = vector.load %arg7[%c0_48, %c0_49, %c0_50] : memref<2x128x32xf32, #tpu.memory_space<vmem>>, vector<1x128x32xf32>
    %185 = vector.shape_cast %184 : vector<1x128x32xf32> to vector<128x32xf32>
    %cst_51 = arith.constant dense<0.000000e+00> : vector<16x32xf32>
    %186 = tpu.matmul %183, %185, %cst_51 {dimension_numbers = #tpu.dot_dimension_numbers<[1], [0], [0], [1], [0, 0, 1, 1], [], []>} : vector<16x128xf32>, vector<128x32xf32>, vector<16x32xf32> -> vector<16x32xf32>
    %187 = vector.shape_cast %19 : vector<32xf32> to vector<1x32xf32>
    %188 = vector.broadcast %187 : vector<1x32xf32> to vector<16x32xf32>
    %189 = arith.addf %186, %188 : vector<16x32xf32>
    %190 = vector.shape_cast %189 : vector<16x32xf32> to vector<2x8x32xf32>
    %191 = arith.addf %144, %190 : vector<2x8x32xf32>
    %c1 = arith.constant 1 : index
    %c0_52 = arith.constant 0 : index
    %c0_53 = arith.constant 0 : index
    %192 = vector.load %arg8[%c1, %c0_52, %c0_53] : memref<3x8x128xf32, #tpu.memory_space<vmem>>, vector<1x8x128xf32>
    %193 = vector.shape_cast %192 : vector<1x8x128xf32> to vector<8x128xf32>
    %194 = vector.extract_strided_slice %193 {offsets = [0, 0], sizes = [1, 32], strides = [1, 1]} : vector<8x128xf32> to vector<1x32xf32>
    %195 = vector.shape_cast %194 : vector<1x32xf32> to vector<32xf32>
    %196 = vector.extract_strided_slice %193 {offsets = [1, 0], sizes = [1, 32], strides = [1, 1]} : vector<8x128xf32> to vector<1x32xf32>
    %197 = vector.shape_cast %196 : vector<1x32xf32> to vector<32xf32>
    %198 = vector.extract_strided_slice %193 {offsets = [2, 0], sizes = [1, 32], strides = [1, 1]} : vector<8x128xf32> to vector<1x32xf32>
    %199 = vector.shape_cast %198 : vector<1x32xf32> to vector<32xf32>
    %200 = vector.extract_strided_slice %193 {offsets = [3, 0], sizes = [1, 32], strides = [1, 1]} : vector<8x128xf32> to vector<1x32xf32>
    %201 = vector.shape_cast %200 : vector<1x32xf32> to vector<32xf32>
    %202 = vector.extract_strided_slice %193 {offsets = [4, 0], sizes = [1, 32], strides = [1, 1]} : vector<8x128xf32> to vector<1x32xf32>
    %203 = vector.shape_cast %202 : vector<1x32xf32> to vector<32xf32>
    %204 = vector.extract_strided_slice %193 {offsets = [5, 0], sizes = [1, 32], strides = [1, 1]} : vector<8x128xf32> to vector<1x32xf32>
    %205 = vector.shape_cast %204 : vector<1x32xf32> to vector<32xf32>
    %206 = vector.extract_strided_slice %193 {offsets = [6, 0], sizes = [1, 96], strides = [1, 1]} : vector<8x128xf32> to vector<1x96xf32>
    %207 = vector.shape_cast %206 : vector<1x96xf32> to vector<96xf32>
    %208 = vector.extract_strided_slice %193 {offsets = [7, 0], sizes = [1, 128], strides = [1, 1]} : vector<8x128xf32> to vector<1x128xf32>
    %209 = vector.shape_cast %208 : vector<1x128xf32> to vector<128xf32>
    %cst_54 = arith.constant dense<0.000000e+00> : vector<2x8xf32>
    %210 = vector.multi_reduction <add>, %191, %cst_54 [2] : vector<2x8x32xf32> to vector<2x8xf32>
    %211 = vector.shape_cast %210 : vector<2x8xf32> to vector<2x8x1xf32>
    %cst_55 = arith.constant 3.200000e+01 : f32
    %212 = vector.broadcast %cst_55 : f32 to vector<2x8x1xf32>
    %213 = arith.divf %211, %212 : vector<2x8x1xf32>
    %214 = vector.broadcast %213 : vector<2x8x1xf32> to vector<2x8x32xf32>
    %215 = arith.subf %191, %214 : vector<2x8x32xf32>
    %216 = arith.mulf %215, %215 : vector<2x8x32xf32>
    %cst_56 = arith.constant dense<0.000000e+00> : vector<2x8xf32>
    %217 = vector.multi_reduction <add>, %216, %cst_56 [2] : vector<2x8x32xf32> to vector<2x8xf32>
    %218 = vector.shape_cast %217 : vector<2x8xf32> to vector<2x8x1xf32>
    %cst_57 = arith.constant 3.200000e+01 : f32
    %219 = vector.broadcast %cst_57 : f32 to vector<2x8x1xf32>
    %220 = arith.divf %218, %219 : vector<2x8x1xf32>
    %221 = vector.broadcast %213 : vector<2x8x1xf32> to vector<2x8x32xf32>
    %222 = arith.subf %191, %221 : vector<2x8x32xf32>
    %cst_58 = arith.constant 9.99999974E-6 : f32
    %223 = vector.broadcast %cst_58 : f32 to vector<2x8x1xf32>
    %224 = arith.addf %220, %223 : vector<2x8x1xf32>
    %225 = math.rsqrt %224 : vector<2x8x1xf32>
    %226 = vector.broadcast %225 : vector<2x8x1xf32> to vector<2x8x32xf32>
    %227 = arith.mulf %222, %226 : vector<2x8x32xf32>
    %228 = vector.shape_cast %195 : vector<32xf32> to vector<1x1x32xf32>
    %229 = vector.broadcast %228 : vector<1x1x32xf32> to vector<2x8x32xf32>
    %230 = arith.mulf %227, %229 : vector<2x8x32xf32>
    %231 = vector.shape_cast %197 : vector<32xf32> to vector<1x1x32xf32>
    %232 = vector.broadcast %231 : vector<1x1x32xf32> to vector<2x8x32xf32>
    %233 = arith.addf %230, %232 : vector<2x8x32xf32>
    %234 = vector.shape_cast %233 : vector<2x8x32xf32> to vector<16x32xf32>
    %c1_59 = arith.constant 1 : index
    %c0_60 = arith.constant 0 : index
    %c0_61 = arith.constant 0 : index
    %235 = vector.load %arg4[%c1_59, %c0_60, %c0_61] : memref<2x32x96xf32, #tpu.memory_space<vmem>>, vector<1x32x96xf32>
    %236 = vector.shape_cast %235 : vector<1x32x96xf32> to vector<32x96xf32>
    %cst_62 = arith.constant dense<0.000000e+00> : vector<16x96xf32>
    %237 = tpu.matmul %234, %236, %cst_62 {dimension_numbers = #tpu.dot_dimension_numbers<[1], [0], [0], [1], [0, 0, 1, 1], [], []>} : vector<16x32xf32>, vector<32x96xf32>, vector<16x96xf32> -> vector<16x96xf32>
    %238 = vector.shape_cast %207 : vector<96xf32> to vector<1x96xf32>
    %239 = vector.broadcast %238 : vector<1x96xf32> to vector<16x96xf32>
    %240 = arith.addf %237, %239 : vector<16x96xf32>
    %241 = vector.extract_strided_slice %240 {offsets = [0, 0], sizes = [16, 8], strides = [1, 1]} : vector<16x96xf32> to vector<16x8xf32>
    %242 = vector.shape_cast %241 : vector<16x8xf32> to vector<2x8x8xf32>
    %243 = vector.extract_strided_slice %240 {offsets = [0, 32], sizes = [16, 8], strides = [1, 1]} : vector<16x96xf32> to vector<16x8xf32>
    %244 = vector.shape_cast %243 : vector<16x8xf32> to vector<2x8x8xf32>
    %245 = vector.extract_strided_slice %240 {offsets = [0, 64], sizes = [16, 8], strides = [1, 1]} : vector<16x96xf32> to vector<16x8xf32>
    %246 = vector.shape_cast %245 : vector<16x8xf32> to vector<2x8x8xf32>
    "tpu.trace_start"() <{level = 10 : i32, message = "bqe,bke->bqk"}> : () -> ()
    %cst_63 = arith.constant dense<0.000000e+00> : vector<2x8x8xf32>
    %247 = tpu.matmul %242, %244, %cst_63 {dimension_numbers = #tpu.dot_dimension_numbers<[2], [2], [1], [1], [0, 0, 0, 1, 1, 1], [0], [0]>} : vector<2x8x8xf32>, vector<2x8x8xf32>, vector<2x8x8xf32> -> vector<2x8x8xf32>
    "tpu.trace_stop"() : () -> ()
    %248 = vector.shape_cast %5 : vector<8x8xf32> to vector<1x8x8xf32>
    %249 = vector.broadcast %248 : vector<1x8x8xf32> to vector<2x8x8xf32>
    %250 = arith.addf %247, %249 : vector<2x8x8xf32>
    %cst_64 = arith.constant dense<0xFF800000> : vector<2x8xf32>
    %251 = vector.multi_reduction <maximumf>, %250, %cst_64 [2] : vector<2x8x8xf32> to vector<2x8xf32>
    %252 = vector.shape_cast %251 : vector<2x8xf32> to vector<2x8x1xf32>
    %253 = vector.broadcast %252 : vector<2x8x1xf32> to vector<2x8x8xf32>
    %254 = arith.subf %250, %253 : vector<2x8x8xf32>
    %255 = math.exp %254 : vector<2x8x8xf32>
    %cst_65 = arith.constant dense<0.000000e+00> : vector<2x8xf32>
    %256 = vector.multi_reduction <add>, %255, %cst_65 [2] : vector<2x8x8xf32> to vector<2x8xf32>
    %257 = vector.shape_cast %256 : vector<2x8xf32> to vector<2x8x1xf32>
    %258 = vector.broadcast %257 : vector<2x8x1xf32> to vector<2x8x8xf32>
    %259 = arith.divf %255, %258 : vector<2x8x8xf32>
    "tpu.trace_start"() <{level = 10 : i32, message = "bqk,bke->bqe"}> : () -> ()
    %cst_66 = arith.constant dense<0.000000e+00> : vector<2x8x8xf32>
    %260 = tpu.matmul %259, %246, %cst_66 {dimension_numbers = #tpu.dot_dimension_numbers<[2], [1], [1], [2], [0, 0, 0, 1, 1, 2], [0], [0]>} : vector<2x8x8xf32>, vector<2x8x8xf32>, vector<2x8x8xf32> -> vector<2x8x8xf32>
    "tpu.trace_stop"() : () -> ()
    %261 = vector.extract_strided_slice %240 {offsets = [0, 8], sizes = [16, 8], strides = [1, 1]} : vector<16x96xf32> to vector<16x8xf32>
    %262 = vector.shape_cast %261 : vector<16x8xf32> to vector<2x8x8xf32>
    %263 = vector.extract_strided_slice %240 {offsets = [0, 40], sizes = [16, 8], strides = [1, 1]} : vector<16x96xf32> to vector<16x8xf32>
    %264 = vector.shape_cast %263 : vector<16x8xf32> to vector<2x8x8xf32>
    %265 = vector.extract_strided_slice %240 {offsets = [0, 72], sizes = [16, 8], strides = [1, 1]} : vector<16x96xf32> to vector<16x8xf32>
    %266 = vector.shape_cast %265 : vector<16x8xf32> to vector<2x8x8xf32>
    "tpu.trace_start"() <{level = 10 : i32, message = "bqe,bke->bqk"}> : () -> ()
    %cst_67 = arith.constant dense<0.000000e+00> : vector<2x8x8xf32>
    %267 = tpu.matmul %262, %264, %cst_67 {dimension_numbers = #tpu.dot_dimension_numbers<[2], [2], [1], [1], [0, 0, 0, 1, 1, 1], [0], [0]>} : vector<2x8x8xf32>, vector<2x8x8xf32>, vector<2x8x8xf32> -> vector<2x8x8xf32>
    "tpu.trace_stop"() : () -> ()
    %268 = vector.shape_cast %5 : vector<8x8xf32> to vector<1x8x8xf32>
    %269 = vector.broadcast %268 : vector<1x8x8xf32> to vector<2x8x8xf32>
    %270 = arith.addf %267, %269 : vector<2x8x8xf32>
    %cst_68 = arith.constant dense<0xFF800000> : vector<2x8xf32>
    %271 = vector.multi_reduction <maximumf>, %270, %cst_68 [2] : vector<2x8x8xf32> to vector<2x8xf32>
    %272 = vector.shape_cast %271 : vector<2x8xf32> to vector<2x8x1xf32>
    %273 = vector.broadcast %272 : vector<2x8x1xf32> to vector<2x8x8xf32>
    %274 = arith.subf %270, %273 : vector<2x8x8xf32>
    %275 = math.exp %274 : vector<2x8x8xf32>
    %cst_69 = arith.constant dense<0.000000e+00> : vector<2x8xf32>
    %276 = vector.multi_reduction <add>, %275, %cst_69 [2] : vector<2x8x8xf32> to vector<2x8xf32>
    %277 = vector.shape_cast %276 : vector<2x8xf32> to vector<2x8x1xf32>
    %278 = vector.broadcast %277 : vector<2x8x1xf32> to vector<2x8x8xf32>
    %279 = arith.divf %275, %278 : vector<2x8x8xf32>
    "tpu.trace_start"() <{level = 10 : i32, message = "bqk,bke->bqe"}> : () -> ()
    %cst_70 = arith.constant dense<0.000000e+00> : vector<2x8x8xf32>
    %280 = tpu.matmul %279, %266, %cst_70 {dimension_numbers = #tpu.dot_dimension_numbers<[2], [1], [1], [2], [0, 0, 0, 1, 1, 2], [0], [0]>} : vector<2x8x8xf32>, vector<2x8x8xf32>, vector<2x8x8xf32> -> vector<2x8x8xf32>
    "tpu.trace_stop"() : () -> ()
    %281 = vector.extract_strided_slice %240 {offsets = [0, 16], sizes = [16, 8], strides = [1, 1]} : vector<16x96xf32> to vector<16x8xf32>
    %282 = vector.shape_cast %281 : vector<16x8xf32> to vector<2x8x8xf32>
    %283 = vector.extract_strided_slice %240 {offsets = [0, 48], sizes = [16, 8], strides = [1, 1]} : vector<16x96xf32> to vector<16x8xf32>
    %284 = vector.shape_cast %283 : vector<16x8xf32> to vector<2x8x8xf32>
    %285 = vector.extract_strided_slice %240 {offsets = [0, 80], sizes = [16, 8], strides = [1, 1]} : vector<16x96xf32> to vector<16x8xf32>
    %286 = vector.shape_cast %285 : vector<16x8xf32> to vector<2x8x8xf32>
    "tpu.trace_start"() <{level = 10 : i32, message = "bqe,bke->bqk"}> : () -> ()
    %cst_71 = arith.constant dense<0.000000e+00> : vector<2x8x8xf32>
    %287 = tpu.matmul %282, %284, %cst_71 {dimension_numbers = #tpu.dot_dimension_numbers<[2], [2], [1], [1], [0, 0, 0, 1, 1, 1], [0], [0]>} : vector<2x8x8xf32>, vector<2x8x8xf32>, vector<2x8x8xf32> -> vector<2x8x8xf32>
    "tpu.trace_stop"() : () -> ()
    %288 = vector.shape_cast %5 : vector<8x8xf32> to vector<1x8x8xf32>
    %289 = vector.broadcast %288 : vector<1x8x8xf32> to vector<2x8x8xf32>
    %290 = arith.addf %287, %289 : vector<2x8x8xf32>
    %cst_72 = arith.constant dense<0xFF800000> : vector<2x8xf32>
    %291 = vector.multi_reduction <maximumf>, %290, %cst_72 [2] : vector<2x8x8xf32> to vector<2x8xf32>
    %292 = vector.shape_cast %291 : vector<2x8xf32> to vector<2x8x1xf32>
    %293 = vector.broadcast %292 : vector<2x8x1xf32> to vector<2x8x8xf32>
    %294 = arith.subf %290, %293 : vector<2x8x8xf32>
    %295 = math.exp %294 : vector<2x8x8xf32>
    %cst_73 = arith.constant dense<0.000000e+00> : vector<2x8xf32>
    %296 = vector.multi_reduction <add>, %295, %cst_73 [2] : vector<2x8x8xf32> to vector<2x8xf32>
    %297 = vector.shape_cast %296 : vector<2x8xf32> to vector<2x8x1xf32>
    %298 = vector.broadcast %297 : vector<2x8x1xf32> to vector<2x8x8xf32>
    %299 = arith.divf %295, %298 : vector<2x8x8xf32>
    "tpu.trace_start"() <{level = 10 : i32, message = "bqk,bke->bqe"}> : () -> ()
    %cst_74 = arith.constant dense<0.000000e+00> : vector<2x8x8xf32>
    %300 = tpu.matmul %299, %286, %cst_74 {dimension_numbers = #tpu.dot_dimension_numbers<[2], [1], [1], [2], [0, 0, 0, 1, 1, 2], [0], [0]>} : vector<2x8x8xf32>, vector<2x8x8xf32>, vector<2x8x8xf32> -> vector<2x8x8xf32>
    "tpu.trace_stop"() : () -> ()
    %301 = vector.extract_strided_slice %240 {offsets = [0, 24], sizes = [16, 8], strides = [1, 1]} : vector<16x96xf32> to vector<16x8xf32>
    %302 = vector.shape_cast %301 : vector<16x8xf32> to vector<2x8x8xf32>
    %303 = vector.extract_strided_slice %240 {offsets = [0, 56], sizes = [16, 8], strides = [1, 1]} : vector<16x96xf32> to vector<16x8xf32>
    %304 = vector.shape_cast %303 : vector<16x8xf32> to vector<2x8x8xf32>
    %305 = vector.extract_strided_slice %240 {offsets = [0, 88], sizes = [16, 8], strides = [1, 1]} : vector<16x96xf32> to vector<16x8xf32>
    %306 = vector.shape_cast %305 : vector<16x8xf32> to vector<2x8x8xf32>
    "tpu.trace_start"() <{level = 10 : i32, message = "bqe,bke->bqk"}> : () -> ()
    %cst_75 = arith.constant dense<0.000000e+00> : vector<2x8x8xf32>
    %307 = tpu.matmul %302, %304, %cst_75 {dimension_numbers = #tpu.dot_dimension_numbers<[2], [2], [1], [1], [0, 0, 0, 1, 1, 1], [0], [0]>} : vector<2x8x8xf32>, vector<2x8x8xf32>, vector<2x8x8xf32> -> vector<2x8x8xf32>
    "tpu.trace_stop"() : () -> ()
    %308 = vector.shape_cast %5 : vector<8x8xf32> to vector<1x8x8xf32>
    %309 = vector.broadcast %308 : vector<1x8x8xf32> to vector<2x8x8xf32>
    %310 = arith.addf %307, %309 : vector<2x8x8xf32>
    %cst_76 = arith.constant dense<0xFF800000> : vector<2x8xf32>
    %311 = vector.multi_reduction <maximumf>, %310, %cst_76 [2] : vector<2x8x8xf32> to vector<2x8xf32>
    %312 = vector.shape_cast %311 : vector<2x8xf32> to vector<2x8x1xf32>
    %313 = vector.broadcast %312 : vector<2x8x1xf32> to vector<2x8x8xf32>
    %314 = arith.subf %310, %313 : vector<2x8x8xf32>
    %315 = math.exp %314 : vector<2x8x8xf32>
    %cst_77 = arith.constant dense<0.000000e+00> : vector<2x8xf32>
    %316 = vector.multi_reduction <add>, %315, %cst_77 [2] : vector<2x8x8xf32> to vector<2x8xf32>
    %317 = vector.shape_cast %316 : vector<2x8xf32> to vector<2x8x1xf32>
    %318 = vector.broadcast %317 : vector<2x8x1xf32> to vector<2x8x8xf32>
    %319 = arith.divf %315, %318 : vector<2x8x8xf32>
    "tpu.trace_start"() <{level = 10 : i32, message = "bqk,bke->bqe"}> : () -> ()
    %cst_78 = arith.constant dense<0.000000e+00> : vector<2x8x8xf32>
    %320 = tpu.matmul %319, %306, %cst_78 {dimension_numbers = #tpu.dot_dimension_numbers<[2], [1], [1], [2], [0, 0, 0, 1, 1, 2], [0], [0]>} : vector<2x8x8xf32>, vector<2x8x8xf32>, vector<2x8x8xf32> -> vector<2x8x8xf32>
    "tpu.trace_stop"() : () -> ()
    %321 = tpu.concatenate %260, %280, %300, %320 in 2 : vector<2x8x8xf32>, vector<2x8x8xf32>, vector<2x8x8xf32>, vector<2x8x8xf32> -> vector<2x8x32xf32>
    %322 = vector.shape_cast %321 : vector<2x8x32xf32> to vector<16x32xf32>
    %c1_79 = arith.constant 1 : index
    %c0_80 = arith.constant 0 : index
    %c0_81 = arith.constant 0 : index
    %323 = vector.load %arg5[%c1_79, %c0_80, %c0_81] : memref<2x32x32xf32, #tpu.memory_space<vmem>>, vector<1x32x32xf32>
    %324 = vector.shape_cast %323 : vector<1x32x32xf32> to vector<32x32xf32>
    %cst_82 = arith.constant dense<0.000000e+00> : vector<16x32xf32>
    %325 = tpu.matmul %322, %324, %cst_82 {dimension_numbers = #tpu.dot_dimension_numbers<[1], [0], [0], [1], [0, 0, 1, 1], [], []>} : vector<16x32xf32>, vector<32x32xf32>, vector<16x32xf32> -> vector<16x32xf32>
    %326 = vector.shape_cast %203 : vector<32xf32> to vector<1x32xf32>
    %327 = vector.broadcast %326 : vector<1x32xf32> to vector<16x32xf32>
    %328 = arith.addf %325, %327 : vector<16x32xf32>
    %329 = vector.shape_cast %328 : vector<16x32xf32> to vector<2x8x32xf32>
    %330 = arith.addf %191, %329 : vector<2x8x32xf32>
    %cst_83 = arith.constant dense<0.000000e+00> : vector<2x8xf32>
    %331 = vector.multi_reduction <add>, %330, %cst_83 [2] : vector<2x8x32xf32> to vector<2x8xf32>
    %332 = vector.shape_cast %331 : vector<2x8xf32> to vector<2x8x1xf32>
    %cst_84 = arith.constant 3.200000e+01 : f32
    %333 = vector.broadcast %cst_84 : f32 to vector<2x8x1xf32>
    %334 = arith.divf %332, %333 : vector<2x8x1xf32>
    %335 = vector.broadcast %334 : vector<2x8x1xf32> to vector<2x8x32xf32>
    %336 = arith.subf %330, %335 : vector<2x8x32xf32>
    %337 = arith.mulf %336, %336 : vector<2x8x32xf32>
    %cst_85 = arith.constant dense<0.000000e+00> : vector<2x8xf32>
    %338 = vector.multi_reduction <add>, %337, %cst_85 [2] : vector<2x8x32xf32> to vector<2x8xf32>
    %339 = vector.shape_cast %338 : vector<2x8xf32> to vector<2x8x1xf32>
    %cst_86 = arith.constant 3.200000e+01 : f32
    %340 = vector.broadcast %cst_86 : f32 to vector<2x8x1xf32>
    %341 = arith.divf %339, %340 : vector<2x8x1xf32>
    %342 = vector.broadcast %334 : vector<2x8x1xf32> to vector<2x8x32xf32>
    %343 = arith.subf %330, %342 : vector<2x8x32xf32>
    %cst_87 = arith.constant 9.99999974E-6 : f32
    %344 = vector.broadcast %cst_87 : f32 to vector<2x8x1xf32>
    %345 = arith.addf %341, %344 : vector<2x8x1xf32>
    %346 = math.rsqrt %345 : vector<2x8x1xf32>
    %347 = vector.broadcast %346 : vector<2x8x1xf32> to vector<2x8x32xf32>
    %348 = arith.mulf %343, %347 : vector<2x8x32xf32>
    %349 = vector.shape_cast %199 : vector<32xf32> to vector<1x1x32xf32>
    %350 = vector.broadcast %349 : vector<1x1x32xf32> to vector<2x8x32xf32>
    %351 = arith.mulf %348, %350 : vector<2x8x32xf32>
    %352 = vector.shape_cast %201 : vector<32xf32> to vector<1x1x32xf32>
    %353 = vector.broadcast %352 : vector<1x1x32xf32> to vector<2x8x32xf32>
    %354 = arith.addf %351, %353 : vector<2x8x32xf32>
    %355 = vector.shape_cast %354 : vector<2x8x32xf32> to vector<16x32xf32>
    %c1_88 = arith.constant 1 : index
    %c0_89 = arith.constant 0 : index
    %c0_90 = arith.constant 0 : index
    %356 = vector.load %arg6[%c1_88, %c0_89, %c0_90] : memref<2x32x128xf32, #tpu.memory_space<vmem>>, vector<1x32x128xf32>
    %357 = vector.shape_cast %356 : vector<1x32x128xf32> to vector<32x128xf32>
    %cst_91 = arith.constant dense<0.000000e+00> : vector<16x128xf32>
    %358 = tpu.matmul %355, %357, %cst_91 {dimension_numbers = #tpu.dot_dimension_numbers<[1], [0], [0], [1], [0, 0, 1, 1], [], []>} : vector<16x32xf32>, vector<32x128xf32>, vector<16x128xf32> -> vector<16x128xf32>
    %359 = vector.shape_cast %209 : vector<128xf32> to vector<1x128xf32>
    %360 = vector.broadcast %359 : vector<1x128xf32> to vector<16x128xf32>
    %361 = arith.addf %358, %360 : vector<16x128xf32>
    %cst_92 = arith.constant 1.702000e+00 : f32
    %362 = vector.broadcast %cst_92 : f32 to vector<16x128xf32>
    %363 = arith.mulf %362, %361 : vector<16x128xf32>
    %364 = arith.negf %363 : vector<16x128xf32>
    %365 = math.exp %364 : vector<16x128xf32>
    %cst_93 = arith.constant 1.000000e+00 : f32
    %366 = vector.broadcast %cst_93 : f32 to vector<16x128xf32>
    %367 = arith.addf %366, %365 : vector<16x128xf32>
    %368 = arith.divf %366, %367 : vector<16x128xf32>
    %369 = arith.mulf %361, %368 : vector<16x128xf32>
    %c1_94 = arith.constant 1 : index
    %c0_95 = arith.constant 0 : index
    %c0_96 = arith.constant 0 : index
    %370 = vector.load %arg7[%c1_94, %c0_95, %c0_96] : memref<2x128x32xf32, #tpu.memory_space<vmem>>, vector<1x128x32xf32>
    %371 = vector.shape_cast %370 : vector<1x128x32xf32> to vector<128x32xf32>
    %cst_97 = arith.constant dense<0.000000e+00> : vector<16x32xf32>
    %372 = tpu.matmul %369, %371, %cst_97 {dimension_numbers = #tpu.dot_dimension_numbers<[1], [0], [0], [1], [0, 0, 1, 1], [], []>} : vector<16x128xf32>, vector<128x32xf32>, vector<16x32xf32> -> vector<16x32xf32>
    %373 = vector.shape_cast %205 : vector<32xf32> to vector<1x32xf32>
    %374 = vector.broadcast %373 : vector<1x32xf32> to vector<16x32xf32>
    %375 = arith.addf %372, %374 : vector<16x32xf32>
    %376 = vector.shape_cast %375 : vector<16x32xf32> to vector<2x8x32xf32>
    %377 = arith.addf %330, %376 : vector<2x8x32xf32>
    %c0_98 = arith.constant 0 : index
    %378 = memref.load %arg3[%c0_98] : memref<2xi32, #tpu.memory_space<smem>>
    %379 = tpu.iota {dimensions = array<i32: 0>} : vector<8x1xi32>
    %380 = vector.broadcast %378 : i32 to vector<8x1xi32>
    %381 = arith.cmpi eq, %379, %380 : vector<8x1xi32>
    %382 = arith.extui %381 : vector<8x1xi1> to vector<8x1xi32>
    %383 = arith.sitofp %382 : vector<8x1xi32> to vector<8x1xf32>
    %384 = vector.extract_strided_slice %377 {offsets = [0, 0, 0], sizes = [1, 8, 32], strides = [1, 1, 1]} : vector<2x8x32xf32> to vector<1x8x32xf32>
    %385 = vector.shape_cast %384 : vector<1x8x32xf32> to vector<8x32xf32>
    %386 = vector.broadcast %383 : vector<8x1xf32> to vector<8x32xf32>
    %387 = arith.mulf %385, %386 : vector<8x32xf32>
    %cst_99 = arith.constant dense<0.000000e+00> : vector<32xf32>
    %388 = vector.multi_reduction <add>, %387, %cst_99 [0] : vector<8x32xf32> to vector<32xf32>
    %389 = vector.shape_cast %388 : vector<32xf32> to vector<1x32xf32>
    %c1_100 = arith.constant 1 : index
    %390 = memref.load %arg3[%c1_100] : memref<2xi32, #tpu.memory_space<smem>>
    %391 = tpu.iota {dimensions = array<i32: 0>} : vector<8x1xi32>
    %392 = vector.broadcast %390 : i32 to vector<8x1xi32>
    %393 = arith.cmpi eq, %391, %392 : vector<8x1xi32>
    %394 = arith.extui %393 : vector<8x1xi1> to vector<8x1xi32>
    %395 = arith.sitofp %394 : vector<8x1xi32> to vector<8x1xf32>
    %396 = vector.extract_strided_slice %377 {offsets = [1, 0, 0], sizes = [1, 8, 32], strides = [1, 1, 1]} : vector<2x8x32xf32> to vector<1x8x32xf32>
    %397 = vector.shape_cast %396 : vector<1x8x32xf32> to vector<8x32xf32>
    %398 = vector.broadcast %395 : vector<8x1xf32> to vector<8x32xf32>
    %399 = arith.mulf %397, %398 : vector<8x32xf32>
    %cst_101 = arith.constant dense<0.000000e+00> : vector<32xf32>
    %400 = vector.multi_reduction <add>, %399, %cst_101 [0] : vector<8x32xf32> to vector<32xf32>
    %401 = vector.shape_cast %400 : vector<32xf32> to vector<1x32xf32>
    %402 = tpu.concatenate %389, %401 in 0 : vector<1x32xf32>, vector<1x32xf32> -> vector<2x32xf32>
    %c2 = arith.constant 2 : index
    %c0_102 = arith.constant 0 : index
    %c0_103 = arith.constant 0 : index
    %403 = vector.load %arg8[%c2, %c0_102, %c0_103] : memref<3x8x128xf32, #tpu.memory_space<vmem>>, vector<1x8x128xf32>
    %404 = vector.shape_cast %403 : vector<1x8x128xf32> to vector<8x128xf32>
    %405 = vector.extract_strided_slice %404 {offsets = [0, 0], sizes = [1, 32], strides = [1, 1]} : vector<8x128xf32> to vector<1x32xf32>
    %406 = vector.shape_cast %405 : vector<1x32xf32> to vector<32xf32>
    %407 = vector.extract_strided_slice %404 {offsets = [1, 0], sizes = [1, 32], strides = [1, 1]} : vector<8x128xf32> to vector<1x32xf32>
    %408 = vector.shape_cast %407 : vector<1x32xf32> to vector<32xf32>
    %cst_104 = arith.constant dense<0.000000e+00> : vector<2xf32>
    %409 = vector.multi_reduction <add>, %402, %cst_104 [1] : vector<2x32xf32> to vector<2xf32>
    %410 = vector.shape_cast %409 : vector<2xf32> to vector<2x1xf32>
    %cst_105 = arith.constant 3.200000e+01 : f32
    %411 = vector.broadcast %cst_105 : f32 to vector<2x1xf32>
    %412 = arith.divf %410, %411 : vector<2x1xf32>
    %413 = vector.broadcast %412 : vector<2x1xf32> to vector<2x32xf32>
    %414 = arith.subf %402, %413 : vector<2x32xf32>
    %415 = arith.mulf %414, %414 : vector<2x32xf32>
    %cst_106 = arith.constant dense<0.000000e+00> : vector<2xf32>
    %416 = vector.multi_reduction <add>, %415, %cst_106 [1] : vector<2x32xf32> to vector<2xf32>
    %417 = vector.shape_cast %416 : vector<2xf32> to vector<2x1xf32>
    %cst_107 = arith.constant 3.200000e+01 : f32
    %418 = vector.broadcast %cst_107 : f32 to vector<2x1xf32>
    %419 = arith.divf %417, %418 : vector<2x1xf32>
    %420 = vector.broadcast %412 : vector<2x1xf32> to vector<2x32xf32>
    %421 = arith.subf %402, %420 : vector<2x32xf32>
    %cst_108 = arith.constant 9.99999974E-6 : f32
    %422 = vector.broadcast %cst_108 : f32 to vector<2x1xf32>
    %423 = arith.addf %419, %422 : vector<2x1xf32>
    %424 = math.rsqrt %423 : vector<2x1xf32>
    %425 = vector.broadcast %424 : vector<2x1xf32> to vector<2x32xf32>
    %426 = arith.mulf %421, %425 : vector<2x32xf32>
    %427 = vector.shape_cast %406 : vector<32xf32> to vector<1x32xf32>
    %428 = vector.broadcast %427 : vector<1x32xf32> to vector<2x32xf32>
    %429 = arith.mulf %426, %428 : vector<2x32xf32>
    %430 = vector.shape_cast %408 : vector<32xf32> to vector<1x32xf32>
    %431 = vector.broadcast %430 : vector<1x32xf32> to vector<2x32xf32>
    %432 = arith.addf %429, %431 : vector<2x32xf32>
    %c0_109 = arith.constant 0 : index
    %c0_110 = arith.constant 0 : index
    %433 = vector.load %arg9[%c0_109, %c0_110] : memref<32x16xf32, #tpu.memory_space<vmem>>, vector<32x16xf32>
    %cst_111 = arith.constant dense<0.000000e+00> : vector<2x16xf32>
    %434 = tpu.matmul %432, %433, %cst_111 {dimension_numbers = #tpu.dot_dimension_numbers<[1], [0], [0], [1], [0, 0, 1, 1], [], []>} : vector<2x32xf32>, vector<32x16xf32>, vector<2x16xf32> -> vector<2x16xf32>
    %c0_112 = arith.constant 0 : index
    %c0_113 = arith.constant 0 : index
    %435 = vector.load %arg10[%c0_112, %c0_113] : memref<2x16xf32, #tpu.memory_space<vmem>>, vector<2x16xf32>
    tpu.vector_store %arg10[%c0_112, %c0_113], %434 {strides = array<i32>} : memref<2x16xf32, #tpu.memory_space<vmem>>, vector<2x16xf32>,
    return
  }
}

</mosaic_0001>

<llo_original>
// kernel: _lambda_.1
$region0: #{_lambda_.1}
  #allocation0 [shape = 'u32[]', space=smem, size = 0x4, offset = 0x4, fixed_abs, tag = 'smem constant byte address 0x4 - core index']
  #allocation1 [shape = 'u32[144,128]{1,0:T(1,128)}', space=vmem, size = 0x12000, scoped, tag = 'internal scratch']
  %s0 = inlined_call_operand.hbm [shape: f32[2,8,32], index: 0, kind: input, shape index: {}]
  %s1 = inlined_call_operand.hbm [shape: f32[8,32], index: 1, kind: input, shape index: {}]
  %s2 = inlined_call_operand.vmem [shape: f32[8,8], index: 2, kind: input, shape index: {}]
  %s3 = inlined_call_operand.vmem [shape: s32[2], index: 3, kind: input, shape index: {}]
  %s4 = inlined_call_operand.hbm [shape: f32[2,32,96], index: 4, kind: input, shape index: {}]
  %s5 = inlined_call_operand.hbm [shape: f32[2,32,32], index: 5, kind: input, shape index: {}]
  %s6 = inlined_call_operand.hbm [shape: f32[2,32,128], index: 6, kind: input, shape index: {}]
  %s7 = inlined_call_operand.hbm [shape: f32[2,128,32], index: 7, kind: input, shape index: {}]
  %s8 = inlined_call_operand.hbm [shape: f32[3,8,128], index: 8, kind: input, shape index: {}]
  %s9 = inlined_call_operand.vmem [shape: f32[32,16], index: 9, kind: input, shape index: {}]
  %s10 = inlined_call_operand.hbm [shape: f32[2,16], index: 10, kind: output, shape index: {}]
  %s11 = sld [smem:[#allocation0]]
  $region82: #{_lambda_.1} parent=0
    _
  %s13 = ssub.s32 1, %s11
  %s14 = scalar_select 0, %s13, %s11
  $region1: #{_lambda_.1} parent=0
    #allocation2 [shape = 'u8[8192]{0}', space=vmem, size = 0x2000, scoped, tag = 'input window, operand 0, single buffered']
    #allocation3 [shape = 's32[1]{0}', space=sflag, size = 0x4, scoped, tag = 'scoped memory for _lambda_.1']
    #allocation4 [shape = 's32[1]{0}', space=sflag, size = 0x4, scoped, tag = 'scoped memory for _lambda_.1']
    #allocation5 [shape = 's32[1]{0}', space=sflag, size = 0x4, scoped, tag = 'scoped memory for _lambda_.1']
    #allocation6 [shape = 'u8[4096]{0}', space=vmem, size = 0x1000, scoped, tag = 'input window, operand 1, single buffered']
    #allocation7 [shape = 's32[1]{0}', space=sflag, size = 0x4, scoped, tag = 'scoped memory for _lambda_.1']
    #allocation8 [shape = 'u8[512]{0}', space=smem, size = 0x200, scoped, tag = 'input window, operand 3, single buffered']
    #allocation9 [shape = 'u8[32768]{0}', space=vmem, size = 0x8000, scoped, tag = 'input window, operand 4, single buffered']
    #allocation10 [shape = 'u8[32768]{0}', space=vmem, size = 0x8000, scoped, tag = 'input window, operand 5, single buffered']
    #allocation11 [shape = 's32[1]{0}', space=sflag, size = 0x4, scoped, tag = 'scoped memory for _lambda_.1']
    #allocation12 [shape = 'u8[32768]{0}', space=vmem, size = 0x8000, scoped, tag = 'input window, operand 6, single buffered']
    #allocation13 [shape = 'u8[131072]{0}', space=vmem, size = 0x20000, scoped, tag = 'input window, operand 7, single buffered']
    #allocation14 [shape = 's32[1]{0}', space=sflag, size = 0x4, scoped, tag = 'scoped memory for _lambda_.1']
    #allocation15 [shape = 'u8[12288]{0}', space=vmem, size = 0x3000, scoped, tag = 'input window, operand 8, single buffered']
    #allocation16 [shape = 'u8[1024]{0}', space=vmem, size = 0x400, scoped, tag = 'output window, operand 0, single buffered']
    %15 = vsyncpa [#allocation3], 0
    %16 = vsyncpa [#allocation7], 0
    %17 = vsyncpa [#allocation5], 0
    %18 = vsyncpa [#allocation11], 0
    %19 = vsyncpa [#allocation14], 0
    %20 = vsyncpa [#allocation4], 0
    // Predicated region
    $region2: #{_lambda_.1} parent=1 // pred_check
      _
    $region3: #{_lambda_.1} parent=1 // pred_check_branch
      %22 = sbr.rel (0) target = $region5
    $region4: #{_lambda_.1} parent=1 // pred_region
      %s24 = ssub.s32 256, 256
      %25 = vsyncadd [#allocation3], %s24
      %s26 = sshll.u32 [#allocation2], 4
      %s27 = int_to_ptr.vmem [resolvable:$true] %s26
      %32 = dma.hbm_to_vmem [thread:$0]  %s0, 256, %s27, [#allocation3], 128, 128, 8
    $region5: #{_lambda_.1} parent=1 // pred_fallthru
      _
    // Predicated region
    $region6: #{_lambda_.1} parent=1 // pred_check
      _
    $region7: #{_lambda_.1} parent=1 // pred_check_branch
      %34 = sbr.rel (0) target = $region9
    $region8: #{_lambda_.1} parent=1 // pred_region
      %s36 = ssub.s32 128, 128
      %37 = vsyncadd [#allocation7], %s36
      %s39 = sshll.u32 [#allocation6], 4
      %s40 = int_to_ptr.vmem [resolvable:$true] %s39
      %42 = dma.hbm_to_vmem [thread:$0]  %s1, 128, %s40, [#allocation7]
    $region9: #{_lambda_.1} parent=1 // pred_fallthru
      _
    // Predicated region
    $region10: #{_lambda_.1} parent=1 // pred_check
      _
    $region11: #{_lambda_.1} parent=1 // pred_check_branch
      %44 = sbr.rel (0) target = $region13
    $region12: #{_lambda_.1} parent=1 // pred_region
      _
    $region13: #{_lambda_.1} parent=1 // pred_fallthru
      _
    // Predicated region
    $region14: #{_lambda_.1} parent=1 // pred_check
      _
    $region15: #{_lambda_.1} parent=1 // pred_check_branch
      %46 = sbr.rel (0) target = $region17
    $region16: #{_lambda_.1} parent=1 // pred_region
      %s48 = ssub.s32 16, 16
      %49 = vsyncadd [#allocation5], %s48
      %s51 = sshll.u32 %s3, 4
      %s52 = int_to_ptr.vmem [resolvable:$true] %s51
      %54 = dma.vmem_to_smem %s52, 16, [#allocation8], [#allocation5]
    $region17: #{_lambda_.1} parent=1 // pred_fallthru
      _
    // Predicated region
    $region18: #{_lambda_.1} parent=1 // pred_check
      _
    $region19: #{_lambda_.1} parent=1 // pred_check_branch
      %56 = sbr.rel (0) target = $region21
    $region20: #{_lambda_.1} parent=1 // pred_region
      %s58 = ssub.s32 1024, 1024
      %59 = vsyncadd [#allocation7], %s58
      %s60 = sshll.u32 [#allocation9], 4
      %s61 = int_to_ptr.vmem [resolvable:$true] %s60
      %66 = dma.hbm_to_vmem [thread:$0]  %s4, 1024, %s61, [#allocation7], 128, 128, 8
    $region21: #{_lambda_.1} parent=1 // pred_fallthru
      _
    // Predicated region
    $region22: #{_lambda_.1} parent=1 // pred_check
      _
    $region23: #{_lambda_.1} parent=1 // pred_check_branch
      %68 = sbr.rel (0) target = $region25
    $region24: #{_lambda_.1} parent=1 // pred_region
      %s70 = ssub.s32 1024, 1024
      %71 = vsyncadd [#allocation11], %s70
      %s72 = sshll.u32 [#allocation10], 4
      %s73 = int_to_ptr.vmem [resolvable:$true] %s72
      %78 = dma.hbm_to_vmem [thread:$0]  %s5, 1024, %s73, [#allocation11], 128, 128, 8
    $region25: #{_lambda_.1} parent=1 // pred_fallthru
      _
    // Predicated region
    $region26: #{_lambda_.1} parent=1 // pred_check
      _
    $region27: #{_lambda_.1} parent=1 // pred_check_branch
      %80 = sbr.rel (0) target = $region29
    $region28: #{_lambda_.1} parent=1 // pred_region
      %s82 = ssub.s32 1024, 1024
      %83 = vsyncadd [#allocation11], %s82
      %s84 = sshll.u32 [#allocation12], 4
      %s85 = int_to_ptr.vmem [resolvable:$true] %s84
      %90 = dma.hbm_to_vmem [thread:$0]  %s6, 1024, %s85, [#allocation11], 128, 128, 8
    $region29: #{_lambda_.1} parent=1 // pred_fallthru
      _
    // Predicated region
    $region30: #{_lambda_.1} parent=1 // pred_check
      _
    $region31: #{_lambda_.1} parent=1 // pred_check_branch
      %92 = sbr.rel (0) target = $region33
    $region32: #{_lambda_.1} parent=1 // pred_region
      %s94 = ssub.s32 4096, 4096
      %95 = vsyncadd [#allocation14], %s94
      %s96 = sshll.u32 [#allocation13], 4
      %s97 = int_to_ptr.vmem [resolvable:$true] %s96
      %102 = dma.hbm_to_vmem [thread:$0]  %s7, 4096, %s97, [#allocation14], 128, 128, 8
    $region33: #{_lambda_.1} parent=1 // pred_fallthru
      _
    // Predicated region
    $region34: #{_lambda_.1} parent=1 // pred_check
      _
    $region35: #{_lambda_.1} parent=1 // pred_check_branch
      %104 = sbr.rel (0) target = $region37
    $region36: #{_lambda_.1} parent=1 // pred_region
      %s106 = ssub.s32 384, 384
      %107 = vsyncadd [#allocation14], %s106
      %s108 = sshll.u32 [#allocation15], 4
      %s109 = int_to_ptr.vmem [resolvable:$true] %s108
      %114 = dma.hbm_to_vmem [thread:$0]  %s8, 384, %s109, [#allocation14], 128, 128, 8
    $region37: #{_lambda_.1} parent=1 // pred_fallthru
      _
    // Predicated region
    $region38: #{_lambda_.1} parent=1 // pred_check
      _
    $region39: #{_lambda_.1} parent=1 // pred_check_branch
      %116 = sbr.rel (0) target = $region41
    $region40: #{_lambda_.1} parent=1 // pred_region
      _
    $region41: #{_lambda_.1} parent=1 // pred_fallthru
      _
    // Predicated region
    $region42: #{_lambda_.1} parent=1 // pred_check
      _
    $region43: #{_lambda_.1} parent=1 // pred_check_branch
      %118 = sbr.rel (0) target = $region45
    $region44: #{_lambda_.1} parent=1 // pred_region
      %119 = dma.done [#allocation3], 256
    $region45: #{_lambda_.1} parent=1 // pred_fallthru
      _
    // Predicated region
    $region46: #{_lambda_.1} parent=1 // pred_check
      _
    $region47: #{_lambda_.1} parent=1 // pred_check_branch
      %121 = sbr.rel (0) target = $region49
    $region48: #{_lambda_.1} parent=1 // pred_region
      %122 = dma.done [#allocation7], 128
    $region49: #{_lambda_.1} parent=1 // pred_fallthru
      _
    // Predicated region
    $region50: #{_lambda_.1} parent=1 // pred_check
      _
    $region51: #{_lambda_.1} parent=1 // pred_check_branch
      %124 = sbr.rel (0) target = $region53
    $region52: #{_lambda_.1} parent=1 // pred_region
      %125 = dma.done [#allocation5], 16
    $region53: #{_lambda_.1} parent=1 // pred_fallthru
      _
    // Predicated region
    $region54: #{_lambda_.1} parent=1 // pred_check
      _
    $region55: #{_lambda_.1} parent=1 // pred_check_branch
      %127 = sbr.rel (0) target = $region57
    $region56: #{_lambda_.1} parent=1 // pred_region
      %128 = dma.done [#allocation7], 1024
    $region57: #{_lambda_.1} parent=1 // pred_fallthru
      _
    // Predicated region
    $region58: #{_lambda_.1} parent=1 // pred_check
      _
    $region59: #{_lambda_.1} parent=1 // pred_check_branch
      %130 = sbr.rel (0) target = $region61
    $region60: #{_lambda_.1} parent=1 // pred_region
      %131 = dma.done [#allocation11], 1024
    $region61: #{_lambda_.1} parent=1 // pred_fallthru
      _
    // Predicated region
    $region62: #{_lambda_.1} parent=1 // pred_check
      _
    $region63: #{_lambda_.1} parent=1 // pred_check_branch
      %133 = sbr.rel (0) target = $region65
    $region64: #{_lambda_.1} parent=1 // pred_region
      %134 = dma.done [#allocation11], 1024
    $region65: #{_lambda_.1} parent=1 // pred_fallthru
      _
    // Predicated region
    $region66: #{_lambda_.1} parent=1 // pred_check
      _
    $region67: #{_lambda_.1} parent=1 // pred_check_branch
      %136 = sbr.rel (0) target = $region69
    $region68: #{_lambda_.1} parent=1 // pred_region
      %137 = dma.done [#allocation14], 4096
    $region69: #{_lambda_.1} parent=1 // pred_fallthru
      _
    // Predicated region
    $region70: #{_lambda_.1} parent=1 // pred_check
      _
    $region71: #{_lambda_.1} parent=1 // pred_check_branch
      %139 = sbr.rel (0) target = $region73
    $region72: #{_lambda_.1} parent=1 // pred_region
      %140 = dma.done [#allocation14], 384
    $region73: #{_lambda_.1} parent=1 // pred_fallthru
      _
    %141 = sfence
    %v142 = vld [vmem:[#allocation2] sm:$0xff]
    %v143 = vld [vmem:[#allocation2 + $0x8] sm:$0xff]
    %v144 = vld [vmem:[#allocation6] sm:$0xff]
    %v145 = vadd.f32 %v142, %v144
    %v146 = vadd.f32 %v143, %v144
    %v147 = vld [vmem:[%s2] sm:$0xff]
    %v148 = vld [vmem:[#allocation15] sm:$0xff]
    %vm149 = vcmask 261120
    %v150 = vsel %vm149, %v145, 0.0
    %151 = vadd.xlane.f32.xlu0 %v150
    %v152 = vpop.xlane.xlu0 %151
    %v153 = vsel %vm149, %v146, 0.0
    %154 = vadd.xlane.f32.xlu0 %v153
    %v155 = vpop.xlane.xlu0 %154
    %v156 = vrcp.pop 32.0
    %v157 = vmul.f32 %v152, %v156
    %v158 = vmul.f32 %v155, %v156
    %v159 = vsub.f32 %v145, %v157
    %v160 = vsub.f32 %v146, %v158
    %v161 = vmul.f32 %v159, %v159
    %v162 = vmul.f32 %v160, %v160
    %v163 = vsel %vm149, %v161, 0.0
    %164 = vadd.xlane.f32.xlu0 %v163
    %v165 = vpop.xlane.xlu0 %164
    %v166 = vsel %vm149, %v162, 0.0
    %167 = vadd.xlane.f32.xlu0 %v166
    %v168 = vpop.xlane.xlu0 %167
    %v169 = vmul.f32 %v165, %v156
    %v170 = vmul.f32 %v168, %v156
    %v171 = vadd.f32 %v169, 1e-05
    %v172 = vadd.f32 %v170, 1e-05
    %v173 = vrsqrt.pop %v171
    %v174 = vrsqrt.pop %v172
    %v175 = vmul.f32 %v159, %v173
    %v176 = vmul.f32 %v160, %v174
    %v177 = vlaneseq
    %v178 = vshrl.u32 %v177, 7
    %v179 = vsub.s32 0, %v178
    %v180 = vrot.slane %v148, %v179
    %v181 = vmul.f32 %v175, %v180
    %v182 = vmul.f32 %v176, %v180
    %v183 = vlaneseq
    %v184 = vshrl.u32 %v183, 7
    %v185 = vsub.s32 1, %v184
    %v186 = vrot.slane %v148, %v185
    %v187 = vadd.f32 %v181, %v186
    %v188 = vadd.f32 %v182, %v186
    %v189 = vld [vmem:[#allocation9] sm:$0xff]
    %v190 = vld [vmem:[#allocation9 + $0x8] sm:$0xff]
    %v191 = vld [vmem:[#allocation9 + $0x10] sm:$0xff]
    %v192 = vld [vmem:[#allocation9 + $0x18] sm:$0xff]
    %v193 = vlaneseq
    %v194 = vshrl.u32 %v193, 7
    %v195 = vsub.s32 6, %v194
    %v196 = vrot.slane %v148, %v195
    %v198 = vsel %vm149, %v187, 0
    %v201 = vsel %vm149, %v188, 0
    %203 = vmatprep.subr.mxu0 0.0
    %204 = vmatpush1.msra.mxu0 %v189
    %205 = vmatprep.subr.mxu0 0.0
    %206 = vmatpush1.msra.mxu0 %v190
    %207 = vmatprep.subr.mxu0 0.0
    %208 = vmatpush1.msra.mxu0 %v191
    %209 = vmatprep.subr.mxu0 0.0
    %210 = vmatpush1.msra.mxu0 %v192
    %211 = vmatprep.subr.mxu0 0.0
    %212 = vmatpush1.msra.mxu0 0.0
    %213 = vmatprep.subr.mxu0 0.0
    %214 = vmatpush1.msra.mxu0 0.0
    %215 = vmatprep.subr.mxu0 0.0
    %216 = vmatpush1.msra.mxu0 0.0
    %217 = vmatprep.subr.mxu0 0.0
    %218 = vmatpush1.msra.mxu0 0.0
    %219 = vmatprep.subr.mxu0 0.0
    %220 = vmatpush1.msra.mxu0 0.0
    %221 = vmatprep.subr.mxu0 0.0
    %222 = vmatpush1.msra.mxu0 0.0
    %223 = vmatprep.subr.mxu0 0.0
    %224 = vmatpush1.msra.mxu0 0.0
    %225 = vmatprep.subr.mxu0 0.0
    %226 = vmatpush1.msra.mxu0 0.0
    %227 = vmatprep.subr.mxu0 0.0
    %228 = vmatpush1.msra.mxu0 0.0
    %229 = vmatprep.subr.mxu0 0.0
    %230 = vmatpush1.msra.mxu0 0.0
    %231 = vmatprep.subr.mxu0 0.0
    %232 = vmatpush1.msra.mxu0 0.0
    %233 = vmatprep.subr.mxu0 0.0
    %234 = vmatpush1.msra.mxu0 0.0
    %235 = vmatprep.subr.mxu0 0.0
    %236 = vmatpush1.msra.mxu0 0.0
    %237 = vmatprep.subr.mxu0 0.0
    %238 = vmatpush1.msra.mxu0 0.0
    %239 = vmatprep.subr.mxu0 0.0
    %240 = vmatpush1.msra.mxu0 0.0
    %241 = vmatprep.subr.mxu0 0.0
    %242 = vmatpush1.msra.mxu0 0.0
    %243 = vmatprep.subr.mxu0 0.0
    %244 = vmatpush1.msra.mxu0 0.0
    %245 = vmatprep.subr.mxu0 0.0
    %246 = vmatpush1.msra.mxu0 0.0
    %247 = vmatprep.subr.mxu0 0.0
    %248 = vmatpush1.msra.mxu0 0.0
    %249 = vmatprep.subr.mxu0 0.0
    %250 = vmatpush1.msra.mxu0 0.0
    %251 = vmatprep.subr.mxu0 0.0
    %252 = vmatpush1.msra.mxu0 0.0
    %253 = vmatprep.subr.mxu0 0.0
    %254 = vmatpush1.msra.mxu0 0.0
    %255 = vmatprep.subr.mxu0 0.0
    %256 = vmatpush1.msra.mxu0 0.0
    %257 = vmatprep.subr.mxu0 0.0
    %258 = vmatpush1.msra.mxu0 0.0
    %259 = vmatprep.subr.mxu0 0.0
    %260 = vmatpush1.msra.mxu0 0.0
    %261 = vmatprep.subr.mxu0 0.0
    %262 = vmatpush1.msra.mxu0 0.0
    %263 = vmatprep.subr.mxu0 0.0
    %264 = vmatpush1.msra.mxu0 0.0
    %265 = vmatprep.subr.mxu0 0.0
    %266 = vmatpush1.msra.mxu0 0.0
    %267 = vmatprep.mubr.f32.mxu0 0.0
    %268 = vmatmul.mubr.f32.gmra.mrb[0].mxu0 %v198
    %v269 = vpop.f32.mrb[0].mxu0
    %v270 = vadd.f32 %v196, %v269
    %v271 = vpop.f32.mrb[0].mxu0
    %272 = vmatprep.mubr.f32.mxu0 0.0
    %273 = vmatmul.mubr.f32.gmra.mrb[0].mxu0 %v201
    %v274 = vpop.f32.mrb[0].mxu0
    %v275 = vadd.f32 %v196, %v274
    %v276 = vpop.f32.mrb[0].mxu0
    %277 = vdwg.mxu0
    %279 = vrot.lane.b32.xlu0 %v270, 96
    %v280 = vpop.permute.xlu0 %279
    %vm281 = vcmask 64512
    %v282 = vsel %vm281, %v270, 0
    %v284 = vsel %vm281, %v280, 0
    %286 = vmatprep.subr.mxu0 0.0
    %287 = vmatpush1.xpose.msra.mxu0 %v284
    %288 = vmatprep.subr.mxu0 0.0
    %289 = vmatpush1.xpose.msra.mxu0 0.0
    %290 = vmatprep.subr.mxu0 0.0
    %291 = vmatpush1.xpose.msra.mxu0 0.0
    %292 = vmatprep.subr.mxu0 0.0
    %293 = vmatpush1.xpose.msra.mxu0 0.0
    %294 = vmatprep.subr.mxu0 0.0
    %295 = vmatpush1.xpose.msra.mxu0 0.0
    %296 = vmatprep.subr.mxu0 0.0
    %297 = vmatpush1.xpose.msra.mxu0 0.0
    %298 = vmatprep.subr.mxu0 0.0
    %299 = vmatpush1.xpose.msra.mxu0 0.0
    %300 = vmatprep.subr.mxu0 0.0
    %301 = vmatpush1.xpose.msra.mxu0 0.0
    %302 = vmatprep.subr.mxu0 0.0
    %303 = vmatpush1.xpose.msra.mxu0 0.0
    %304 = vmatprep.subr.mxu0 0.0
    %305 = vmatpush1.xpose.msra.mxu0 0.0
    %306 = vmatprep.subr.mxu0 0.0
    %307 = vmatpush1.xpose.msra.mxu0 0.0
    %308 = vmatprep.subr.mxu0 0.0
    %309 = vmatpush1.xpose.msra.mxu0 0.0
    %310 = vmatprep.subr.mxu0 0.0
    %311 = vmatpush1.xpose.msra.mxu0 0.0
    %312 = vmatprep.subr.mxu0 0.0
    %313 = vmatpush1.xpose.msra.mxu0 0.0
    %314 = vmatprep.subr.mxu0 0.0
    %315 = vmatpush1.xpose.msra.mxu0 0.0
    %316 = vmatprep.subr.mxu0 0.0
    %317 = vmatpush1.xpose.msra.mxu0 0.0
    %318 = vmatprep.subr.mxu0 0.0
    %319 = vmatpush1.xpose.msra.mxu0 0.0
    %320 = vmatprep.subr.mxu0 0.0
    %321 = vmatpush1.xpose.msra.mxu0 0.0
    %322 = vmatprep.subr.mxu0 0.0
    %323 = vmatpush1.xpose.msra.mxu0 0.0
    %324 = vmatprep.subr.mxu0 0.0
    %325 = vmatpush1.xpose.msra.mxu0 0.0
    %326 = vmatprep.subr.mxu0 0.0
    %327 = vmatpush1.xpose.msra.mxu0 0.0
    %328 = vmatprep.subr.mxu0 0.0
    %329 = vmatpush1.xpose.msra.mxu0 0.0
    %330 = vmatprep.subr.mxu0 0.0
    %331 = vmatpush1.xpose.msra.mxu0 0.0
    %332 = vmatprep.subr.mxu0 0.0
    %333 = vmatpush1.xpose.msra.mxu0 0.0
    %334 = vmatprep.subr.mxu0 0.0
    %335 = vmatpush1.xpose.msra.mxu0 0.0
    %336 = vmatprep.subr.mxu0 0.0
    %337 = vmatpush1.xpose.msra.mxu0 0.0
    %338 = vmatprep.subr.mxu0 0.0
    %339 = vmatpush1.xpose.msra.mxu0 0.0
    %340 = vmatprep.subr.mxu0 0.0
    %341 = vmatpush1.xpose.msra.mxu0 0.0
    %342 = vmatprep.subr.mxu0 0.0
    %343 = vmatpush1.xpose.msra.mxu0 0.0
    %344 = vmatprep.subr.mxu0 0.0
    %345 = vmatpush1.xpose.msra.mxu0 0.0
    %346 = vmatprep.subr.mxu0 0.0
    %347 = vmatpush1.xpose.msra.mxu0 0.0
    %348 = vmatprep.subr.mxu0 0.0
    %349 = vmatpush1.xpose.msra.mxu0 0.0
    %350 = vmatprep.mubr.f32.mxu0 0.0
    %351 = vmatmul.mubr.f32.gmra.mrb[0].mxu0 %v282
    %v352 = vpop.f32.mrb[0].mxu0
    %v353 = vadd.f32 %v147, %v352
    %v354 = vpop.f32.mrb[0].mxu0
    %355 = vdwg.mxu0
    %357 = vrot.lane.b32.xlu0 %v275, 96
    %v358 = vpop.permute.xlu0 %357
    %v359 = vsel %vm281, %v275, 0
    %v361 = vsel %vm281, %v358, 0
    %363 = vmatprep.subr.mxu0 0.0
    %364 = vmatpush1.xpose.msra.mxu0 %v361
    %365 = vmatprep.subr.mxu0 0.0
    %366 = vmatpush1.xpose.msra.mxu0 0.0
    %367 = vmatprep.subr.mxu0 0.0
    %368 = vmatpush1.xpose.msra.mxu0 0.0
    %369 = vmatprep.subr.mxu0 0.0
    %370 = vmatpush1.xpose.msra.mxu0 0.0
    %371 = vmatprep.subr.mxu0 0.0
    %372 = vmatpush1.xpose.msra.mxu0 0.0
    %373 = vmatprep.subr.mxu0 0.0
    %374 = vmatpush1.xpose.msra.mxu0 0.0
    %375 = vmatprep.subr.mxu0 0.0
    %376 = vmatpush1.xpose.msra.mxu0 0.0
    %377 = vmatprep.subr.mxu0 0.0
    %378 = vmatpush1.xpose.msra.mxu0 0.0
    %379 = vmatprep.subr.mxu0 0.0
    %380 = vmatpush1.xpose.msra.mxu0 0.0
    %381 = vmatprep.subr.mxu0 0.0
    %382 = vmatpush1.xpose.msra.mxu0 0.0
    %383 = vmatprep.subr.mxu0 0.0
    %384 = vmatpush1.xpose.msra.mxu0 0.0
    %385 = vmatprep.subr.mxu0 0.0
    %386 = vmatpush1.xpose.msra.mxu0 0.0
    %387 = vmatprep.subr.mxu0 0.0
    %388 = vmatpush1.xpose.msra.mxu0 0.0
    %389 = vmatprep.subr.mxu0 0.0
    %390 = vmatpush1.xpose.msra.mxu0 0.0
    %391 = vmatprep.subr.mxu0 0.0
    %392 = vmatpush1.xpose.msra.mxu0 0.0
    %393 = vmatprep.subr.mxu0 0.0
    %394 = vmatpush1.xpose.msra.mxu0 0.0
    %395 = vmatprep.subr.mxu0 0.0
    %396 = vmatpush1.xpose.msra.mxu0 0.0
    %397 = vmatprep.subr.mxu0 0.0
    %398 = vmatpush1.xpose.msra.mxu0 0.0
    %399 = vmatprep.subr.mxu0 0.0
    %400 = vmatpush1.xpose.msra.mxu0 0.0
    %401 = vmatprep.subr.mxu0 0.0
    %402 = vmatpush1.xpose.msra.mxu0 0.0
    %403 = vmatprep.subr.mxu0 0.0
    %404 = vmatpush1.xpose.msra.mxu0 0.0
    %405 = vmatprep.subr.mxu0 0.0
    %406 = vmatpush1.xpose.msra.mxu0 0.0
    %407 = vmatprep.subr.mxu0 0.0
    %408 = vmatpush1.xpose.msra.mxu0 0.0
    %409 = vmatprep.subr.mxu0 0.0
    %410 = vmatpush1.xpose.msra.mxu0 0.0
    %411 = vmatprep.subr.mxu0 0.0
    %412 = vmatpush1.xpose.msra.mxu0 0.0
    %413 = vmatprep.subr.mxu0 0.0
    %414 = vmatpush1.xpose.msra.mxu0 0.0
    %415 = vmatprep.subr.mxu0 0.0
    %416 = vmatpush1.xpose.msra.mxu0 0.0
    %417 = vmatprep.subr.mxu0 0.0
    %418 = vmatpush1.xpose.msra.mxu0 0.0
    %419 = vmatprep.subr.mxu0 0.0
    %420 = vmatpush1.xpose.msra.mxu0 0.0
    %421 = vmatprep.subr.mxu0 0.0
    %422 = vmatpush1.xpose.msra.mxu0 0.0
    %423 = vmatprep.subr.mxu0 0.0
    %424 = vmatpush1.xpose.msra.mxu0 0.0
    %425 = vmatprep.subr.mxu0 0.0
    %426 = vmatpush1.xpose.msra.mxu0 0.0
    %427 = vmatprep.mubr.f32.mxu0 0.0
    %428 = vmatmul.mubr.f32.gmra.mrb[0].mxu0 %v359
    %v429 = vpop.f32.mrb[0].mxu0
    %v430 = vadd.f32 %v147, %v429
    %v431 = vpop.f32.mrb[0].mxu0
    %432 = vdwg.mxu0
    %v433 = vsel %vm281, %v353, -inf
    %434 = vmax.xlane.f32.xlu0 %v433
    %v435 = vpop.xlane.xlu0 %434
    %v436 = vsel %vm281, %v430, -inf
    %437 = vmax.xlane.f32.xlu0 %v436
    %v438 = vpop.xlane.xlu0 %437
    %v439 = vsub.f32 %v353, %v435
    %v440 = vsub.f32 %v430, %v438
    %v441 = vmul.f32 %v439, 1.442695
    %v442 = vpow.pop %v441
    %v443 = vmul.f32 %v440, 1.442695
    %v444 = vpow.pop %v443
    %v445 = vsel %vm281, %v442, 0.0
    %446 = vadd.xlane.f32.xlu0 %v445
    %v447 = vpop.xlane.xlu0 %446
    %v448 = vsel %vm281, %v444, 0.0
    %449 = vadd.xlane.f32.xlu0 %v448
    %v450 = vpop.xlane.xlu0 %449
    %v451 = vrcp.pop %v447
    %v452 = vmul.f32 %v442, %v451
    %v453 = vrcp.pop %v450
    %v454 = vmul.f32 %v444, %v453
    %455 = vrot.lane.b32.xlu0 %v270, 64
    %v456 = vpop.permute.xlu0 %455
    %v459 = vsel %vm281, %v452, 0
    %461 = vmatprep.subr.mxu0 0.0
    %462 = vmatpush1.msra.mxu0 %v456
    %463 = vmatprep.subr.mxu0 0.0
    %464 = vmatpush1.msra.mxu0 0.0
    %465 = vmatprep.subr.mxu0 0.0
    %466 = vmatpush1.msra.mxu0 0.0
    %467 = vmatprep.subr.mxu0 0.0
    %468 = vmatpush1.msra.mxu0 0.0
    %469 = vmatprep.subr.mxu0 0.0
    %470 = vmatpush1.msra.mxu0 0.0
    %471 = vmatprep.subr.mxu0 0.0
    %472 = vmatpush1.msra.mxu0 0.0
    %473 = vmatprep.subr.mxu0 0.0
    %474 = vmatpush1.msra.mxu0 0.0
    %475 = vmatprep.subr.mxu0 0.0
    %476 = vmatpush1.msra.mxu0 0.0
    %477 = vmatprep.subr.mxu0 0.0
    %478 = vmatpush1.msra.mxu0 0.0
    %479 = vmatprep.subr.mxu0 0.0
    %480 = vmatpush1.msra.mxu0 0.0
    %481 = vmatprep.subr.mxu0 0.0
    %482 = vmatpush1.msra.mxu0 0.0
    %483 = vmatprep.subr.mxu0 0.0
    %484 = vmatpush1.msra.mxu0 0.0
    %485 = vmatprep.subr.mxu0 0.0
    %486 = vmatpush1.msra.mxu0 0.0
    %487 = vmatprep.subr.mxu0 0.0
    %488 = vmatpush1.msra.mxu0 0.0
    %489 = vmatprep.subr.mxu0 0.0
    %490 = vmatpush1.msra.mxu0 0.0
    %491 = vmatprep.subr.mxu0 0.0
    %492 = vmatpush1.msra.mxu0 0.0
    %493 = vmatprep.subr.mxu0 0.0
    %494 = vmatpush1.msra.mxu0 0.0
    %495 = vmatprep.subr.mxu0 0.0
    %496 = vmatpush1.msra.mxu0 0.0
    %497 = vmatprep.subr.mxu0 0.0
    %498 = vmatpush1.msra.mxu0 0.0
    %499 = vmatprep.subr.mxu0 0.0
    %500 = vmatpush1.msra.mxu0 0.0
    %501 = vmatprep.subr.mxu0 0.0
    %502 = vmatpush1.msra.mxu0 0.0
    %503 = vmatprep.subr.mxu0 0.0
    %504 = vmatpush1.msra.mxu0 0.0
    %505 = vmatprep.subr.mxu0 0.0
    %506 = vmatpush1.msra.mxu0 0.0
    %507 = vmatprep.subr.mxu0 0.0
    %508 = vmatpush1.msra.mxu0 0.0
    %509 = vmatprep.subr.mxu0 0.0
    %510 = vmatpush1.msra.mxu0 0.0
    %511 = vmatprep.subr.mxu0 0.0
    %512 = vmatpush1.msra.mxu0 0.0
    %513 = vmatprep.subr.mxu0 0.0
    %514 = vmatpush1.msra.mxu0 0.0
    %515 = vmatprep.subr.mxu0 0.0
    %516 = vmatpush1.msra.mxu0 0.0
    %517 = vmatprep.subr.mxu0 0.0
    %518 = vmatpush1.msra.mxu0 0.0
    %519 = vmatprep.subr.mxu0 0.0
    %520 = vmatpush1.msra.mxu0 0.0
    %521 = vmatprep.subr.mxu0 0.0
    %522 = vmatpush1.msra.mxu0 0.0
    %523 = vmatprep.subr.mxu0 0.0
    %524 = vmatpush1.msra.mxu0 0.0
    %525 = vmatprep.mubr.f32.mxu0 0.0
    %526 = vmatmul.mubr.f32.gmra.mrb[0].mxu0 %v459
    %v527 = vpop.f32.mrb[0].mxu0
    %v528 = vadd.f32 0.0, %v527
    %v529 = vpop.f32.mrb[0].mxu0
    %530 = vdwg.mxu0
    %531 = vrot.lane.b32.xlu0 %v275, 64
    %v532 = vpop.permute.xlu0 %531
    %v535 = vsel %vm281, %v454, 0
    %537 = vmatprep.subr.mxu0 0.0
    %538 = vmatpush1.msra.mxu0 %v532
    %539 = vmatprep.subr.mxu0 0.0
    %540 = vmatpush1.msra.mxu0 0.0
    %541 = vmatprep.subr.mxu0 0.0
    %542 = vmatpush1.msra.mxu0 0.0
    %543 = vmatprep.subr.mxu0 0.0
    %544 = vmatpush1.msra.mxu0 0.0
    %545 = vmatprep.subr.mxu0 0.0
    %546 = vmatpush1.msra.mxu0 0.0
    %547 = vmatprep.subr.mxu0 0.0
    %548 = vmatpush1.msra.mxu0 0.0
    %549 = vmatprep.subr.mxu0 0.0
    %550 = vmatpush1.msra.mxu0 0.0
    %551 = vmatprep.subr.mxu0 0.0
    %552 = vmatpush1.msra.mxu0 0.0
    %553 = vmatprep.subr.mxu0 0.0
    %554 = vmatpush1.msra.mxu0 0.0
    %555 = vmatprep.subr.mxu0 0.0
    %556 = vmatpush1.msra.mxu0 0.0
    %557 = vmatprep.subr.mxu0 0.0
    %558 = vmatpush1.msra.mxu0 0.0
    %559 = vmatprep.subr.mxu0 0.0
    %560 = vmatpush1.msra.mxu0 0.0
    %561 = vmatprep.subr.mxu0 0.0
    %562 = vmatpush1.msra.mxu0 0.0
    %563 = vmatprep.subr.mxu0 0.0
    %564 = vmatpush1.msra.mxu0 0.0
    %565 = vmatprep.subr.mxu0 0.0
    %566 = vmatpush1.msra.mxu0 0.0
    %567 = vmatprep.subr.mxu0 0.0
    %568 = vmatpush1.msra.mxu0 0.0
    %569 = vmatprep.subr.mxu0 0.0
    %570 = vmatpush1.msra.mxu0 0.0
    %571 = vmatprep.subr.mxu0 0.0
    %572 = vmatpush1.msra.mxu0 0.0
    %573 = vmatprep.subr.mxu0 0.0
    %574 = vmatpush1.msra.mxu0 0.0
    %575 = vmatprep.subr.mxu0 0.0
    %576 = vmatpush1.msra.mxu0 0.0
    %577 = vmatprep.subr.mxu0 0.0
    %578 = vmatpush1.msra.mxu0 0.0
    %579 = vmatprep.subr.mxu0 0.0
    %580 = vmatpush1.msra.mxu0 0.0
    %581 = vmatprep.subr.mxu0 0.0
    %582 = vmatpush1.msra.mxu0 0.0
    %583 = vmatprep.subr.mxu0 0.0
    %584 = vmatpush1.msra.mxu0 0.0
    %585 = vmatprep.subr.mxu0 0.0
    %586 = vmatpush1.msra.mxu0 0.0
    %587 = vmatprep.subr.mxu0 0.0
    %588 = vmatpush1.msra.mxu0 0.0
    %589 = vmatprep.subr.mxu0 0.0
    %590 = vmatpush1.msra.mxu0 0.0
    %591 = vmatprep.subr.mxu0 0.0
    %592 = vmatpush1.msra.mxu0 0.0
    %593 = vmatprep.subr.mxu0 0.0
    %594 = vmatpush1.msra.mxu0 0.0
    %595 = vmatprep.subr.mxu0 0.0
    %596 = vmatpush1.msra.mxu0 0.0
    %597 = vmatprep.subr.mxu0 0.0
    %598 = vmatpush1.msra.mxu0 0.0
    %599 = vmatprep.subr.mxu0 0.0
    %600 = vmatpush1.msra.mxu0 0.0
    %601 = vmatprep.mubr.f32.mxu0 0.0
    %602 = vmatmul.mubr.f32.gmra.mrb[0].mxu0 %v535
    %v603 = vpop.f32.mrb[0].mxu0
    %v604 = vadd.f32 0.0, %v603
    %v605 = vpop.f32.mrb[0].mxu0
    %606 = vdwg.mxu0
    %607 = vrot.lane.b32.xlu0 %v270, 120
    %v608 = vpop.permute.xlu0 %607
    %609 = vrot.lane.b32.xlu0 %v270, 88
    %v610 = vpop.permute.xlu0 %609
    %v611 = vsel %vm281, %v608, 0
    %v613 = vsel %vm281, %v610, 0
    %615 = vmatprep.subr.mxu0 0.0
    %616 = vmatpush1.xpose.msra.mxu0 %v613
    %617 = vmatprep.subr.mxu0 0.0
    %618 = vmatpush1.xpose.msra.mxu0 0.0
    %619 = vmatprep.subr.mxu0 0.0
    %620 = vmatpush1.xpose.msra.mxu0 0.0
    %621 = vmatprep.subr.mxu0 0.0
    %622 = vmatpush1.xpose.msra.mxu0 0.0
    %623 = vmatprep.subr.mxu0 0.0
    %624 = vmatpush1.xpose.msra.mxu0 0.0
    %625 = vmatprep.subr.mxu0 0.0
    %626 = vmatpush1.xpose.msra.mxu0 0.0
    %627 = vmatprep.subr.mxu0 0.0
    %628 = vmatpush1.xpose.msra.mxu0 0.0
    %629 = vmatprep.subr.mxu0 0.0
    %630 = vmatpush1.xpose.msra.mxu0 0.0
    %631 = vmatprep.subr.mxu0 0.0
    %632 = vmatpush1.xpose.msra.mxu0 0.0
    %633 = vmatprep.subr.mxu0 0.0
    %634 = vmatpush1.xpose.msra.mxu0 0.0
    %635 = vmatprep.subr.mxu0 0.0
    %636 = vmatpush1.xpose.msra.mxu0 0.0
    %637 = vmatprep.subr.mxu0 0.0
    %638 = vmatpush1.xpose.msra.mxu0 0.0
    %639 = vmatprep.subr.mxu0 0.0
    %640 = vmatpush1.xpose.msra.mxu0 0.0
    %641 = vmatprep.subr.mxu0 0.0
    %642 = vmatpush1.xpose.msra.mxu0 0.0
    %643 = vmatprep.subr.mxu0 0.0
    %644 = vmatpush1.xpose.msra.mxu0 0.0
    %645 = vmatprep.subr.mxu0 0.0
    %646 = vmatpush1.xpose.msra.mxu0 0.0
    %647 = vmatprep.subr.mxu0 0.0
    %648 = vmatpush1.xpose.msra.mxu0 0.0
    %649 = vmatprep.subr.mxu0 0.0
    %650 = vmatpush1.xpose.msra.mxu0 0.0
    %651 = vmatprep.subr.mxu0 0.0
    %652 = vmatpush1.xpose.msra.mxu0 0.0
    %653 = vmatprep.subr.mxu0 0.0
    %654 = vmatpush1.xpose.msra.mxu0 0.0
    %655 = vmatprep.subr.mxu0 0.0
    %656 = vmatpush1.xpose.msra.mxu0 0.0
    %657 = vmatprep.subr.mxu0 0.0
    %658 = vmatpush1.xpose.msra.mxu0 0.0
    %659 = vmatprep.subr.mxu0 0.0
    %660 = vmatpush1.xpose.msra.mxu0 0.0
    %661 = vmatprep.subr.mxu0 0.0
    %662 = vmatpush1.xpose.msra.mxu0 0.0
    %663 = vmatprep.subr.mxu0 0.0
    %664 = vmatpush1.xpose.msra.mxu0 0.0
    %665 = vmatprep.subr.mxu0 0.0
    %666 = vmatpush1.xpose.msra.mxu0 0.0
    %667 = vmatprep.subr.mxu0 0.0
    %668 = vmatpush1.xpose.msra.mxu0 0.0
    %669 = vmatprep.subr.mxu0 0.0
    %670 = vmatpush1.xpose.msra.mxu0 0.0
    %671 = vmatprep.subr.mxu0 0.0
    %672 = vmatpush1.xpose.msra.mxu0 0.0
    %673 = vmatprep.subr.mxu0 0.0
    %674 = vmatpush1.xpose.msra.mxu0 0.0
    %675 = vmatprep.subr.mxu0 0.0
    %676 = vmatpush1.xpose.msra.mxu0 0.0
    %677 = vmatprep.subr.mxu0 0.0
    %678 = vmatpush1.xpose.msra.mxu0 0.0
    %679 = vmatprep.mubr.f32.mxu0 0.0
    %680 = vmatmul.mubr.f32.gmra.mrb[0].mxu0 %v611
    %v681 = vpop.f32.mrb[0].mxu0
    %v682 = vadd.f32 %v147, %v681
    %v683 = vpop.f32.mrb[0].mxu0
    %684 = vdwg.mxu0
    %685 = vrot.lane.b32.xlu0 %v275, 120
    %v686 = vpop.permute.xlu0 %685
    %687 = vrot.lane.b32.xlu0 %v275, 88
    %v688 = vpop.permute.xlu0 %687
    %v689 = vsel %vm281, %v686, 0
    %v691 = vsel %vm281, %v688, 0
    %693 = vmatprep.subr.mxu0 0.0
    %694 = vmatpush1.xpose.msra.mxu0 %v691
    %695 = vmatprep.subr.mxu0 0.0
    %696 = vmatpush1.xpose.msra.mxu0 0.0
    %697 = vmatprep.subr.mxu0 0.0
    %698 = vmatpush1.xpose.msra.mxu0 0.0
    %699 = vmatprep.subr.mxu0 0.0
    %700 = vmatpush1.xpose.msra.mxu0 0.0
    %701 = vmatprep.subr.mxu0 0.0
    %702 = vmatpush1.xpose.msra.mxu0 0.0
    %703 = vmatprep.subr.mxu0 0.0
    %704 = vmatpush1.xpose.msra.mxu0 0.0
    %705 = vmatprep.subr.mxu0 0.0
    %706 = vmatpush1.xpose.msra.mxu0 0.0
    %707 = vmatprep.subr.mxu0 0.0
    %708 = vmatpush1.xpose.msra.mxu0 0.0
    %709 = vmatprep.subr.mxu0 0.0
    %710 = vmatpush1.xpose.msra.mxu0 0.0
    %711 = vmatprep.subr.mxu0 0.0
    %712 = vmatpush1.xpose.msra.mxu0 0.0
    %713 = vmatprep.subr.mxu0 0.0
    %714 = vmatpush1.xpose.msra.mxu0 0.0
    %715 = vmatprep.subr.mxu0 0.0
    %716 = vmatpush1.xpose.msra.mxu0 0.0
    %717 = vmatprep.subr.mxu0 0.0
    %718 = vmatpush1.xpose.msra.mxu0 0.0
    %719 = vmatprep.subr.mxu0 0.0
    %720 = vmatpush1.xpose.msra.mxu0 0.0
    %721 = vmatprep.subr.mxu0 0.0
    %722 = vmatpush1.xpose.msra.mxu0 0.0
    %723 = vmatprep.subr.mxu0 0.0
    %724 = vmatpush1.xpose.msra.mxu0 0.0
    %725 = vmatprep.subr.mxu0 0.0
    %726 = vmatpush1.xpose.msra.mxu0 0.0
    %727 = vmatprep.subr.mxu0 0.0
    %728 = vmatpush1.xpose.msra.mxu0 0.0
    %729 = vmatprep.subr.mxu0 0.0
    %730 = vmatpush1.xpose.msra.mxu0 0.0
    %731 = vmatprep.subr.mxu0 0.0
    %732 = vmatpush1.xpose.msra.mxu0 0.0
    %733 = vmatprep.subr.mxu0 0.0
    %734 = vmatpush1.xpose.msra.mxu0 0.0
    %735 = vmatprep.subr.mxu0 0.0
    %736 = vmatpush1.xpose.msra.mxu0 0.0
    %737 = vmatprep.subr.mxu0 0.0
    %738 = vmatpush1.xpose.msra.mxu0 0.0
    %739 = vmatprep.subr.mxu0 0.0
    %740 = vmatpush1.xpose.msra.mxu0 0.0
    %741 = vmatprep.subr.mxu0 0.0
    %742 = vmatpush1.xpose.msra.mxu0 0.0
    %743 = vmatprep.subr.mxu0 0.0
    %744 = vmatpush1.xpose.msra.mxu0 0.0
    %745 = vmatprep.subr.mxu0 0.0
    %746 = vmatpush1.xpose.msra.mxu0 0.0
    %747 = vmatprep.subr.mxu0 0.0
    %748 = vmatpush1.xpose.msra.mxu0 0.0
    %749 = vmatprep.subr.mxu0 0.0
    %750 = vmatpush1.xpose.msra.mxu0 0.0
    %751 = vmatprep.subr.mxu0 0.0
    %752 = vmatpush1.xpose.msra.mxu0 0.0
    %753 = vmatprep.subr.mxu0 0.0
    %754 = vmatpush1.xpose.msra.mxu0 0.0
    %755 = vmatprep.subr.mxu0 0.0
    %756 = vmatpush1.xpose.msra.mxu0 0.0
    %757 = vmatprep.mubr.f32.mxu0 0.0
    %758 = vmatmul.mubr.f32.gmra.mrb[0].mxu0 %v689
    %v759 = vpop.f32.mrb[0].mxu0
    %v760 = vadd.f32 %v147, %v759
    %v761 = vpop.f32.mrb[0].mxu0
    %762 = vdwg.mxu0
    %v763 = vsel %vm281, %v682, -inf
    %764 = vmax.xlane.f32.xlu0 %v763
    %v765 = vpop.xlane.xlu0 %764
    %v766 = vsel %vm281, %v760, -inf
    %767 = vmax.xlane.f32.xlu0 %v766
    %v768 = vpop.xlane.xlu0 %767
    %v769 = vsub.f32 %v682, %v765
    %v770 = vsub.f32 %v760, %v768
    %v771 = vmul.f32 %v769, 1.442695
    %v772 = vpow.pop %v771
    %v773 = vmul.f32 %v770, 1.442695
    %v774 = vpow.pop %v773
    %v775 = vsel %vm281, %v772, 0.0
    %776 = vadd.xlane.f32.xlu0 %v775
    %v777 = vpop.xlane.xlu0 %776
    %v778 = vsel %vm281, %v774, 0.0
    %779 = vadd.xlane.f32.xlu0 %v778
    %v780 = vpop.xlane.xlu0 %779
    %v781 = vrcp.pop %v777
    %v782 = vmul.f32 %v772, %v781
    %v783 = vrcp.pop %v780
    %v784 = vmul.f32 %v774, %v783
    %785 = vrot.lane.b32.xlu0 %v270, 56
    %v786 = vpop.permute.xlu0 %785
    %v789 = vsel %vm281, %v782, 0
    %791 = vmatprep.subr.mxu0 0.0
    %792 = vmatpush1.msra.mxu0 %v786
    %793 = vmatprep.subr.mxu0 0.0
    %794 = vmatpush1.msra.mxu0 0.0
    %795 = vmatprep.subr.mxu0 0.0
    %796 = vmatpush1.msra.mxu0 0.0
    %797 = vmatprep.subr.mxu0 0.0
    %798 = vmatpush1.msra.mxu0 0.0
    %799 = vmatprep.subr.mxu0 0.0
    %800 = vmatpush1.msra.mxu0 0.0
    %801 = vmatprep.subr.mxu0 0.0
    %802 = vmatpush1.msra.mxu0 0.0
    %803 = vmatprep.subr.mxu0 0.0
    %804 = vmatpush1.msra.mxu0 0.0
    %805 = vmatprep.subr.mxu0 0.0
    %806 = vmatpush1.msra.mxu0 0.0
    %807 = vmatprep.subr.mxu0 0.0
    %808 = vmatpush1.msra.mxu0 0.0
    %809 = vmatprep.subr.mxu0 0.0
    %810 = vmatpush1.msra.mxu0 0.0
    %811 = vmatprep.subr.mxu0 0.0
    %812 = vmatpush1.msra.mxu0 0.0
    %813 = vmatprep.subr.mxu0 0.0
    %814 = vmatpush1.msra.mxu0 0.0
    %815 = vmatprep.subr.mxu0 0.0
    %816 = vmatpush1.msra.mxu0 0.0
    %817 = vmatprep.subr.mxu0 0.0
    %818 = vmatpush1.msra.mxu0 0.0
    %819 = vmatprep.subr.mxu0 0.0
    %820 = vmatpush1.msra.mxu0 0.0
    %821 = vmatprep.subr.mxu0 0.0
    %822 = vmatpush1.msra.mxu0 0.0
    %823 = vmatprep.subr.mxu0 0.0
    %824 = vmatpush1.msra.mxu0 0.0
    %825 = vmatprep.subr.mxu0 0.0
    %826 = vmatpush1.msra.mxu0 0.0
    %827 = vmatprep.subr.mxu0 0.0
    %828 = vmatpush1.msra.mxu0 0.0
    %829 = vmatprep.subr.mxu0 0.0
    %830 = vmatpush1.msra.mxu0 0.0
    %831 = vmatprep.subr.mxu0 0.0
    %832 = vmatpush1.msra.mxu0 0.0
    %833 = vmatprep.subr.mxu0 0.0
    %834 = vmatpush1.msra.mxu0 0.0
    %835 = vmatprep.subr.mxu0 0.0
    %836 = vmatpush1.msra.mxu0 0.0
    %837 = vmatprep.subr.mxu0 0.0
    %838 = vmatpush1.msra.mxu0 0.0
    %839 = vmatprep.subr.mxu0 0.0
    %840 = vmatpush1.msra.mxu0 0.0
    %841 = vmatprep.subr.mxu0 0.0
    %842 = vmatpush1.msra.mxu0 0.0
    %843 = vmatprep.subr.mxu0 0.0
    %844 = vmatpush1.msra.mxu0 0.0
    %845 = vmatprep.subr.mxu0 0.0
    %846 = vmatpush1.msra.mxu0 0.0
    %847 = vmatprep.subr.mxu0 0.0
    %848 = vmatpush1.msra.mxu0 0.0
    %849 = vmatprep.subr.mxu0 0.0
    %850 = vmatpush1.msra.mxu0 0.0
    %851 = vmatprep.subr.mxu0 0.0
    %852 = vmatpush1.msra.mxu0 0.0
    %853 = vmatprep.subr.mxu0 0.0
    %854 = vmatpush1.msra.mxu0 0.0
    %855 = vmatprep.mubr.f32.mxu0 0.0
    %856 = vmatmul.mubr.f32.gmra.mrb[0].mxu0 %v789
    %v857 = vpop.f32.mrb[0].mxu0
    %v858 = vadd.f32 0.0, %v857
    %v859 = vpop.f32.mrb[0].mxu0
    %860 = vdwg.mxu0
    %861 = vrot.lane.b32.xlu0 %v275, 56
    %v862 = vpop.permute.xlu0 %861
    %v865 = vsel %vm281, %v784, 0
    %867 = vmatprep.subr.mxu0 0.0
    %868 = vmatpush1.msra.mxu0 %v862
    %869 = vmatprep.subr.mxu0 0.0
    %870 = vmatpush1.msra.mxu0 0.0
    %871 = vmatprep.subr.mxu0 0.0
    %872 = vmatpush1.msra.mxu0 0.0
    %873 = vmatprep.subr.mxu0 0.0
    %874 = vmatpush1.msra.mxu0 0.0
    %875 = vmatprep.subr.mxu0 0.0
    %876 = vmatpush1.msra.mxu0 0.0
    %877 = vmatprep.subr.mxu0 0.0
    %878 = vmatpush1.msra.mxu0 0.0
    %879 = vmatprep.subr.mxu0 0.0
    %880 = vmatpush1.msra.mxu0 0.0
    %881 = vmatprep.subr.mxu0 0.0
    %882 = vmatpush1.msra.mxu0 0.0
    %883 = vmatprep.subr.mxu0 0.0
    %884 = vmatpush1.msra.mxu0 0.0
    %885 = vmatprep.subr.mxu0 0.0
    %886 = vmatpush1.msra.mxu0 0.0
    %887 = vmatprep.subr.mxu0 0.0
    %888 = vmatpush1.msra.mxu0 0.0
    %889 = vmatprep.subr.mxu0 0.0
    %890 = vmatpush1.msra.mxu0 0.0
    %891 = vmatprep.subr.mxu0 0.0
    %892 = vmatpush1.msra.mxu0 0.0
    %893 = vmatprep.subr.mxu0 0.0
    %894 = vmatpush1.msra.mxu0 0.0
    %895 = vmatprep.subr.mxu0 0.0
    %896 = vmatpush1.msra.mxu0 0.0
    %897 = vmatprep.subr.mxu0 0.0
    %898 = vmatpush1.msra.mxu0 0.0
    %899 = vmatprep.subr.mxu0 0.0
    %900 = vmatpush1.msra.mxu0 0.0
    %901 = vmatprep.subr.mxu0 0.0
    %902 = vmatpush1.msra.mxu0 0.0
    %903 = vmatprep.subr.mxu0 0.0
    %904 = vmatpush1.msra.mxu0 0.0
    %905 = vmatprep.subr.mxu0 0.0
    %906 = vmatpush1.msra.mxu0 0.0
    %907 = vmatprep.subr.mxu0 0.0
    %908 = vmatpush1.msra.mxu0 0.0
    %909 = vmatprep.subr.mxu0 0.0
    %910 = vmatpush1.msra.mxu0 0.0
    %911 = vmatprep.subr.mxu0 0.0
    %912 = vmatpush1.msra.mxu0 0.0
    %913 = vmatprep.subr.mxu0 0.0
    %914 = vmatpush1.msra.mxu0 0.0
    %915 = vmatprep.subr.mxu0 0.0
    %916 = vmatpush1.msra.mxu0 0.0
    %917 = vmatprep.subr.mxu0 0.0
    %918 = vmatpush1.msra.mxu0 0.0
    %919 = vmatprep.subr.mxu0 0.0
    %920 = vmatpush1.msra.mxu0 0.0
    %921 = vmatprep.subr.mxu0 0.0
    %922 = vmatpush1.msra.mxu0 0.0
    %923 = vmatprep.subr.mxu0 0.0
    %924 = vmatpush1.msra.mxu0 0.0
    %925 = vmatprep.subr.mxu0 0.0
    %926 = vmatpush1.msra.mxu0 0.0
    %927 = vmatprep.subr.mxu0 0.0
    %928 = vmatpush1.msra.mxu0 0.0
    %929 = vmatprep.subr.mxu0 0.0
    %930 = vmatpush1.msra.mxu0 0.0
    %931 = vmatprep.mubr.f32.mxu0 0.0
    %932 = vmatmul.mubr.f32.gmra.mrb[0].mxu0 %v865
    %v933 = vpop.f32.mrb[0].mxu0
    %v934 = vadd.f32 0.0, %v933
    %v935 = vpop.f32.mrb[0].mxu0
    %936 = vdwg.mxu0
    %937 = vrot.lane.b32.xlu0 %v270, 112
    %v938 = vpop.permute.xlu0 %937
    %939 = vrot.lane.b32.xlu0 %v270, 80
    %v940 = vpop.permute.xlu0 %939
    %v941 = vsel %vm281, %v938, 0
    %v943 = vsel %vm281, %v940, 0
    %945 = vmatprep.subr.mxu0 0.0
    %946 = vmatpush1.xpose.msra.mxu0 %v943
    %947 = vmatprep.subr.mxu0 0.0
    %948 = vmatpush1.xpose.msra.mxu0 0.0
    %949 = vmatprep.subr.mxu0 0.0
    %950 = vmatpush1.xpose.msra.mxu0 0.0
    %951 = vmatprep.subr.mxu0 0.0
    %952 = vmatpush1.xpose.msra.mxu0 0.0
    %953 = vmatprep.subr.mxu0 0.0
    %954 = vmatpush1.xpose.msra.mxu0 0.0
    %955 = vmatprep.subr.mxu0 0.0
    %956 = vmatpush1.xpose.msra.mxu0 0.0
    %957 = vmatprep.subr.mxu0 0.0
    %958 = vmatpush1.xpose.msra.mxu0 0.0
    %959 = vmatprep.subr.mxu0 0.0
    %960 = vmatpush1.xpose.msra.mxu0 0.0
    %961 = vmatprep.subr.mxu0 0.0
    %962 = vmatpush1.xpose.msra.mxu0 0.0
    %963 = vmatprep.subr.mxu0 0.0
    %964 = vmatpush1.xpose.msra.mxu0 0.0
    %965 = vmatprep.subr.mxu0 0.0
    %966 = vmatpush1.xpose.msra.mxu0 0.0
    %967 = vmatprep.subr.mxu0 0.0
    %968 = vmatpush1.xpose.msra.mxu0 0.0
    %969 = vmatprep.subr.mxu0 0.0
    %970 = vmatpush1.xpose.msra.mxu0 0.0
    %971 = vmatprep.subr.mxu0 0.0
    %972 = vmatpush1.xpose.msra.mxu0 0.0
    %973 = vmatprep.subr.mxu0 0.0
    %974 = vmatpush1.xpose.msra.mxu0 0.0
    %975 = vmatprep.subr.mxu0 0.0
    %976 = vmatpush1.xpose.msra.mxu0 0.0
    %977 = vmatprep.subr.mxu0 0.0
    %978 = vmatpush1.xpose.msra.mxu0 0.0
    %979 = vmatprep.subr.mxu0 0.0
    %980 = vmatpush1.xpose.msra.mxu0 0.0
    %981 = vmatprep.subr.mxu0 0.0
    %982 = vmatpush1.xpose.msra.mxu0 0.0
    %983 = vmatprep.subr.mxu0 0.0
    %984 = vmatpush1.xpose.msra.mxu0 0.0
    %985 = vmatprep.subr.mxu0 0.0
    %986 = vmatpush1.xpose.msra.mxu0 0.0
    %987 = vmatprep.subr.mxu0 0.0
    %988 = vmatpush1.xpose.msra.mxu0 0.0
    %989 = vmatprep.subr.mxu0 0.0
    %990 = vmatpush1.xpose.msra.mxu0 0.0
    %991 = vmatprep.subr.mxu0 0.0
    %992 = vmatpush1.xpose.msra.mxu0 0.0
    %993 = vmatprep.subr.mxu0 0.0
    %994 = vmatpush1.xpose.msra.mxu0 0.0
    %995 = vmatprep.subr.mxu0 0.0
    %996 = vmatpush1.xpose.msra.mxu0 0.0
    %997 = vmatprep.subr.mxu0 0.0
    %998 = vmatpush1.xpose.msra.mxu0 0.0
    %999 = vmatprep.subr.mxu0 0.0
    %1000 = vmatpush1.xpose.msra.mxu0 0.0
    %1001 = vmatprep.subr.mxu0 0.0
    %1002 = vmatpush1.xpose.msra.mxu0 0.0
    %1003 = vmatprep.subr.mxu0 0.0
    %1004 = vmatpush1.xpose.msra.mxu0 0.0
    %1005 = vmatprep.subr.mxu0 0.0
    %1006 = vmatpush1.xpose.msra.mxu0 0.0
    %1007 = vmatprep.subr.mxu0 0.0
    %1008 = vmatpush1.xpose.msra.mxu0 0.0
    %1009 = vmatprep.mubr.f32.mxu0 0.0
    %1010 = vmatmul.mubr.f32.gmra.mrb[0].mxu0 %v941
    %v1011 = vpop.f32.mrb[0].mxu0
    %v1012 = vadd.f32 %v147, %v1011
    %v1013 = vpop.f32.mrb[0].mxu0
    %1014 = vdwg.mxu0
    %1015 = vrot.lane.b32.xlu0 %v275, 112
    %v1016 = vpop.permute.xlu0 %1015
    %1017 = vrot.lane.b32.xlu0 %v275, 80
    %v1018 = vpop.permute.xlu0 %1017
    %v1019 = vsel %vm281, %v1016, 0
    %v1021 = vsel %vm281, %v1018, 0
    %1023 = vmatprep.subr.mxu0 0.0
    %1024 = vmatpush1.xpose.msra.mxu0 %v1021
    %1025 = vmatprep.subr.mxu0 0.0
    %1026 = vmatpush1.xpose.msra.mxu0 0.0
    %1027 = vmatprep.subr.mxu0 0.0
    %1028 = vmatpush1.xpose.msra.mxu0 0.0
    %1029 = vmatprep.subr.mxu0 0.0
    %1030 = vmatpush1.xpose.msra.mxu0 0.0
    %1031 = vmatprep.subr.mxu0 0.0
    %1032 = vmatpush1.xpose.msra.mxu0 0.0
    %1033 = vmatprep.subr.mxu0 0.0
    %1034 = vmatpush1.xpose.msra.mxu0 0.0
    %1035 = vmatprep.subr.mxu0 0.0
    %1036 = vmatpush1.xpose.msra.mxu0 0.0
    %1037 = vmatprep.subr.mxu0 0.0
    %1038 = vmatpush1.xpose.msra.mxu0 0.0
    %1039 = vmatprep.subr.mxu0 0.0
    %1040 = vmatpush1.xpose.msra.mxu0 0.0
    %1041 = vmatprep.subr.mxu0 0.0
    %1042 = vmatpush1.xpose.msra.mxu0 0.0
    %1043 = vmatprep.subr.mxu0 0.0
    %1044 = vmatpush1.xpose.msra.mxu0 0.0
    %1045 = vmatprep.subr.mxu0 0.0
    %1046 = vmatpush1.xpose.msra.mxu0 0.0
    %1047 = vmatprep.subr.mxu0 0.0
    %1048 = vmatpush1.xpose.msra.mxu0 0.0
    %1049 = vmatprep.subr.mxu0 0.0
    %1050 = vmatpush1.xpose.msra.mxu0 0.0
    %1051 = vmatprep.subr.mxu0 0.0
    %1052 = vmatpush1.xpose.msra.mxu0 0.0
    %1053 = vmatprep.subr.mxu0 0.0
    %1054 = vmatpush1.xpose.msra.mxu0 0.0
    %1055 = vmatprep.subr.mxu0 0.0
    %1056 = vmatpush1.xpose.msra.mxu0 0.0
    %1057 = vmatprep.subr.mxu0 0.0
    %1058 = vmatpush1.xpose.msra.mxu0 0.0
    %1059 = vmatprep.subr.mxu0 0.0
    %1060 = vmatpush1.xpose.msra.mxu0 0.0
    %1061 = vmatprep.subr.mxu0 0.0
    %1062 = vmatpush1.xpose.msra.mxu0 0.0
    %1063 = vmatprep.subr.mxu0 0.0
    %1064 = vmatpush1.xpose.msra.mxu0 0.0
    %1065 = vmatprep.subr.mxu0 0.0
    %1066 = vmatpush1.xpose.msra.mxu0 0.0
    %1067 = vmatprep.subr.mxu0 0.0
    %1068 = vmatpush1.xpose.msra.mxu0 0.0
    %1069 = vmatprep.subr.mxu0 0.0
    %1070 = vmatpush1.xpose.msra.mxu0 0.0
    %1071 = vmatprep.subr.mxu0 0.0
    %1072 = vmatpush1.xpose.msra.mxu0 0.0
    %1073 = vmatprep.subr.mxu0 0.0
    %1074 = vmatpush1.xpose.msra.mxu0 0.0
    %1075 = vmatprep.subr.mxu0 0.0
    %1076 = vmatpush1.xpose.msra.mxu0 0.0
    %1077 = vmatprep.subr.mxu0 0.0
    %1078 = vmatpush1.xpose.msra.mxu0 0.0
    %1079 = vmatprep.subr.mxu0 0.0
    %1080 = vmatpush1.xpose.msra.mxu0 0.0
    %1081 = vmatprep.subr.mxu0 0.0
    %1082 = vmatpush1.xpose.msra.mxu0 0.0
    %1083 = vmatprep.subr.mxu0 0.0
    %1084 = vmatpush1.xpose.msra.mxu0 0.0
    %1085 = vmatprep.subr.mxu0 0.0
    %1086 = vmatpush1.xpose.msra.mxu0 0.0
    %1087 = vmatprep.mubr.f32.mxu0 0.0
    %1088 = vmatmul.mubr.f32.gmra.mrb[0].mxu0 %v1019
    %v1089 = vpop.f32.mrb[0].mxu0
    %v1090 = vadd.f32 %v147, %v1089
    %v1091 = vpop.f32.mrb[0].mxu0
    %1092 = vdwg.mxu0
    %v1093 = vsel %vm281, %v1012, -inf
    %1094 = vmax.xlane.f32.xlu0 %v1093
    %v1095 = vpop.xlane.xlu0 %1094
    %v1096 = vsel %vm281, %v1090, -inf
    %1097 = vmax.xlane.f32.xlu0 %v1096
    %v1098 = vpop.xlane.xlu0 %1097
    %v1099 = vsub.f32 %v1012, %v1095
    %v1100 = vsub.f32 %v1090, %v1098
    %v1101 = vmul.f32 %v1099, 1.442695
    %v1102 = vpow.pop %v1101
    %v1103 = vmul.f32 %v1100, 1.442695
    %v1104 = vpow.pop %v1103
    %v1105 = vsel %vm281, %v1102, 0.0
    %1106 = vadd.xlane.f32.xlu0 %v1105
    %v1107 = vpop.xlane.xlu0 %1106
    %v1108 = vsel %vm281, %v1104, 0.0
    %1109 = vadd.xlane.f32.xlu0 %v1108
    %v1110 = vpop.xlane.xlu0 %1109
    %v1111 = vrcp.pop %v1107
    %v1112 = vmul.f32 %v1102, %v1111
    %v1113 = vrcp.pop %v1110
    %v1114 = vmul.f32 %v1104, %v1113
    %1115 = vrot.lane.b32.xlu0 %v270, 48
    %v1116 = vpop.permute.xlu0 %1115
    %v1119 = vsel %vm281, %v1112, 0
    %1121 = vmatprep.subr.mxu0 0.0
    %1122 = vmatpush1.msra.mxu0 %v1116
    %1123 = vmatprep.subr.mxu0 0.0
    %1124 = vmatpush1.msra.mxu0 0.0
    %1125 = vmatprep.subr.mxu0 0.0
    %1126 = vmatpush1.msra.mxu0 0.0
    %1127 = vmatprep.subr.mxu0 0.0
    %1128 = vmatpush1.msra.mxu0 0.0
    %1129 = vmatprep.subr.mxu0 0.0
    %1130 = vmatpush1.msra.mxu0 0.0
    %1131 = vmatprep.subr.mxu0 0.0
    %1132 = vmatpush1.msra.mxu0 0.0
    %1133 = vmatprep.subr.mxu0 0.0
    %1134 = vmatpush1.msra.mxu0 0.0
    %1135 = vmatprep.subr.mxu0 0.0
    %1136 = vmatpush1.msra.mxu0 0.0
    %1137 = vmatprep.subr.mxu0 0.0
    %1138 = vmatpush1.msra.mxu0 0.0
    %1139 = vmatprep.subr.mxu0 0.0
    %1140 = vmatpush1.msra.mxu0 0.0
    %1141 = vmatprep.subr.mxu0 0.0
    %1142 = vmatpush1.msra.mxu0 0.0
    %1143 = vmatprep.subr.mxu0 0.0
    %1144 = vmatpush1.msra.mxu0 0.0
    %1145 = vmatprep.subr.mxu0 0.0
    %1146 = vmatpush1.msra.mxu0 0.0
    %1147 = vmatprep.subr.mxu0 0.0
    %1148 = vmatpush1.msra.mxu0 0.0
    %1149 = vmatprep.subr.mxu0 0.0
    %1150 = vmatpush1.msra.mxu0 0.0
    %1151 = vmatprep.subr.mxu0 0.0
    %1152 = vmatpush1.msra.mxu0 0.0
    %1153 = vmatprep.subr.mxu0 0.0
    %1154 = vmatpush1.msra.mxu0 0.0
    %1155 = vmatprep.subr.mxu0 0.0
    %1156 = vmatpush1.msra.mxu0 0.0
    %1157 = vmatprep.subr.mxu0 0.0
    %1158 = vmatpush1.msra.mxu0 0.0
    %1159 = vmatprep.subr.mxu0 0.0
    %1160 = vmatpush1.msra.mxu0 0.0
    %1161 = vmatprep.subr.mxu0 0.0
    %1162 = vmatpush1.msra.mxu0 0.0
    %1163 = vmatprep.subr.mxu0 0.0
    %1164 = vmatpush1.msra.mxu0 0.0
    %1165 = vmatprep.subr.mxu0 0.0
    %1166 = vmatpush1.msra.mxu0 0.0
    %1167 = vmatprep.subr.mxu0 0.0
    %1168 = vmatpush1.msra.mxu0 0.0
    %1169 = vmatprep.subr.mxu0 0.0
    %1170 = vmatpush1.msra.mxu0 0.0
    %1171 = vmatprep.subr.mxu0 0.0
    %1172 = vmatpush1.msra.mxu0 0.0
    %1173 = vmatprep.subr.mxu0 0.0
    %1174 = vmatpush1.msra.mxu0 0.0
    %1175 = vmatprep.subr.mxu0 0.0
    %1176 = vmatpush1.msra.mxu0 0.0
    %1177 = vmatprep.subr.mxu0 0.0
    %1178 = vmatpush1.msra.mxu0 0.0
    %1179 = vmatprep.subr.mxu0 0.0
    %1180 = vmatpush1.msra.mxu0 0.0
    %1181 = vmatprep.subr.mxu0 0.0
    %1182 = vmatpush1.msra.mxu0 0.0
    %1183 = vmatprep.subr.mxu0 0.0
    %1184 = vmatpush1.msra.mxu0 0.0
    %1185 = vmatprep.mubr.f32.mxu0 0.0
    %1186 = vmatmul.mubr.f32.gmra.mrb[0].mxu0 %v1119
    %v1187 = vpop.f32.mrb[0].mxu0
    %v1188 = vadd.f32 0.0, %v1187
    %v1189 = vpop.f32.mrb[0].mxu0
    %1190 = vdwg.mxu0
    %1191 = vrot.lane.b32.xlu0 %v275, 48
    %v1192 = vpop.permute.xlu0 %1191
    %v1195 = vsel %vm281, %v1114, 0
    %1197 = vmatprep.subr.mxu0 0.0
    %1198 = vmatpush1.msra.mxu0 %v1192
    %1199 = vmatprep.subr.mxu0 0.0
    %1200 = vmatpush1.msra.mxu0 0.0
    %1201 = vmatprep.subr.mxu0 0.0
    %1202 = vmatpush1.msra.mxu0 0.0
    %1203 = vmatprep.subr.mxu0 0.0
    %1204 = vmatpush1.msra.mxu0 0.0
    %1205 = vmatprep.subr.mxu0 0.0
    %1206 = vmatpush1.msra.mxu0 0.0
    %1207 = vmatprep.subr.mxu0 0.0
    %1208 = vmatpush1.msra.mxu0 0.0
    %1209 = vmatprep.subr.mxu0 0.0
    %1210 = vmatpush1.msra.mxu0 0.0
    %1211 = vmatprep.subr.mxu0 0.0
    %1212 = vmatpush1.msra.mxu0 0.0
    %1213 = vmatprep.subr.mxu0 0.0
    %1214 = vmatpush1.msra.mxu0 0.0
    %1215 = vmatprep.subr.mxu0 0.0
    %1216 = vmatpush1.msra.mxu0 0.0
    %1217 = vmatprep.subr.mxu0 0.0
    %1218 = vmatpush1.msra.mxu0 0.0
    %1219 = vmatprep.subr.mxu0 0.0
    %1220 = vmatpush1.msra.mxu0 0.0
    %1221 = vmatprep.subr.mxu0 0.0
    %1222 = vmatpush1.msra.mxu0 0.0
    %1223 = vmatprep.subr.mxu0 0.0
    %1224 = vmatpush1.msra.mxu0 0.0
    %1225 = vmatprep.subr.mxu0 0.0
    %1226 = vmatpush1.msra.mxu0 0.0
    %1227 = vmatprep.subr.mxu0 0.0
    %1228 = vmatpush1.msra.mxu0 0.0
    %1229 = vmatprep.subr.mxu0 0.0
    %1230 = vmatpush1.msra.mxu0 0.0
    %1231 = vmatprep.subr.mxu0 0.0
    %1232 = vmatpush1.msra.mxu0 0.0
    %1233 = vmatprep.subr.mxu0 0.0
    %1234 = vmatpush1.msra.mxu0 0.0
    %1235 = vmatprep.subr.mxu0 0.0
    %1236 = vmatpush1.msra.mxu0 0.0
    %1237 = vmatprep.subr.mxu0 0.0
    %1238 = vmatpush1.msra.mxu0 0.0
    %1239 = vmatprep.subr.mxu0 0.0
    %1240 = vmatpush1.msra.mxu0 0.0
    %1241 = vmatprep.subr.mxu0 0.0
    %1242 = vmatpush1.msra.mxu0 0.0
    %1243 = vmatprep.subr.mxu0 0.0
    %1244 = vmatpush1.msra.mxu0 0.0
    %1245 = vmatprep.subr.mxu0 0.0
    %1246 = vmatpush1.msra.mxu0 0.0
    %1247 = vmatprep.subr.mxu0 0.0
    %1248 = vmatpush1.msra.mxu0 0.0
    %1249 = vmatprep.subr.mxu0 0.0
    %1250 = vmatpush1.msra.mxu0 0.0
    %1251 = vmatprep.subr.mxu0 0.0
    %1252 = vmatpush1.msra.mxu0 0.0
    %1253 = vmatprep.subr.mxu0 0.0
    %1254 = vmatpush1.msra.mxu0 0.0
    %1255 = vmatprep.subr.mxu0 0.0
    %1256 = vmatpush1.msra.mxu0 0.0
    %1257 = vmatprep.subr.mxu0 0.0
    %1258 = vmatpush1.msra.mxu0 0.0
    %1259 = vmatprep.subr.mxu0 0.0
    %1260 = vmatpush1.msra.mxu0 0.0
    %1261 = vmatprep.mubr.f32.mxu0 0.0
    %1262 = vmatmul.mubr.f32.gmra.mrb[0].mxu0 %v1195
    %v1263 = vpop.f32.mrb[0].mxu0
    %v1264 = vadd.f32 0.0, %v1263
    %v1265 = vpop.f32.mrb[0].mxu0
    %1266 = vdwg.mxu0
    %1267 = vrot.lane.b32.xlu0 %v270, 104
    %v1268 = vpop.permute.xlu0 %1267
    %1269 = vrot.lane.b32.xlu0 %v270, 72
    %v1270 = vpop.permute.xlu0 %1269
    %v1271 = vsel %vm281, %v1268, 0
    %v1273 = vsel %vm281, %v1270, 0
    %1275 = vmatprep.subr.mxu0 0.0
    %1276 = vmatpush1.xpose.msra.mxu0 %v1273
    %1277 = vmatprep.subr.mxu0 0.0
    %1278 = vmatpush1.xpose.msra.mxu0 0.0
    %1279 = vmatprep.subr.mxu0 0.0
    %1280 = vmatpush1.xpose.msra.mxu0 0.0
    %1281 = vmatprep.subr.mxu0 0.0
    %1282 = vmatpush1.xpose.msra.mxu0 0.0
    %1283 = vmatprep.subr.mxu0 0.0
    %1284 = vmatpush1.xpose.msra.mxu0 0.0
    %1285 = vmatprep.subr.mxu0 0.0
    %1286 = vmatpush1.xpose.msra.mxu0 0.0
    %1287 = vmatprep.subr.mxu0 0.0
    %1288 = vmatpush1.xpose.msra.mxu0 0.0
    %1289 = vmatprep.subr.mxu0 0.0
    %1290 = vmatpush1.xpose.msra.mxu0 0.0
    %1291 = vmatprep.subr.mxu0 0.0
    %1292 = vmatpush1.xpose.msra.mxu0 0.0
    %1293 = vmatprep.subr.mxu0 0.0
    %1294 = vmatpush1.xpose.msra.mxu0 0.0
    %1295 = vmatprep.subr.mxu0 0.0
    %1296 = vmatpush1.xpose.msra.mxu0 0.0
    %1297 = vmatprep.subr.mxu0 0.0
    %1298 = vmatpush1.xpose.msra.mxu0 0.0
    %1299 = vmatprep.subr.mxu0 0.0
    %1300 = vmatpush1.xpose.msra.mxu0 0.0
    %1301 = vmatprep.subr.mxu0 0.0
    %1302 = vmatpush1.xpose.msra.mxu0 0.0
    %1303 = vmatprep.subr.mxu0 0.0
    %1304 = vmatpush1.xpose.msra.mxu0 0.0
    %1305 = vmatprep.subr.mxu0 0.0
    %1306 = vmatpush1.xpose.msra.mxu0 0.0
    %1307 = vmatprep.subr.mxu0 0.0
    %1308 = vmatpush1.xpose.msra.mxu0 0.0
    %1309 = vmatprep.subr.mxu0 0.0
    %1310 = vmatpush1.xpose.msra.mxu0 0.0
    %1311 = vmatprep.subr.mxu0 0.0
    %1312 = vmatpush1.xpose.msra.mxu0 0.0
    %1313 = vmatprep.subr.mxu0 0.0
    %1314 = vmatpush1.xpose.msra.mxu0 0.0
    %1315 = vmatprep.subr.mxu0 0.0
    %1316 = vmatpush1.xpose.msra.mxu0 0.0
    %1317 = vmatprep.subr.mxu0 0.0
    %1318 = vmatpush1.xpose.msra.mxu0 0.0
    %1319 = vmatprep.subr.mxu0 0.0
    %1320 = vmatpush1.xpose.msra.mxu0 0.0
    %1321 = vmatprep.subr.mxu0 0.0
    %1322 = vmatpush1.xpose.msra.mxu0 0.0
    %1323 = vmatprep.subr.mxu0 0.0
    %1324 = vmatpush1.xpose.msra.mxu0 0.0
    %1325 = vmatprep.subr.mxu0 0.0
    %1326 = vmatpush1.xpose.msra.mxu0 0.0
    %1327 = vmatprep.subr.mxu0 0.0
    %1328 = vmatpush1.xpose.msra.mxu0 0.0
    %1329 = vmatprep.subr.mxu0 0.0
    %1330 = vmatpush1.xpose.msra.mxu0 0.0
    %1331 = vmatprep.subr.mxu0 0.0
    %1332 = vmatpush1.xpose.msra.mxu0 0.0
    %1333 = vmatprep.subr.mxu0 0.0
    %1334 = vmatpush1.xpose.msra.mxu0 0.0
    %1335 = vmatprep.subr.mxu0 0.0
    %1336 = vmatpush1.xpose.msra.mxu0 0.0
    %1337 = vmatprep.subr.mxu0 0.0
    %1338 = vmatpush1.xpose.msra.mxu0 0.0
    %1339 = vmatprep.mubr.f32.mxu0 0.0
    %1340 = vmatmul.mubr.f32.gmra.mrb[0].mxu0 %v1271
    %v1341 = vpop.f32.mrb[0].mxu0
    %v1342 = vadd.f32 %v147, %v1341
    %v1343 = vpop.f32.mrb[0].mxu0
    %1344 = vdwg.mxu0
    %1345 = vrot.lane.b32.xlu0 %v275, 104
    %v1346 = vpop.permute.xlu0 %1345
    %1347 = vrot.lane.b32.xlu0 %v275, 72
    %v1348 = vpop.permute.xlu0 %1347
    %v1349 = vsel %vm281, %v1346, 0
    %v1351 = vsel %vm281, %v1348, 0
    %1353 = vmatprep.subr.mxu0 0.0
    %1354 = vmatpush1.xpose.msra.mxu0 %v1351
    %1355 = vmatprep.subr.mxu0 0.0
    %1356 = vmatpush1.xpose.msra.mxu0 0.0
    %1357 = vmatprep.subr.mxu0 0.0
    %1358 = vmatpush1.xpose.msra.mxu0 0.0
    %1359 = vmatprep.subr.mxu0 0.0
    %1360 = vmatpush1.xpose.msra.mxu0 0.0
    %1361 = vmatprep.subr.mxu0 0.0
    %1362 = vmatpush1.xpose.msra.mxu0 0.0
    %1363 = vmatprep.subr.mxu0 0.0
    %1364 = vmatpush1.xpose.msra.mxu0 0.0
    %1365 = vmatprep.subr.mxu0 0.0
    %1366 = vmatpush1.xpose.msra.mxu0 0.0
    %1367 = vmatprep.subr.mxu0 0.0
    %1368 = vmatpush1.xpose.msra.mxu0 0.0
    %1369 = vmatprep.subr.mxu0 0.0
    %1370 = vmatpush1.xpose.msra.mxu0 0.0
    %1371 = vmatprep.subr.mxu0 0.0
    %1372 = vmatpush1.xpose.msra.mxu0 0.0
    %1373 = vmatprep.subr.mxu0 0.0
    %1374 = vmatpush1.xpose.msra.mxu0 0.0
    %1375 = vmatprep.subr.mxu0 0.0
    %1376 = vmatpush1.xpose.msra.mxu0 0.0
    %1377 = vmatprep.subr.mxu0 0.0
    %1378 = vmatpush1.xpose.msra.mxu0 0.0
    %1379 = vmatprep.subr.mxu0 0.0
    %1380 = vmatpush1.xpose.msra.mxu0 0.0
    %1381 = vmatprep.subr.mxu0 0.0
    %1382 = vmatpush1.xpose.msra.mxu0 0.0
    %1383 = vmatprep.subr.mxu0 0.0
    %1384 = vmatpush1.xpose.msra.mxu0 0.0
    %1385 = vmatprep.subr.mxu0 0.0
    %1386 = vmatpush1.xpose.msra.mxu0 0.0
    %1387 = vmatprep.subr.mxu0 0.0
    %1388 = vmatpush1.xpose.msra.mxu0 0.0
    %1389 = vmatprep.subr.mxu0 0.0
    %1390 = vmatpush1.xpose.msra.mxu0 0.0
    %1391 = vmatprep.subr.mxu0 0.0
    %1392 = vmatpush1.xpose.msra.mxu0 0.0
    %1393 = vmatprep.subr.mxu0 0.0
    %1394 = vmatpush1.xpose.msra.mxu0 0.0
    %1395 = vmatprep.subr.mxu0 0.0
    %1396 = vmatpush1.xpose.msra.mxu0 0.0
    %1397 = vmatprep.subr.mxu0 0.0
    %1398 = vmatpush1.xpose.msra.mxu0 0.0
    %1399 = vmatprep.subr.mxu0 0.0
    %1400 = vmatpush1.xpose.msra.mxu0 0.0
    %1401 = vmatprep.subr.mxu0 0.0
    %1402 = vmatpush1.xpose.msra.mxu0 0.0
    %1403 = vmatprep.subr.mxu0 0.0
    %1404 = vmatpush1.xpose.msra.mxu0 0.0
    %1405 = vmatprep.subr.mxu0 0.0
    %1406 = vmatpush1.xpose.msra.mxu0 0.0
    %1407 = vmatprep.subr.mxu0 0.0
    %1408 = vmatpush1.xpose.msra.mxu0 0.0
    %1409 = vmatprep.subr.mxu0 0.0
    %1410 = vmatpush1.xpose.msra.mxu0 0.0
    %1411 = vmatprep.subr.mxu0 0.0
    %1412 = vmatpush1.xpose.msra.mxu0 0.0
    %1413 = vmatprep.subr.mxu0 0.0
    %1414 = vmatpush1.xpose.msra.mxu0 0.0
    %1415 = vmatprep.subr.mxu0 0.0
    %1416 = vmatpush1.xpose.msra.mxu0 0.0
    %1417 = vmatprep.mubr.f32.mxu0 0.0
    %1418 = vmatmul.mubr.f32.gmra.mrb[0].mxu0 %v1349
    %v1419 = vpop.f32.mrb[0].mxu0
    %v1420 = vadd.f32 %v147, %v1419
    %v1421 = vpop.f32.mrb[0].mxu0
    %1422 = vdwg.mxu0
    %v1423 = vsel %vm281, %v1342, -inf
    %1424 = vmax.xlane.f32.xlu0 %v1423
    %v1425 = vpop.xlane.xlu0 %1424
    %v1426 = vsel %vm281, %v1420, -inf
    %1427 = vmax.xlane.f32.xlu0 %v1426
    %v1428 = vpop.xlane.xlu0 %1427
    %v1429 = vsub.f32 %v1342, %v1425
    %v1430 = vsub.f32 %v1420, %v1428
    %v1431 = vmul.f32 %v1429, 1.442695
    %v1432 = vpow.pop %v1431
    %v1433 = vmul.f32 %v1430, 1.442695
    %v1434 = vpow.pop %v1433
    %v1435 = vsel %vm281, %v1432, 0.0
    %1436 = vadd.xlane.f32.xlu0 %v1435
    %v1437 = vpop.xlane.xlu0 %1436
    %v1438 = vsel %vm281, %v1434, 0.0
    %1439 = vadd.xlane.f32.xlu0 %v1438
    %v1440 = vpop.xlane.xlu0 %1439
    %v1441 = vrcp.pop %v1437
    %v1442 = vmul.f32 %v1432, %v1441
    %v1443 = vrcp.pop %v1440
    %v1444 = vmul.f32 %v1434, %v1443
    %1445 = vrot.lane.b32.xlu0 %v270, 40
    %v1446 = vpop.permute.xlu0 %1445
    %v1449 = vsel %vm281, %v1442, 0
    %1451 = vmatprep.subr.mxu0 0.0
    %1452 = vmatpush1.msra.mxu0 %v1446
    %1453 = vmatprep.subr.mxu0 0.0
    %1454 = vmatpush1.msra.mxu0 0.0
    %1455 = vmatprep.subr.mxu0 0.0
    %1456 = vmatpush1.msra.mxu0 0.0
    %1457 = vmatprep.subr.mxu0 0.0
    %1458 = vmatpush1.msra.mxu0 0.0
    %1459 = vmatprep.subr.mxu0 0.0
    %1460 = vmatpush1.msra.mxu0 0.0
    %1461 = vmatprep.subr.mxu0 0.0
    %1462 = vmatpush1.msra.mxu0 0.0
    %1463 = vmatprep.subr.mxu0 0.0
    %1464 = vmatpush1.msra.mxu0 0.0
    %1465 = vmatprep.subr.mxu0 0.0
    %1466 = vmatpush1.msra.mxu0 0.0
    %1467 = vmatprep.subr.mxu0 0.0
    %1468 = vmatpush1.msra.mxu0 0.0
    %1469 = vmatprep.subr.mxu0 0.0
    %1470 = vmatpush1.msra.mxu0 0.0
    %1471 = vmatprep.subr.mxu0 0.0
    %1472 = vmatpush1.msra.mxu0 0.0
    %1473 = vmatprep.subr.mxu0 0.0
    %1474 = vmatpush1.msra.mxu0 0.0
    %1475 = vmatprep.subr.mxu0 0.0
    %1476 = vmatpush1.msra.mxu0 0.0
    %1477 = vmatprep.subr.mxu0 0.0
    %1478 = vmatpush1.msra.mxu0 0.0
    %1479 = vmatprep.subr.mxu0 0.0
    %1480 = vmatpush1.msra.mxu0 0.0
    %1481 = vmatprep.subr.mxu0 0.0
    %1482 = vmatpush1.msra.mxu0 0.0
    %1483 = vmatprep.subr.mxu0 0.0
    %1484 = vmatpush1.msra.mxu0 0.0
    %1485 = vmatprep.subr.mxu0 0.0
    %1486 = vmatpush1.msra.mxu0 0.0
    %1487 = vmatprep.subr.mxu0 0.0
    %1488 = vmatpush1.msra.mxu0 0.0
    %1489 = vmatprep.subr.mxu0 0.0
    %1490 = vmatpush1.msra.mxu0 0.0
    %1491 = vmatprep.subr.mxu0 0.0
    %1492 = vmatpush1.msra.mxu0 0.0
    %1493 = vmatprep.subr.mxu0 0.0
    %1494 = vmatpush1.msra.mxu0 0.0
    %1495 = vmatprep.subr.mxu0 0.0
    %1496 = vmatpush1.msra.mxu0 0.0
    %1497 = vmatprep.subr.mxu0 0.0
    %1498 = vmatpush1.msra.mxu0 0.0
    %1499 = vmatprep.subr.mxu0 0.0
    %1500 = vmatpush1.msra.mxu0 0.0
    %1501 = vmatprep.subr.mxu0 0.0
    %1502 = vmatpush1.msra.mxu0 0.0
    %1503 = vmatprep.subr.mxu0 0.0
    %1504 = vmatpush1.msra.mxu0 0.0
    %1505 = vmatprep.subr.mxu0 0.0
    %1506 = vmatpush1.msra.mxu0 0.0
    %1507 = vmatprep.subr.mxu0 0.0
    %1508 = vmatpush1.msra.mxu0 0.0
    %1509 = vmatprep.subr.mxu0 0.0
    %1510 = vmatpush1.msra.mxu0 0.0
    %1511 = vmatprep.subr.mxu0 0.0
    %1512 = vmatpush1.msra.mxu0 0.0
    %1513 = vmatprep.subr.mxu0 0.0
    %1514 = vmatpush1.msra.mxu0 0.0
    %1515 = vmatprep.mubr.f32.mxu0 0.0
    %1516 = vmatmul.mubr.f32.gmra.mrb[0].mxu0 %v1449
    %v1517 = vpop.f32.mrb[0].mxu0
    %v1518 = vadd.f32 0.0, %v1517
    %v1519 = vpop.f32.mrb[0].mxu0
    %1520 = vdwg.mxu0
    %1521 = vrot.lane.b32.xlu0 %v275, 40
    %v1522 = vpop.permute.xlu0 %1521
    %v1525 = vsel %vm281, %v1444, 0
    %1527 = vmatprep.subr.mxu0 0.0
    %1528 = vmatpush1.msra.mxu0 %v1522
    %1529 = vmatprep.subr.mxu0 0.0
    %1530 = vmatpush1.msra.mxu0 0.0
    %1531 = vmatprep.subr.mxu0 0.0
    %1532 = vmatpush1.msra.mxu0 0.0
    %1533 = vmatprep.subr.mxu0 0.0
    %1534 = vmatpush1.msra.mxu0 0.0
    %1535 = vmatprep.subr.mxu0 0.0
    %1536 = vmatpush1.msra.mxu0 0.0
    %1537 = vmatprep.subr.mxu0 0.0
    %1538 = vmatpush1.msra.mxu0 0.0
    %1539 = vmatprep.subr.mxu0 0.0
    %1540 = vmatpush1.msra.mxu0 0.0
    %1541 = vmatprep.subr.mxu0 0.0
    %1542 = vmatpush1.msra.mxu0 0.0
    %1543 = vmatprep.subr.mxu0 0.0
    %1544 = vmatpush1.msra.mxu0 0.0
    %1545 = vmatprep.subr.mxu0 0.0
    %1546 = vmatpush1.msra.mxu0 0.0
    %1547 = vmatprep.subr.mxu0 0.0
    %1548 = vmatpush1.msra.mxu0 0.0
    %1549 = vmatprep.subr.mxu0 0.0
    %1550 = vmatpush1.msra.mxu0 0.0
    %1551 = vmatprep.subr.mxu0 0.0
    %1552 = vmatpush1.msra.mxu0 0.0
    %1553 = vmatprep.subr.mxu0 0.0
    %1554 = vmatpush1.msra.mxu0 0.0
    %1555 = vmatprep.subr.mxu0 0.0
    %1556 = vmatpush1.msra.mxu0 0.0
    %1557 = vmatprep.subr.mxu0 0.0
    %1558 = vmatpush1.msra.mxu0 0.0
    %1559 = vmatprep.subr.mxu0 0.0
    %1560 = vmatpush1.msra.mxu0 0.0
    %1561 = vmatprep.subr.mxu0 0.0
    %1562 = vmatpush1.msra.mxu0 0.0
    %1563 = vmatprep.subr.mxu0 0.0
    %1564 = vmatpush1.msra.mxu0 0.0
    %1565 = vmatprep.subr.mxu0 0.0
    %1566 = vmatpush1.msra.mxu0 0.0
    %1567 = vmatprep.subr.mxu0 0.0
    %1568 = vmatpush1.msra.mxu0 0.0
    %1569 = vmatprep.subr.mxu0 0.0
    %1570 = vmatpush1.msra.mxu0 0.0
    %1571 = vmatprep.subr.mxu0 0.0
    %1572 = vmatpush1.msra.mxu0 0.0
    %1573 = vmatprep.subr.mxu0 0.0
    %1574 = vmatpush1.msra.mxu0 0.0
    %1575 = vmatprep.subr.mxu0 0.0
    %1576 = vmatpush1.msra.mxu0 0.0
    %1577 = vmatprep.subr.mxu0 0.0
    %1578 = vmatpush1.msra.mxu0 0.0
    %1579 = vmatprep.subr.mxu0 0.0
    %1580 = vmatpush1.msra.mxu0 0.0
    %1581 = vmatprep.subr.mxu0 0.0
    %1582 = vmatpush1.msra.mxu0 0.0
    %1583 = vmatprep.subr.mxu0 0.0
    %1584 = vmatpush1.msra.mxu0 0.0
    %1585 = vmatprep.subr.mxu0 0.0
    %1586 = vmatpush1.msra.mxu0 0.0
    %1587 = vmatprep.subr.mxu0 0.0
    %1588 = vmatpush1.msra.mxu0 0.0
    %1589 = vmatprep.subr.mxu0 0.0
    %1590 = vmatpush1.msra.mxu0 0.0
    %1591 = vmatprep.mubr.f32.mxu0 0.0
    %1592 = vmatmul.mubr.f32.gmra.mrb[0].mxu0 %v1525
    %v1593 = vpop.f32.mrb[0].mxu0
    %v1594 = vadd.f32 0.0, %v1593
    %v1595 = vpop.f32.mrb[0].mxu0
    %1596 = vdwg.mxu0
    %1599 = vrot.lane.b32.xlu0 %v858, 8
    %v1600 = vpop.permute.xlu0 %1599
    %1601 = vrot.lane.b32.xlu0 %v934, 8
    %v1602 = vpop.permute.xlu0 %1601
    %1607 = vrot.lane.b32.xlu0 %v1188, 16
    %v1608 = vpop.permute.xlu0 %1607
    %1609 = vrot.lane.b32.xlu0 %v1264, 16
    %v1610 = vpop.permute.xlu0 %1609
    %1615 = vrot.lane.b32.xlu0 %v1518, 24
    %v1616 = vpop.permute.xlu0 %1615
    %1617 = vrot.lane.b32.xlu0 %v1594, 24
    %v1618 = vpop.permute.xlu0 %1617
    %v1621 = vsel %vm281, %v528, %v1600
    %v1622 = vsel %vm281, %v604, %v1602
    %vm1623 = vcmask 130048
    %v1624 = vsel %vm1623, %v1621, %v1608
    %v1625 = vsel %vm1623, %v1622, %v1610
    %vm1626 = vcmask 195584
    %v1627 = vsel %vm1626, %v1624, %v1616
    %v1628 = vsel %vm1626, %v1625, %v1618
    %v1629 = vld [vmem:[#allocation10] sm:$0xff]
    %v1630 = vld [vmem:[#allocation10 + $0x8] sm:$0xff]
    %v1631 = vld [vmem:[#allocation10 + $0x10] sm:$0xff]
    %v1632 = vld [vmem:[#allocation10 + $0x18] sm:$0xff]
    %v1633 = vlaneseq
    %v1634 = vshrl.u32 %v1633, 7
    %v1635 = vsub.s32 4, %v1634
    %v1636 = vrot.slane %v148, %v1635
    %v1638 = vsel %vm149, %v1627, 0
    %v1641 = vsel %vm149, %v1628, 0
    %1643 = vmatprep.subr.mxu0 0.0
    %1644 = vmatpush1.msra.mxu0 %v1629
    %1645 = vmatprep.subr.mxu0 0.0
    %1646 = vmatpush1.msra.mxu0 %v1630
    %1647 = vmatprep.subr.mxu0 0.0
    %1648 = vmatpush1.msra.mxu0 %v1631
    %1649 = vmatprep.subr.mxu0 0.0
    %1650 = vmatpush1.msra.mxu0 %v1632
    %1651 = vmatprep.subr.mxu0 0.0
    %1652 = vmatpush1.msra.mxu0 0.0
    %1653 = vmatprep.subr.mxu0 0.0
    %1654 = vmatpush1.msra.mxu0 0.0
    %1655 = vmatprep.subr.mxu0 0.0
    %1656 = vmatpush1.msra.mxu0 0.0
    %1657 = vmatprep.subr.mxu0 0.0
    %1658 = vmatpush1.msra.mxu0 0.0
    %1659 = vmatprep.subr.mxu0 0.0
    %1660 = vmatpush1.msra.mxu0 0.0
    %1661 = vmatprep.subr.mxu0 0.0
    %1662 = vmatpush1.msra.mxu0 0.0
    %1663 = vmatprep.subr.mxu0 0.0
    %1664 = vmatpush1.msra.mxu0 0.0
    %1665 = vmatprep.subr.mxu0 0.0
    %1666 = vmatpush1.msra.mxu0 0.0
    %1667 = vmatprep.subr.mxu0 0.0
    %1668 = vmatpush1.msra.mxu0 0.0
    %1669 = vmatprep.subr.mxu0 0.0
    %1670 = vmatpush1.msra.mxu0 0.0
    %1671 = vmatprep.subr.mxu0 0.0
    %1672 = vmatpush1.msra.mxu0 0.0
    %1673 = vmatprep.subr.mxu0 0.0
    %1674 = vmatpush1.msra.mxu0 0.0
    %1675 = vmatprep.subr.mxu0 0.0
    %1676 = vmatpush1.msra.mxu0 0.0
    %1677 = vmatprep.subr.mxu0 0.0
    %1678 = vmatpush1.msra.mxu0 0.0
    %1679 = vmatprep.subr.mxu0 0.0
    %1680 = vmatpush1.msra.mxu0 0.0
    %1681 = vmatprep.subr.mxu0 0.0
    %1682 = vmatpush1.msra.mxu0 0.0
    %1683 = vmatprep.subr.mxu0 0.0
    %1684 = vmatpush1.msra.mxu0 0.0
    %1685 = vmatprep.subr.mxu0 0.0
    %1686 = vmatpush1.msra.mxu0 0.0
    %1687 = vmatprep.subr.mxu0 0.0
    %1688 = vmatpush1.msra.mxu0 0.0
    %1689 = vmatprep.subr.mxu0 0.0
    %1690 = vmatpush1.msra.mxu0 0.0
    %1691 = vmatprep.subr.mxu0 0.0
    %1692 = vmatpush1.msra.mxu0 0.0
    %1693 = vmatprep.subr.mxu0 0.0
    %1694 = vmatpush1.msra.mxu0 0.0
    %1695 = vmatprep.subr.mxu0 0.0
    %1696 = vmatpush1.msra.mxu0 0.0
    %1697 = vmatprep.subr.mxu0 0.0
    %1698 = vmatpush1.msra.mxu0 0.0
    %1699 = vmatprep.subr.mxu0 0.0
    %1700 = vmatpush1.msra.mxu0 0.0
    %1701 = vmatprep.subr.mxu0 0.0
    %1702 = vmatpush1.msra.mxu0 0.0
    %1703 = vmatprep.subr.mxu0 0.0
    %1704 = vmatpush1.msra.mxu0 0.0
    %1705 = vmatprep.subr.mxu0 0.0
    %1706 = vmatpush1.msra.mxu0 0.0
    %1707 = vmatprep.mubr.f32.mxu0 0.0
    %1708 = vmatmul.mubr.f32.gmra.mrb[0].mxu0 %v1638
    %v1709 = vpop.f32.mrb[0].mxu0
    %v1710 = vadd.f32 %v1636, %v1709
    %v1711 = vpop.f32.mrb[0].mxu0
    %1712 = vmatprep.mubr.f32.mxu0 0.0
    %1713 = vmatmul.mubr.f32.gmra.mrb[0].mxu0 %v1641
    %v1714 = vpop.f32.mrb[0].mxu0
    %v1715 = vadd.f32 %v1636, %v1714
    %v1716 = vpop.f32.mrb[0].mxu0
    %1717 = vdwg.mxu0
    %v1718 = vadd.f32 %v145, %v1710
    %v1719 = vadd.f32 %v146, %v1715
    %v1720 = vsel %vm149, %v1718, 0.0
    %1721 = vadd.xlane.f32.xlu0 %v1720
    %v1722 = vpop.xlane.xlu0 %1721
    %v1723 = vsel %vm149, %v1719, 0.0
    %1724 = vadd.xlane.f32.xlu0 %v1723
    %v1725 = vpop.xlane.xlu0 %1724
    %v1726 = vmul.f32 %v1722, %v156
    %v1727 = vmul.f32 %v1725, %v156
    %v1728 = vsub.f32 %v1718, %v1726
    %v1729 = vsub.f32 %v1719, %v1727
    %v1730 = vmul.f32 %v1728, %v1728
    %v1731 = vmul.f32 %v1729, %v1729
    %v1732 = vsel %vm149, %v1730, 0.0
    %1733 = vadd.xlane.f32.xlu0 %v1732
    %v1734 = vpop.xlane.xlu0 %1733
    %v1735 = vsel %vm149, %v1731, 0.0
    %1736 = vadd.xlane.f32.xlu0 %v1735
    %v1737 = vpop.xlane.xlu0 %1736
    %v1738 = vmul.f32 %v1734, %v156
    %v1739 = vmul.f32 %v1737, %v156
    %v1740 = vadd.f32 %v1738, 1e-05
    %v1741 = vadd.f32 %v1739, 1e-05
    %v1742 = vrsqrt.pop %v1740
    %v1743 = vrsqrt.pop %v1741
    %v1744 = vmul.f32 %v1728, %v1742
    %v1745 = vmul.f32 %v1729, %v1743
    %v1746 = vlaneseq
    %v1747 = vshrl.u32 %v1746, 7
    %v1748 = vsub.s32 2, %v1747
    %v1749 = vrot.slane %v148, %v1748
    %v1750 = vmul.f32 %v1744, %v1749
    %v1751 = vmul.f32 %v1745, %v1749
    %v1752 = vlaneseq
    %v1753 = vshrl.u32 %v1752, 7
    %v1754 = vsub.s32 3, %v1753
    %v1755 = vrot.slane %v148, %v1754
    %v1756 = vadd.f32 %v1750, %v1755
    %v1757 = vadd.f32 %v1751, %v1755
    %v1758 = vld [vmem:[#allocation12] sm:$0xff]
    %v1759 = vld [vmem:[#allocation12 + $0x8] sm:$0xff]
    %v1760 = vld [vmem:[#allocation12 + $0x10] sm:$0xff]
    %v1761 = vld [vmem:[#allocation12 + $0x18] sm:$0xff]
    %v1762 = vlaneseq
    %v1763 = vshrl.u32 %v1762, 7
    %v1764 = vsub.s32 7, %v1763
    %v1765 = vrot.slane %v148, %v1764
    %v1767 = vsel %vm149, %v1756, 0
    %v1770 = vsel %vm149, %v1757, 0
    %1772 = vmatprep.subr.mxu0 0.0
    %1773 = vmatpush1.msra.mxu0 %v1758
    %1774 = vmatprep.subr.mxu0 0.0
    %1775 = vmatpush1.msra.mxu0 %v1759
    %1776 = vmatprep.subr.mxu0 0.0
    %1777 = vmatpush1.msra.mxu0 %v1760
    %1778 = vmatprep.subr.mxu0 0.0
    %1779 = vmatpush1.msra.mxu0 %v1761
    %1780 = vmatprep.subr.mxu0 0.0
    %1781 = vmatpush1.msra.mxu0 0.0
    %1782 = vmatprep.subr.mxu0 0.0
    %1783 = vmatpush1.msra.mxu0 0.0
    %1784 = vmatprep.subr.mxu0 0.0
    %1785 = vmatpush1.msra.mxu0 0.0
    %1786 = vmatprep.subr.mxu0 0.0
    %1787 = vmatpush1.msra.mxu0 0.0
    %1788 = vmatprep.subr.mxu0 0.0
    %1789 = vmatpush1.msra.mxu0 0.0
    %1790 = vmatprep.subr.mxu0 0.0
    %1791 = vmatpush1.msra.mxu0 0.0
    %1792 = vmatprep.subr.mxu0 0.0
    %1793 = vmatpush1.msra.mxu0 0.0
    %1794 = vmatprep.subr.mxu0 0.0
    %1795 = vmatpush1.msra.mxu0 0.0
    %1796 = vmatprep.subr.mxu0 0.0
    %1797 = vmatpush1.msra.mxu0 0.0
    %1798 = vmatprep.subr.mxu0 0.0
    %1799 = vmatpush1.msra.mxu0 0.0
    %1800 = vmatprep.subr.mxu0 0.0
    %1801 = vmatpush1.msra.mxu0 0.0
    %1802 = vmatprep.subr.mxu0 0.0
    %1803 = vmatpush1.msra.mxu0 0.0
    %1804 = vmatprep.subr.mxu0 0.0
    %1805 = vmatpush1.msra.mxu0 0.0
    %1806 = vmatprep.subr.mxu0 0.0
    %1807 = vmatpush1.msra.mxu0 0.0
    %1808 = vmatprep.subr.mxu0 0.0
    %1809 = vmatpush1.msra.mxu0 0.0
    %1810 = vmatprep.subr.mxu0 0.0
    %1811 = vmatpush1.msra.mxu0 0.0
    %1812 = vmatprep.subr.mxu0 0.0
    %1813 = vmatpush1.msra.mxu0 0.0
    %1814 = vmatprep.subr.mxu0 0.0
    %1815 = vmatpush1.msra.mxu0 0.0
    %1816 = vmatprep.subr.mxu0 0.0
    %1817 = vmatpush1.msra.mxu0 0.0
    %1818 = vmatprep.subr.mxu0 0.0
    %1819 = vmatpush1.msra.mxu0 0.0
    %1820 = vmatprep.subr.mxu0 0.0
    %1821 = vmatpush1.msra.mxu0 0.0
    %1822 = vmatprep.subr.mxu0 0.0
    %1823 = vmatpush1.msra.mxu0 0.0
    %1824 = vmatprep.subr.mxu0 0.0
    %1825 = vmatpush1.msra.mxu0 0.0
    %1826 = vmatprep.subr.mxu0 0.0
    %1827 = vmatpush1.msra.mxu0 0.0
    %1828 = vmatprep.subr.mxu0 0.0
    %1829 = vmatpush1.msra.mxu0 0.0
    %1830 = vmatprep.subr.mxu0 0.0
    %1831 = vmatpush1.msra.mxu0 0.0
    %1832 = vmatprep.subr.mxu0 0.0
    %1833 = vmatpush1.msra.mxu0 0.0
    %1834 = vmatprep.subr.mxu0 0.0
    %1835 = vmatpush1.msra.mxu0 0.0
    %1836 = vmatprep.mubr.f32.mxu0 0.0
    %1837 = vmatmul.mubr.f32.gmra.mrb[0].mxu0 %v1767
    %v1838 = vpop.f32.mrb[0].mxu0
    %v1839 = vadd.f32 %v1765, %v1838
    %v1840 = vpop.f32.mrb[0].mxu0
    %1841 = vmatprep.mubr.f32.mxu0 0.0
    %1842 = vmatmul.mubr.f32.gmra.mrb[0].mxu0 %v1770
    %v1843 = vpop.f32.mrb[0].mxu0
    %v1844 = vadd.f32 %v1765, %v1843
    %v1845 = vpop.f32.mrb[0].mxu0
    %1846 = vdwg.mxu0
    %v1847 = vmul.f32 %v1839, 1.702
    %v1848 = vmul.f32 %v1844, 1.702
    %v1849 = vxor.u32 %v1847, 2147483648
    %v1850 = vxor.u32 %v1848, 2147483648
    %v1851 = vmul.f32 %v1849, 1.442695
    %v1852 = vpow.pop %v1851
    %v1853 = vmul.f32 %v1850, 1.442695
    %v1854 = vpow.pop %v1853
    %v1855 = vadd.f32 %v1852, 1.0
    %v1856 = vadd.f32 %v1854, 1.0
    %v1857 = vrcp.pop %v1855
    %v1858 = vmul.f32 1.0, %v1857
    %v1859 = vrcp.pop %v1856
    %v1860 = vmul.f32 1.0, %v1859
    %v1861 = vmul.f32 %v1839, %v1858
    %v1862 = vmul.f32 %v1844, %v1860
    %v1863 = vld [vmem:[#allocation13] sm:$0xff]
    %v1864 = vld [vmem:[#allocation13 + $0x8] sm:$0xff]
    %v1865 = vld [vmem:[#allocation13 + $0x10] sm:$0xff]
    %v1866 = vld [vmem:[#allocation13 + $0x18] sm:$0xff]
    %v1867 = vld [vmem:[#allocation13 + $0x20] sm:$0xff]
    %v1868 = vld [vmem:[#allocation13 + $0x28] sm:$0xff]
    %v1869 = vld [vmem:[#allocation13 + $0x30] sm:$0xff]
    %v1870 = vld [vmem:[#allocation13 + $0x38] sm:$0xff]
    %v1871 = vld [vmem:[#allocation13 + $0x40] sm:$0xff]
    %v1872 = vld [vmem:[#allocation13 + $0x48] sm:$0xff]
    %v1873 = vld [vmem:[#allocation13 + $0x50] sm:$0xff]
    %v1874 = vld [vmem:[#allocation13 + $0x58] sm:$0xff]
    %v1875 = vld [vmem:[#allocation13 + $0x60] sm:$0xff]
    %v1876 = vld [vmem:[#allocation13 + $0x68] sm:$0xff]
    %v1877 = vld [vmem:[#allocation13 + $0x70] sm:$0xff]
    %v1878 = vld [vmem:[#allocation13 + $0x78] sm:$0xff]
    %v1879 = vlaneseq
    %v1880 = vshrl.u32 %v1879, 7
    %v1881 = vsub.s32 5, %v1880
    %v1882 = vrot.slane %v148, %v1881
    %1883 = vmatprep.subr.mxu0 0.0
    %1884 = vmatpush1.msra.mxu0 %v1863
    %1885 = vmatprep.subr.mxu0 0.0
    %1886 = vmatpush1.msra.mxu0 %v1864
    %1887 = vmatprep.subr.mxu0 0.0
    %1888 = vmatpush1.msra.mxu0 %v1865
    %1889 = vmatprep.subr.mxu0 0.0
    %1890 = vmatpush1.msra.mxu0 %v1866
    %1891 = vmatprep.subr.mxu0 0.0
    %1892 = vmatpush1.msra.mxu0 %v1867
    %1893 = vmatprep.subr.mxu0 0.0
    %1894 = vmatpush1.msra.mxu0 %v1868
    %1895 = vmatprep.subr.mxu0 0.0
    %1896 = vmatpush1.msra.mxu0 %v1869
    %1897 = vmatprep.subr.mxu0 0.0
    %1898 = vmatpush1.msra.mxu0 %v1870
    %1899 = vmatprep.subr.mxu0 0.0
    %1900 = vmatpush1.msra.mxu0 %v1871
    %1901 = vmatprep.subr.mxu0 0.0
    %1902 = vmatpush1.msra.mxu0 %v1872
    %1903 = vmatprep.subr.mxu0 0.0
    %1904 = vmatpush1.msra.mxu0 %v1873
    %1905 = vmatprep.subr.mxu0 0.0
    %1906 = vmatpush1.msra.mxu0 %v1874
    %1907 = vmatprep.subr.mxu0 0.0
    %1908 = vmatpush1.msra.mxu0 %v1875
    %1909 = vmatprep.subr.mxu0 0.0
    %1910 = vmatpush1.msra.mxu0 %v1876
    %1911 = vmatprep.subr.mxu0 0.0
    %1912 = vmatpush1.msra.mxu0 %v1877
    %1913 = vmatprep.subr.mxu0 0.0
    %1914 = vmatpush1.msra.mxu0 %v1878
    %1915 = vmatprep.subr.mxu0 0.0
    %1916 = vmatpush1.msra.mxu0 0.0
    %1917 = vmatprep.subr.mxu0 0.0
    %1918 = vmatpush1.msra.mxu0 0.0
    %1919 = vmatprep.subr.mxu0 0.0
    %1920 = vmatpush1.msra.mxu0 0.0
    %1921 = vmatprep.subr.mxu0 0.0
    %1922 = vmatpush1.msra.mxu0 0.0
    %1923 = vmatprep.subr.mxu0 0.0
    %1924 = vmatpush1.msra.mxu0 0.0
    %1925 = vmatprep.subr.mxu0 0.0
    %1926 = vmatpush1.msra.mxu0 0.0
    %1927 = vmatprep.subr.mxu0 0.0
    %1928 = vmatpush1.msra.mxu0 0.0
    %1929 = vmatprep.subr.mxu0 0.0
    %1930 = vmatpush1.msra.mxu0 0.0
    %1931 = vmatprep.subr.mxu0 0.0
    %1932 = vmatpush1.msra.mxu0 0.0
    %1933 = vmatprep.subr.mxu0 0.0
    %1934 = vmatpush1.msra.mxu0 0.0
    %1935 = vmatprep.subr.mxu0 0.0
    %1936 = vmatpush1.msra.mxu0 0.0
    %1937 = vmatprep.subr.mxu0 0.0
    %1938 = vmatpush1.msra.mxu0 0.0
    %1939 = vmatprep.subr.mxu0 0.0
    %1940 = vmatpush1.msra.mxu0 0.0
    %1941 = vmatprep.subr.mxu0 0.0
    %1942 = vmatpush1.msra.mxu0 0.0
    %1943 = vmatprep.subr.mxu0 0.0
    %1944 = vmatpush1.msra.mxu0 0.0
    %1945 = vmatprep.subr.mxu0 0.0
    %1946 = vmatpush1.msra.mxu0 0.0
    %1947 = vmatprep.mubr.f32.mxu0 0.0
    %1948 = vmatmul.mubr.f32.gmra.mrb[0].mxu0 %v1861
    %v1949 = vpop.f32.mrb[0].mxu0
    %v1950 = vadd.f32 %v1882, %v1949
    %v1951 = vpop.f32.mrb[0].mxu0
    %1952 = vmatprep.mubr.f32.mxu0 0.0
    %1953 = vmatmul.mubr.f32.gmra.mrb[0].mxu0 %v1862
    %v1954 = vpop.f32.mrb[0].mxu0
    %v1955 = vadd.f32 %v1882, %v1954
    %v1956 = vpop.f32.mrb[0].mxu0
    %1957 = vdwg.mxu0
    %v1958 = vadd.f32 %v1718, %v1950
    %v1959 = vadd.f32 %v1719, %v1955
    %s1960 = scalar_lea.vmem [#allocation15], 8
    %v1961 = vld [vmem:[%s1960] sm:$0xff]
    %v1962 = vsel %vm149, %v1958, 0.0
    %1963 = vadd.xlane.f32.xlu0 %v1962
    %v1964 = vpop.xlane.xlu0 %1963
    %v1965 = vsel %vm149, %v1959, 0.0
    %1966 = vadd.xlane.f32.xlu0 %v1965
    %v1967 = vpop.xlane.xlu0 %1966
    %v1968 = vmul.f32 %v1964, %v156
    %v1969 = vmul.f32 %v1967, %v156
    %v1970 = vsub.f32 %v1958, %v1968
    %v1971 = vsub.f32 %v1959, %v1969
    %v1972 = vmul.f32 %v1970, %v1970
    %v1973 = vmul.f32 %v1971, %v1971
    %v1974 = vsel %vm149, %v1972, 0.0
    %1975 = vadd.xlane.f32.xlu0 %v1974
    %v1976 = vpop.xlane.xlu0 %1975
    %v1977 = vsel %vm149, %v1973, 0.0
    %1978 = vadd.xlane.f32.xlu0 %v1977
    %v1979 = vpop.xlane.xlu0 %1978
    %v1980 = vmul.f32 %v1976, %v156
    %v1981 = vmul.f32 %v1979, %v156
    %v1982 = vadd.f32 %v1980, 1e-05
    %v1983 = vadd.f32 %v1981, 1e-05
    %v1984 = vrsqrt.pop %v1982
    %v1985 = vrsqrt.pop %v1983
    %v1986 = vmul.f32 %v1970, %v1984
    %v1987 = vmul.f32 %v1971, %v1985
    %v1988 = vlaneseq
    %v1989 = vshrl.u32 %v1988, 7
    %v1990 = vsub.s32 0, %v1989
    %v1991 = vrot.slane %v1961, %v1990
    %v1992 = vmul.f32 %v1986, %v1991
    %v1993 = vmul.f32 %v1987, %v1991
    %v1994 = vlaneseq
    %v1995 = vshrl.u32 %v1994, 7
    %v1996 = vsub.s32 1, %v1995
    %v1997 = vrot.slane %v1961, %v1996
    %v1998 = vadd.f32 %v1992, %v1997
    %v1999 = vadd.f32 %v1993, %v1997
    %s2000 = scalar_lea.vmem [#allocation9], 32
    %v2001 = vld [vmem:[%s2000] sm:$0xff]
    %v2002 = vld [vmem:[%s2000 + $0x8] sm:$0xff]
    %v2003 = vld [vmem:[%s2000 + $0x10] sm:$0xff]
    %v2004 = vld [vmem:[%s2000 + $0x18] sm:$0xff]
    %v2005 = vlaneseq
    %v2006 = vshrl.u32 %v2005, 7
    %v2007 = vsub.s32 6, %v2006
    %v2008 = vrot.slane %v1961, %v2007
    %v2010 = vsel %vm149, %v1998, 0
    %v2013 = vsel %vm149, %v1999, 0
    %2015 = vmatprep.subr.mxu0 0.0
    %2016 = vmatpush1.msra.mxu0 %v2001
    %2017 = vmatprep.subr.mxu0 0.0
    %2018 = vmatpush1.msra.mxu0 %v2002
    %2019 = vmatprep.subr.mxu0 0.0
    %2020 = vmatpush1.msra.mxu0 %v2003
    %2021 = vmatprep.subr.mxu0 0.0
    %2022 = vmatpush1.msra.mxu0 %v2004
    %2023 = vmatprep.subr.mxu0 0.0
    %2024 = vmatpush1.msra.mxu0 0.0
    %2025 = vmatprep.subr.mxu0 0.0
    %2026 = vmatpush1.msra.mxu0 0.0
    %2027 = vmatprep.subr.mxu0 0.0
    %2028 = vmatpush1.msra.mxu0 0.0
    %2029 = vmatprep.subr.mxu0 0.0
    %2030 = vmatpush1.msra.mxu0 0.0
    %2031 = vmatprep.subr.mxu0 0.0
    %2032 = vmatpush1.msra.mxu0 0.0
    %2033 = vmatprep.subr.mxu0 0.0
    %2034 = vmatpush1.msra.mxu0 0.0
    %2035 = vmatprep.subr.mxu0 0.0
    %2036 = vmatpush1.msra.mxu0 0.0
    %2037 = vmatprep.subr.mxu0 0.0
    %2038 = vmatpush1.msra.mxu0 0.0
    %2039 = vmatprep.subr.mxu0 0.0
    %2040 = vmatpush1.msra.mxu0 0.0
    %2041 = vmatprep.subr.mxu0 0.0
    %2042 = vmatpush1.msra.mxu0 0.0
    %2043 = vmatprep.subr.mxu0 0.0
    %2044 = vmatpush1.msra.mxu0 0.0
    %2045 = vmatprep.subr.mxu0 0.0
    %2046 = vmatpush1.msra.mxu0 0.0
    %2047 = vmatprep.subr.mxu0 0.0
    %2048 = vmatpush1.msra.mxu0 0.0
    %2049 = vmatprep.subr.mxu0 0.0
    %2050 = vmatpush1.msra.mxu0 0.0
    %2051 = vmatprep.subr.mxu0 0.0
    %2052 = vmatpush1.msra.mxu0 0.0
    %2053 = vmatprep.subr.mxu0 0.0
    %2054 = vmatpush1.msra.mxu0 0.0
    %2055 = vmatprep.subr.mxu0 0.0
    %2056 = vmatpush1.msra.mxu0 0.0
    %2057 = vmatprep.subr.mxu0 0.0
    %2058 = vmatpush1.msra.mxu0 0.0
    %2059 = vmatprep.subr.mxu0 0.0
    %2060 = vmatpush1.msra.mxu0 0.0
    %2061 = vmatprep.subr.mxu0 0.0
    %2062 = vmatpush1.msra.mxu0 0.0
    %2063 = vmatprep.subr.mxu0 0.0
    %2064 = vmatpush1.msra.mxu0 0.0
    %2065 = vmatprep.subr.mxu0 0.0
    %2066 = vmatpush1.msra.mxu0 0.0
    %2067 = vmatprep.subr.mxu0 0.0
    %2068 = vmatpush1.msra.mxu0 0.0
    %2069 = vmatprep.subr.mxu0 0.0
    %2070 = vmatpush1.msra.mxu0 0.0
    %2071 = vmatprep.subr.mxu0 0.0
    %2072 = vmatpush1.msra.mxu0 0.0
    %2073 = vmatprep.subr.mxu0 0.0
    %2074 = vmatpush1.msra.mxu0 0.0
    %2075 = vmatprep.subr.mxu0 0.0
    %2076 = vmatpush1.msra.mxu0 0.0
    %2077 = vmatprep.subr.mxu0 0.0
    %2078 = vmatpush1.msra.mxu0 0.0
    %2079 = vmatprep.mubr.f32.mxu0 0.0
    %2080 = vmatmul.mubr.f32.gmra.mrb[0].mxu0 %v2010
    %v2081 = vpop.f32.mrb[0].mxu0
    %v2082 = vadd.f32 %v2008, %v2081
    %v2083 = vpop.f32.mrb[0].mxu0
    %2084 = vmatprep.mubr.f32.mxu0 0.0
    %2085 = vmatmul.mubr.f32.gmra.mrb[0].mxu0 %v2013
    %v2086 = vpop.f32.mrb[0].mxu0
    %v2087 = vadd.f32 %v2008, %v2086
    %v2088 = vpop.f32.mrb[0].mxu0
    %2089 = vdwg.mxu0
    %2091 = vrot.lane.b32.xlu0 %v2082, 96
    %v2092 = vpop.permute.xlu0 %2091
    %v2093 = vsel %vm281, %v2082, 0
    %v2095 = vsel %vm281, %v2092, 0
    %2097 = vmatprep.subr.mxu0 0.0
    %2098 = vmatpush1.xpose.msra.mxu0 %v2095
    %2099 = vmatprep.subr.mxu0 0.0
    %2100 = vmatpush1.xpose.msra.mxu0 0.0
    %2101 = vmatprep.subr.mxu0 0.0
    %2102 = vmatpush1.xpose.msra.mxu0 0.0
    %2103 = vmatprep.subr.mxu0 0.0
    %2104 = vmatpush1.xpose.msra.mxu0 0.0
    %2105 = vmatprep.subr.mxu0 0.0
    %2106 = vmatpush1.xpose.msra.mxu0 0.0
    %2107 = vmatprep.subr.mxu0 0.0
    %2108 = vmatpush1.xpose.msra.mxu0 0.0
    %2109 = vmatprep.subr.mxu0 0.0
    %2110 = vmatpush1.xpose.msra.mxu0 0.0
    %2111 = vmatprep.subr.mxu0 0.0
    %2112 = vmatpush1.xpose.msra.mxu0 0.0
    %2113 = vmatprep.subr.mxu0 0.0
    %2114 = vmatpush1.xpose.msra.mxu0 0.0
    %2115 = vmatprep.subr.mxu0 0.0
    %2116 = vmatpush1.xpose.msra.mxu0 0.0
    %2117 = vmatprep.subr.mxu0 0.0
    %2118 = vmatpush1.xpose.msra.mxu0 0.0
    %2119 = vmatprep.subr.mxu0 0.0
    %2120 = vmatpush1.xpose.msra.mxu0 0.0
    %2121 = vmatprep.subr.mxu0 0.0
    %2122 = vmatpush1.xpose.msra.mxu0 0.0
    %2123 = vmatprep.subr.mxu0 0.0
    %2124 = vmatpush1.xpose.msra.mxu0 0.0
    %2125 = vmatprep.subr.mxu0 0.0
    %2126 = vmatpush1.xpose.msra.mxu0 0.0
    %2127 = vmatprep.subr.mxu0 0.0
    %2128 = vmatpush1.xpose.msra.mxu0 0.0
    %2129 = vmatprep.subr.mxu0 0.0
    %2130 = vmatpush1.xpose.msra.mxu0 0.0
    %2131 = vmatprep.subr.mxu0 0.0
    %2132 = vmatpush1.xpose.msra.mxu0 0.0
    %2133 = vmatprep.subr.mxu0 0.0
    %2134 = vmatpush1.xpose.msra.mxu0 0.0
    %2135 = vmatprep.subr.mxu0 0.0
    %2136 = vmatpush1.xpose.msra.mxu0 0.0
    %2137 = vmatprep.subr.mxu0 0.0
    %2138 = vmatpush1.xpose.msra.mxu0 0.0
    %2139 = vmatprep.subr.mxu0 0.0
    %2140 = vmatpush1.xpose.msra.mxu0 0.0
    %2141 = vmatprep.subr.mxu0 0.0
    %2142 = vmatpush1.xpose.msra.mxu0 0.0
    %2143 = vmatprep.subr.mxu0 0.0
    %2144 = vmatpush1.xpose.msra.mxu0 0.0
    %2145 = vmatprep.subr.mxu0 0.0
    %2146 = vmatpush1.xpose.msra.mxu0 0.0
    %2147 = vmatprep.subr.mxu0 0.0
    %2148 = vmatpush1.xpose.msra.mxu0 0.0
    %2149 = vmatprep.subr.mxu0 0.0
    %2150 = vmatpush1.xpose.msra.mxu0 0.0
    %2151 = vmatprep.subr.mxu0 0.0
    %2152 = vmatpush1.xpose.msra.mxu0 0.0
    %2153 = vmatprep.subr.mxu0 0.0
    %2154 = vmatpush1.xpose.msra.mxu0 0.0
    %2155 = vmatprep.subr.mxu0 0.0
    %2156 = vmatpush1.xpose.msra.mxu0 0.0
    %2157 = vmatprep.subr.mxu0 0.0
    %2158 = vmatpush1.xpose.msra.mxu0 0.0
    %2159 = vmatprep.subr.mxu0 0.0
    %2160 = vmatpush1.xpose.msra.mxu0 0.0
    %2161 = vmatprep.mubr.f32.mxu0 0.0
    %2162 = vmatmul.mubr.f32.gmra.mrb[0].mxu0 %v2093
    %v2163 = vpop.f32.mrb[0].mxu0
    %v2164 = vadd.f32 %v147, %v2163
    %v2165 = vpop.f32.mrb[0].mxu0
    %2166 = vdwg.mxu0
    %2168 = vrot.lane.b32.xlu0 %v2087, 96
    %v2169 = vpop.permute.xlu0 %2168
    %v2170 = vsel %vm281, %v2087, 0
    %v2172 = vsel %vm281, %v2169, 0
    %2174 = vmatprep.subr.mxu0 0.0
    %2175 = vmatpush1.xpose.msra.mxu0 %v2172
    %2176 = vmatprep.subr.mxu0 0.0
    %2177 = vmatpush1.xpose.msra.mxu0 0.0
    %2178 = vmatprep.subr.mxu0 0.0
    %2179 = vmatpush1.xpose.msra.mxu0 0.0
    %2180 = vmatprep.subr.mxu0 0.0
    %2181 = vmatpush1.xpose.msra.mxu0 0.0
    %2182 = vmatprep.subr.mxu0 0.0
    %2183 = vmatpush1.xpose.msra.mxu0 0.0
    %2184 = vmatprep.subr.mxu0 0.0
    %2185 = vmatpush1.xpose.msra.mxu0 0.0
    %2186 = vmatprep.subr.mxu0 0.0
    %2187 = vmatpush1.xpose.msra.mxu0 0.0
    %2188 = vmatprep.subr.mxu0 0.0
    %2189 = vmatpush1.xpose.msra.mxu0 0.0
    %2190 = vmatprep.subr.mxu0 0.0
    %2191 = vmatpush1.xpose.msra.mxu0 0.0
    %2192 = vmatprep.subr.mxu0 0.0
    %2193 = vmatpush1.xpose.msra.mxu0 0.0
    %2194 = vmatprep.subr.mxu0 0.0
    %2195 = vmatpush1.xpose.msra.mxu0 0.0
    %2196 = vmatprep.subr.mxu0 0.0
    %2197 = vmatpush1.xpose.msra.mxu0 0.0
    %2198 = vmatprep.subr.mxu0 0.0
    %2199 = vmatpush1.xpose.msra.mxu0 0.0
    %2200 = vmatprep.subr.mxu0 0.0
    %2201 = vmatpush1.xpose.msra.mxu0 0.0
    %2202 = vmatprep.subr.mxu0 0.0
    %2203 = vmatpush1.xpose.msra.mxu0 0.0
    %2204 = vmatprep.subr.mxu0 0.0
    %2205 = vmatpush1.xpose.msra.mxu0 0.0
    %2206 = vmatprep.subr.mxu0 0.0
    %2207 = vmatpush1.xpose.msra.mxu0 0.0
    %2208 = vmatprep.subr.mxu0 0.0
    %2209 = vmatpush1.xpose.msra.mxu0 0.0
    %2210 = vmatprep.subr.mxu0 0.0
    %2211 = vmatpush1.xpose.msra.mxu0 0.0
    %2212 = vmatprep.subr.mxu0 0.0
    %2213 = vmatpush1.xpose.msra.mxu0 0.0
    %2214 = vmatprep.subr.mxu0 0.0
    %2215 = vmatpush1.xpose.msra.mxu0 0.0
    %2216 = vmatprep.subr.mxu0 0.0
    %2217 = vmatpush1.xpose.msra.mxu0 0.0
    %2218 = vmatprep.subr.mxu0 0.0
    %2219 = vmatpush1.xpose.msra.mxu0 0.0
    %2220 = vmatprep.subr.mxu0 0.0
    %2221 = vmatpush1.xpose.msra.mxu0 0.0
    %2222 = vmatprep.subr.mxu0 0.0
    %2223 = vmatpush1.xpose.msra.mxu0 0.0
    %2224 = vmatprep.subr.mxu0 0.0
    %2225 = vmatpush1.xpose.msra.mxu0 0.0
    %2226 = vmatprep.subr.mxu0 0.0
    %2227 = vmatpush1.xpose.msra.mxu0 0.0
    %2228 = vmatprep.subr.mxu0 0.0
    %2229 = vmatpush1.xpose.msra.mxu0 0.0
    %2230 = vmatprep.subr.mxu0 0.0
    %2231 = vmatpush1.xpose.msra.mxu0 0.0
    %2232 = vmatprep.subr.mxu0 0.0
    %2233 = vmatpush1.xpose.msra.mxu0 0.0
    %2234 = vmatprep.subr.mxu0 0.0
    %2235 = vmatpush1.xpose.msra.mxu0 0.0
    %2236 = vmatprep.subr.mxu0 0.0
    %2237 = vmatpush1.xpose.msra.mxu0 0.0
    %2238 = vmatprep.mubr.f32.mxu0 0.0
    %2239 = vmatmul.mubr.f32.gmra.mrb[0].mxu0 %v2170
    %v2240 = vpop.f32.mrb[0].mxu0
    %v2241 = vadd.f32 %v147, %v2240
    %v2242 = vpop.f32.mrb[0].mxu0
    %2243 = vdwg.mxu0
    %v2244 = vsel %vm281, %v2164, -inf
    %2245 = vmax.xlane.f32.xlu0 %v2244
    %v2246 = vpop.xlane.xlu0 %2245
    %v2247 = vsel %vm281, %v2241, -inf
    %2248 = vmax.xlane.f32.xlu0 %v2247
    %v2249 = vpop.xlane.xlu0 %2248
    %v2250 = vsub.f32 %v2164, %v2246
    %v2251 = vsub.f32 %v2241, %v2249
    %v2252 = vmul.f32 %v2250, 1.442695
    %v2253 = vpow.pop %v2252
    %v2254 = vmul.f32 %v2251, 1.442695
    %v2255 = vpow.pop %v2254
    %v2256 = vsel %vm281, %v2253, 0.0
    %2257 = vadd.xlane.f32.xlu0 %v2256
    %v2258 = vpop.xlane.xlu0 %2257
    %v2259 = vsel %vm281, %v2255, 0.0
    %2260 = vadd.xlane.f32.xlu0 %v2259
    %v2261 = vpop.xlane.xlu0 %2260
    %v2262 = vrcp.pop %v2258
    %v2263 = vmul.f32 %v2253, %v2262
    %v2264 = vrcp.pop %v2261
    %v2265 = vmul.f32 %v2255, %v2264
    %2266 = vrot.lane.b32.xlu0 %v2082, 64
    %v2267 = vpop.permute.xlu0 %2266
    %v2270 = vsel %vm281, %v2263, 0
    %2272 = vmatprep.subr.mxu0 0.0
    %2273 = vmatpush1.msra.mxu0 %v2267
    %2274 = vmatprep.subr.mxu0 0.0
    %2275 = vmatpush1.msra.mxu0 0.0
    %2276 = vmatprep.subr.mxu0 0.0
    %2277 = vmatpush1.msra.mxu0 0.0
    %2278 = vmatprep.subr.mxu0 0.0
    %2279 = vmatpush1.msra.mxu0 0.0
    %2280 = vmatprep.subr.mxu0 0.0
    %2281 = vmatpush1.msra.mxu0 0.0
    %2282 = vmatprep.subr.mxu0 0.0
    %2283 = vmatpush1.msra.mxu0 0.0
    %2284 = vmatprep.subr.mxu0 0.0
    %2285 = vmatpush1.msra.mxu0 0.0
    %2286 = vmatprep.subr.mxu0 0.0
    %2287 = vmatpush1.msra.mxu0 0.0
    %2288 = vmatprep.subr.mxu0 0.0
    %2289 = vmatpush1.msra.mxu0 0.0
    %2290 = vmatprep.subr.mxu0 0.0
    %2291 = vmatpush1.msra.mxu0 0.0
    %2292 = vmatprep.subr.mxu0 0.0
    %2293 = vmatpush1.msra.mxu0 0.0
    %2294 = vmatprep.subr.mxu0 0.0
    %2295 = vmatpush1.msra.mxu0 0.0
    %2296 = vmatprep.subr.mxu0 0.0
    %2297 = vmatpush1.msra.mxu0 0.0
    %2298 = vmatprep.subr.mxu0 0.0
    %2299 = vmatpush1.msra.mxu0 0.0
    %2300 = vmatprep.subr.mxu0 0.0
    %2301 = vmatpush1.msra.mxu0 0.0
    %2302 = vmatprep.subr.mxu0 0.0
    %2303 = vmatpush1.msra.mxu0 0.0
    %2304 = vmatprep.subr.mxu0 0.0
    %2305 = vmatpush1.msra.mxu0 0.0
    %2306 = vmatprep.subr.mxu0 0.0
    %2307 = vmatpush1.msra.mxu0 0.0
    %2308 = vmatprep.subr.mxu0 0.0
    %2309 = vmatpush1.msra.mxu0 0.0
    %2310 = vmatprep.subr.mxu0 0.0
    %2311 = vmatpush1.msra.mxu0 0.0
    %2312 = vmatprep.subr.mxu0 0.0
    %2313 = vmatpush1.msra.mxu0 0.0
    %2314 = vmatprep.subr.mxu0 0.0
    %2315 = vmatpush1.msra.mxu0 0.0
    %2316 = vmatprep.subr.mxu0 0.0
    %2317 = vmatpush1.msra.mxu0 0.0
    %2318 = vmatprep.subr.mxu0 0.0
    %2319 = vmatpush1.msra.mxu0 0.0
    %2320 = vmatprep.subr.mxu0 0.0
    %2321 = vmatpush1.msra.mxu0 0.0
    %2322 = vmatprep.subr.mxu0 0.0
    %2323 = vmatpush1.msra.mxu0 0.0
    %2324 = vmatprep.subr.mxu0 0.0
    %2325 = vmatpush1.msra.mxu0 0.0
    %2326 = vmatprep.subr.mxu0 0.0
    %2327 = vmatpush1.msra.mxu0 0.0
    %2328 = vmatprep.subr.mxu0 0.0
    %2329 = vmatpush1.msra.mxu0 0.0
    %2330 = vmatprep.subr.mxu0 0.0
    %2331 = vmatpush1.msra.mxu0 0.0
    %2332 = vmatprep.subr.mxu0 0.0
    %2333 = vmatpush1.msra.mxu0 0.0
    %2334 = vmatprep.subr.mxu0 0.0
    %2335 = vmatpush1.msra.mxu0 0.0
    %2336 = vmatprep.mubr.f32.mxu0 0.0
    %2337 = vmatmul.mubr.f32.gmra.mrb[0].mxu0 %v2270
    %v2338 = vpop.f32.mrb[0].mxu0
    %v2339 = vadd.f32 0.0, %v2338
    %v2340 = vpop.f32.mrb[0].mxu0
    %2341 = vdwg.mxu0
    %2342 = vrot.lane.b32.xlu0 %v2087, 64
    %v2343 = vpop.permute.xlu0 %2342
    %v2346 = vsel %vm281, %v2265, 0
    %2348 = vmatprep.subr.mxu0 0.0
    %2349 = vmatpush1.msra.mxu0 %v2343
    %2350 = vmatprep.subr.mxu0 0.0
    %2351 = vmatpush1.msra.mxu0 0.0
    %2352 = vmatprep.subr.mxu0 0.0
    %2353 = vmatpush1.msra.mxu0 0.0
    %2354 = vmatprep.subr.mxu0 0.0
    %2355 = vmatpush1.msra.mxu0 0.0
    %2356 = vmatprep.subr.mxu0 0.0
    %2357 = vmatpush1.msra.mxu0 0.0
    %2358 = vmatprep.subr.mxu0 0.0
    %2359 = vmatpush1.msra.mxu0 0.0
    %2360 = vmatprep.subr.mxu0 0.0
    %2361 = vmatpush1.msra.mxu0 0.0
    %2362 = vmatprep.subr.mxu0 0.0
    %2363 = vmatpush1.msra.mxu0 0.0
    %2364 = vmatprep.subr.mxu0 0.0
    %2365 = vmatpush1.msra.mxu0 0.0
    %2366 = vmatprep.subr.mxu0 0.0
    %2367 = vmatpush1.msra.mxu0 0.0
    %2368 = vmatprep.subr.mxu0 0.0
    %2369 = vmatpush1.msra.mxu0 0.0
    %2370 = vmatprep.subr.mxu0 0.0
    %2371 = vmatpush1.msra.mxu0 0.0
    %2372 = vmatprep.subr.mxu0 0.0
    %2373 = vmatpush1.msra.mxu0 0.0
    %2374 = vmatprep.subr.mxu0 0.0
    %2375 = vmatpush1.msra.mxu0 0.0
    %2376 = vmatprep.subr.mxu0 0.0
    %2377 = vmatpush1.msra.mxu0 0.0
    %2378 = vmatprep.subr.mxu0 0.0
    %2379 = vmatpush1.msra.mxu0 0.0
    %2380 = vmatprep.subr.mxu0 0.0
    %2381 = vmatpush1.msra.mxu0 0.0
    %2382 = vmatprep.subr.mxu0 0.0
    %2383 = vmatpush1.msra.mxu0 0.0
    %2384 = vmatprep.subr.mxu0 0.0
    %2385 = vmatpush1.msra.mxu0 0.0
    %2386 = vmatprep.subr.mxu0 0.0
    %2387 = vmatpush1.msra.mxu0 0.0
    %2388 = vmatprep.subr.mxu0 0.0
    %2389 = vmatpush1.msra.mxu0 0.0
    %2390 = vmatprep.subr.mxu0 0.0
    %2391 = vmatpush1.msra.mxu0 0.0
    %2392 = vmatprep.subr.mxu0 0.0
    %2393 = vmatpush1.msra.mxu0 0.0
    %2394 = vmatprep.subr.mxu0 0.0
    %2395 = vmatpush1.msra.mxu0 0.0
    %2396 = vmatprep.subr.mxu0 0.0
    %2397 = vmatpush1.msra.mxu0 0.0
    %2398 = vmatprep.subr.mxu0 0.0
    %2399 = vmatpush1.msra.mxu0 0.0
    %2400 = vmatprep.subr.mxu0 0.0
    %2401 = vmatpush1.msra.mxu0 0.0
    %2402 = vmatprep.subr.mxu0 0.0
    %2403 = vmatpush1.msra.mxu0 0.0
    %2404 = vmatprep.subr.mxu0 0.0
    %2405 = vmatpush1.msra.mxu0 0.0
    %2406 = vmatprep.subr.mxu0 0.0
    %2407 = vmatpush1.msra.mxu0 0.0
    %2408 = vmatprep.subr.mxu0 0.0
    %2409 = vmatpush1.msra.mxu0 0.0
    %2410 = vmatprep.subr.mxu0 0.0
    %2411 = vmatpush1.msra.mxu0 0.0
    %2412 = vmatprep.mubr.f32.mxu0 0.0
    %2413 = vmatmul.mubr.f32.gmra.mrb[0].mxu0 %v2346
    %v2414 = vpop.f32.mrb[0].mxu0
    %v2415 = vadd.f32 0.0, %v2414
    %v2416 = vpop.f32.mrb[0].mxu0
    %2417 = vdwg.mxu0
    %2418 = vrot.lane.b32.xlu0 %v2082, 120
    %v2419 = vpop.permute.xlu0 %2418
    %2420 = vrot.lane.b32.xlu0 %v2082, 88
    %v2421 = vpop.permute.xlu0 %2420
    %v2422 = vsel %vm281, %v2419, 0
    %v2424 = vsel %vm281, %v2421, 0
    %2426 = vmatprep.subr.mxu0 0.0
    %2427 = vmatpush1.xpose.msra.mxu0 %v2424
    %2428 = vmatprep.subr.mxu0 0.0
    %2429 = vmatpush1.xpose.msra.mxu0 0.0
    %2430 = vmatprep.subr.mxu0 0.0
    %2431 = vmatpush1.xpose.msra.mxu0 0.0
    %2432 = vmatprep.subr.mxu0 0.0
    %2433 = vmatpush1.xpose.msra.mxu0 0.0
    %2434 = vmatprep.subr.mxu0 0.0
    %2435 = vmatpush1.xpose.msra.mxu0 0.0
    %2436 = vmatprep.subr.mxu0 0.0
    %2437 = vmatpush1.xpose.msra.mxu0 0.0
    %2438 = vmatprep.subr.mxu0 0.0
    %2439 = vmatpush1.xpose.msra.mxu0 0.0
    %2440 = vmatprep.subr.mxu0 0.0
    %2441 = vmatpush1.xpose.msra.mxu0 0.0
    %2442 = vmatprep.subr.mxu0 0.0
    %2443 = vmatpush1.xpose.msra.mxu0 0.0
    %2444 = vmatprep.subr.mxu0 0.0
    %2445 = vmatpush1.xpose.msra.mxu0 0.0
    %2446 = vmatprep.subr.mxu0 0.0
    %2447 = vmatpush1.xpose.msra.mxu0 0.0
    %2448 = vmatprep.subr.mxu0 0.0
    %2449 = vmatpush1.xpose.msra.mxu0 0.0
    %2450 = vmatprep.subr.mxu0 0.0
    %2451 = vmatpush1.xpose.msra.mxu0 0.0
    %2452 = vmatprep.subr.mxu0 0.0
    %2453 = vmatpush1.xpose.msra.mxu0 0.0
    %2454 = vmatprep.subr.mxu0 0.0
    %2455 = vmatpush1.xpose.msra.mxu0 0.0
    %2456 = vmatprep.subr.mxu0 0.0
    %2457 = vmatpush1.xpose.msra.mxu0 0.0
    %2458 = vmatprep.subr.mxu0 0.0
    %2459 = vmatpush1.xpose.msra.mxu0 0.0
    %2460 = vmatprep.subr.mxu0 0.0
    %2461 = vmatpush1.xpose.msra.mxu0 0.0
    %2462 = vmatprep.subr.mxu0 0.0
    %2463 = vmatpush1.xpose.msra.mxu0 0.0
    %2464 = vmatprep.subr.mxu0 0.0
    %2465 = vmatpush1.xpose.msra.mxu0 0.0
    %2466 = vmatprep.subr.mxu0 0.0
    %2467 = vmatpush1.xpose.msra.mxu0 0.0
    %2468 = vmatprep.subr.mxu0 0.0
    %2469 = vmatpush1.xpose.msra.mxu0 0.0
    %2470 = vmatprep.subr.mxu0 0.0
    %2471 = vmatpush1.xpose.msra.mxu0 0.0
    %2472 = vmatprep.subr.mxu0 0.0
    %2473 = vmatpush1.xpose.msra.mxu0 0.0
    %2474 = vmatprep.subr.mxu0 0.0
    %2475 = vmatpush1.xpose.msra.mxu0 0.0
    %2476 = vmatprep.subr.mxu0 0.0
    %2477 = vmatpush1.xpose.msra.mxu0 0.0
    %2478 = vmatprep.subr.mxu0 0.0
    %2479 = vmatpush1.xpose.msra.mxu0 0.0
    %2480 = vmatprep.subr.mxu0 0.0
    %2481 = vmatpush1.xpose.msra.mxu0 0.0
    %2482 = vmatprep.subr.mxu0 0.0
    %2483 = vmatpush1.xpose.msra.mxu0 0.0
    %2484 = vmatprep.subr.mxu0 0.0
    %2485 = vmatpush1.xpose.msra.mxu0 0.0
    %2486 = vmatprep.subr.mxu0 0.0
    %2487 = vmatpush1.xpose.msra.mxu0 0.0
    %2488 = vmatprep.subr.mxu0 0.0
    %2489 = vmatpush1.xpose.msra.mxu0 0.0
    %2490 = vmatprep.mubr.f32.mxu0 0.0
    %2491 = vmatmul.mubr.f32.gmra.mrb[0].mxu0 %v2422
    %v2492 = vpop.f32.mrb[0].mxu0
    %v2493 = vadd.f32 %v147, %v2492
    %v2494 = vpop.f32.mrb[0].mxu0
    %2495 = vdwg.mxu0
    %2496 = vrot.lane.b32.xlu0 %v2087, 120
    %v2497 = vpop.permute.xlu0 %2496
    %2498 = vrot.lane.b32.xlu0 %v2087, 88
    %v2499 = vpop.permute.xlu0 %2498
    %v2500 = vsel %vm281, %v2497, 0
    %v2502 = vsel %vm281, %v2499, 0
    %2504 = vmatprep.subr.mxu0 0.0
    %2505 = vmatpush1.xpose.msra.mxu0 %v2502
    %2506 = vmatprep.subr.mxu0 0.0
    %2507 = vmatpush1.xpose.msra.mxu0 0.0
    %2508 = vmatprep.subr.mxu0 0.0
    %2509 = vmatpush1.xpose.msra.mxu0 0.0
    %2510 = vmatprep.subr.mxu0 0.0
    %2511 = vmatpush1.xpose.msra.mxu0 0.0
    %2512 = vmatprep.subr.mxu0 0.0
    %2513 = vmatpush1.xpose.msra.mxu0 0.0
    %2514 = vmatprep.subr.mxu0 0.0
    %2515 = vmatpush1.xpose.msra.mxu0 0.0
    %2516 = vmatprep.subr.mxu0 0.0
    %2517 = vmatpush1.xpose.msra.mxu0 0.0
    %2518 = vmatprep.subr.mxu0 0.0
    %2519 = vmatpush1.xpose.msra.mxu0 0.0
    %2520 = vmatprep.subr.mxu0 0.0
    %2521 = vmatpush1.xpose.msra.mxu0 0.0
    %2522 = vmatprep.subr.mxu0 0.0
    %2523 = vmatpush1.xpose.msra.mxu0 0.0
    %2524 = vmatprep.subr.mxu0 0.0
    %2525 = vmatpush1.xpose.msra.mxu0 0.0
    %2526 = vmatprep.subr.mxu0 0.0
    %2527 = vmatpush1.xpose.msra.mxu0 0.0
    %2528 = vmatprep.subr.mxu0 0.0
    %2529 = vmatpush1.xpose.msra.mxu0 0.0
    %2530 = vmatprep.subr.mxu0 0.0
    %2531 = vmatpush1.xpose.msra.mxu0 0.0
    %2532 = vmatprep.subr.mxu0 0.0
    %2533 = vmatpush1.xpose.msra.mxu0 0.0
    %2534 = vmatprep.subr.mxu0 0.0
    %2535 = vmatpush1.xpose.msra.mxu0 0.0
    %2536 = vmatprep.subr.mxu0 0.0
    %2537 = vmatpush1.xpose.msra.mxu0 0.0
    %2538 = vmatprep.subr.mxu0 0.0
    %2539 = vmatpush1.xpose.msra.mxu0 0.0
    %2540 = vmatprep.subr.mxu0 0.0
    %2541 = vmatpush1.xpose.msra.mxu0 0.0
    %2542 = vmatprep.subr.mxu0 0.0
    %2543 = vmatpush1.xpose.msra.mxu0 0.0
    %2544 = vmatprep.subr.mxu0 0.0
    %2545 = vmatpush1.xpose.msra.mxu0 0.0
    %2546 = vmatprep.subr.mxu0 0.0
    %2547 = vmatpush1.xpose.msra.mxu0 0.0
    %2548 = vmatprep.subr.mxu0 0.0
    %2549 = vmatpush1.xpose.msra.mxu0 0.0
    %2550 = vmatprep.subr.mxu0 0.0
    %2551 = vmatpush1.xpose.msra.mxu0 0.0
    %2552 = vmatprep.subr.mxu0 0.0
    %2553 = vmatpush1.xpose.msra.mxu0 0.0
    %2554 = vmatprep.subr.mxu0 0.0
    %2555 = vmatpush1.xpose.msra.mxu0 0.0
    %2556 = vmatprep.subr.mxu0 0.0
    %2557 = vmatpush1.xpose.msra.mxu0 0.0
    %2558 = vmatprep.subr.mxu0 0.0
    %2559 = vmatpush1.xpose.msra.mxu0 0.0
    %2560 = vmatprep.subr.mxu0 0.0
    %2561 = vmatpush1.xpose.msra.mxu0 0.0
    %2562 = vmatprep.subr.mxu0 0.0
    %2563 = vmatpush1.xpose.msra.mxu0 0.0
    %2564 = vmatprep.subr.mxu0 0.0
    %2565 = vmatpush1.xpose.msra.mxu0 0.0
    %2566 = vmatprep.subr.mxu0 0.0
    %2567 = vmatpush1.xpose.msra.mxu0 0.0
    %2568 = vmatprep.mubr.f32.mxu0 0.0
    %2569 = vmatmul.mubr.f32.gmra.mrb[0].mxu0 %v2500
    %v2570 = vpop.f32.mrb[0].mxu0
    %v2571 = vadd.f32 %v147, %v2570
    %v2572 = vpop.f32.mrb[0].mxu0
    %2573 = vdwg.mxu0
    %v2574 = vsel %vm281, %v2493, -inf
    %2575 = vmax.xlane.f32.xlu0 %v2574
    %v2576 = vpop.xlane.xlu0 %2575
    %v2577 = vsel %vm281, %v2571, -inf
    %2578 = vmax.xlane.f32.xlu0 %v2577
    %v2579 = vpop.xlane.xlu0 %2578
    %v2580 = vsub.f32 %v2493, %v2576
    %v2581 = vsub.f32 %v2571, %v2579
    %v2582 = vmul.f32 %v2580, 1.442695
    %v2583 = vpow.pop %v2582
    %v2584 = vmul.f32 %v2581, 1.442695
    %v2585 = vpow.pop %v2584
    %v2586 = vsel %vm281, %v2583, 0.0
    %2587 = vadd.xlane.f32.xlu0 %v2586
    %v2588 = vpop.xlane.xlu0 %2587
    %v2589 = vsel %vm281, %v2585, 0.0
    %2590 = vadd.xlane.f32.xlu0 %v2589
    %v2591 = vpop.xlane.xlu0 %2590
    %v2592 = vrcp.pop %v2588
    %v2593 = vmul.f32 %v2583, %v2592
    %v2594 = vrcp.pop %v2591
    %v2595 = vmul.f32 %v2585, %v2594
    %2596 = vrot.lane.b32.xlu0 %v2082, 56
    %v2597 = vpop.permute.xlu0 %2596
    %v2600 = vsel %vm281, %v2593, 0
    %2602 = vmatprep.subr.mxu0 0.0
    %2603 = vmatpush1.msra.mxu0 %v2597
    %2604 = vmatprep.subr.mxu0 0.0
    %2605 = vmatpush1.msra.mxu0 0.0
    %2606 = vmatprep.subr.mxu0 0.0
    %2607 = vmatpush1.msra.mxu0 0.0
    %2608 = vmatprep.subr.mxu0 0.0
    %2609 = vmatpush1.msra.mxu0 0.0
    %2610 = vmatprep.subr.mxu0 0.0
    %2611 = vmatpush1.msra.mxu0 0.0
    %2612 = vmatprep.subr.mxu0 0.0
    %2613 = vmatpush1.msra.mxu0 0.0
    %2614 = vmatprep.subr.mxu0 0.0
    %2615 = vmatpush1.msra.mxu0 0.0
    %2616 = vmatprep.subr.mxu0 0.0
    %2617 = vmatpush1.msra.mxu0 0.0
    %2618 = vmatprep.subr.mxu0 0.0
    %2619 = vmatpush1.msra.mxu0 0.0
    %2620 = vmatprep.subr.mxu0 0.0
    %2621 = vmatpush1.msra.mxu0 0.0
    %2622 = vmatprep.subr.mxu0 0.0
    %2623 = vmatpush1.msra.mxu0 0.0
    %2624 = vmatprep.subr.mxu0 0.0
    %2625 = vmatpush1.msra.mxu0 0.0
    %2626 = vmatprep.subr.mxu0 0.0
    %2627 = vmatpush1.msra.mxu0 0.0
    %2628 = vmatprep.subr.mxu0 0.0
    %2629 = vmatpush1.msra.mxu0 0.0
    %2630 = vmatprep.subr.mxu0 0.0
    %2631 = vmatpush1.msra.mxu0 0.0
    %2632 = vmatprep.subr.mxu0 0.0
    %2633 = vmatpush1.msra.mxu0 0.0
    %2634 = vmatprep.subr.mxu0 0.0
    %2635 = vmatpush1.msra.mxu0 0.0
    %2636 = vmatprep.subr.mxu0 0.0
    %2637 = vmatpush1.msra.mxu0 0.0
    %2638 = vmatprep.subr.mxu0 0.0
    %2639 = vmatpush1.msra.mxu0 0.0
    %2640 = vmatprep.subr.mxu0 0.0
    %2641 = vmatpush1.msra.mxu0 0.0
    %2642 = vmatprep.subr.mxu0 0.0
    %2643 = vmatpush1.msra.mxu0 0.0
    %2644 = vmatprep.subr.mxu0 0.0
    %2645 = vmatpush1.msra.mxu0 0.0
    %2646 = vmatprep.subr.mxu0 0.0
    %2647 = vmatpush1.msra.mxu0 0.0
    %2648 = vmatprep.subr.mxu0 0.0
    %2649 = vmatpush1.msra.mxu0 0.0
    %2650 = vmatprep.subr.mxu0 0.0
    %2651 = vmatpush1.msra.mxu0 0.0
    %2652 = vmatprep.subr.mxu0 0.0
    %2653 = vmatpush1.msra.mxu0 0.0
    %2654 = vmatprep.subr.mxu0 0.0
    %2655 = vmatpush1.msra.mxu0 0.0
    %2656 = vmatprep.subr.mxu0 0.0
    %2657 = vmatpush1.msra.mxu0 0.0
    %2658 = vmatprep.subr.mxu0 0.0
    %2659 = vmatpush1.msra.mxu0 0.0
    %2660 = vmatprep.subr.mxu0 0.0
    %2661 = vmatpush1.msra.mxu0 0.0
    %2662 = vmatprep.subr.mxu0 0.0
    %2663 = vmatpush1.msra.mxu0 0.0
    %2664 = vmatprep.subr.mxu0 0.0
    %2665 = vmatpush1.msra.mxu0 0.0
    %2666 = vmatprep.mubr.f32.mxu0 0.0
    %2667 = vmatmul.mubr.f32.gmra.mrb[0].mxu0 %v2600
    %v2668 = vpop.f32.mrb[0].mxu0
    %v2669 = vadd.f32 0.0, %v2668
    %v2670 = vpop.f32.mrb[0].mxu0
    %2671 = vdwg.mxu0
    %2672 = vrot.lane.b32.xlu0 %v2087, 56
    %v2673 = vpop.permute.xlu0 %2672
    %v2676 = vsel %vm281, %v2595, 0
    %2678 = vmatprep.subr.mxu0 0.0
    %2679 = vmatpush1.msra.mxu0 %v2673
    %2680 = vmatprep.subr.mxu0 0.0
    %2681 = vmatpush1.msra.mxu0 0.0
    %2682 = vmatprep.subr.mxu0 0.0
    %2683 = vmatpush1.msra.mxu0 0.0
    %2684 = vmatprep.subr.mxu0 0.0
    %2685 = vmatpush1.msra.mxu0 0.0
    %2686 = vmatprep.subr.mxu0 0.0
    %2687 = vmatpush1.msra.mxu0 0.0
    %2688 = vmatprep.subr.mxu0 0.0
    %2689 = vmatpush1.msra.mxu0 0.0
    %2690 = vmatprep.subr.mxu0 0.0
    %2691 = vmatpush1.msra.mxu0 0.0
    %2692 = vmatprep.subr.mxu0 0.0
    %2693 = vmatpush1.msra.mxu0 0.0
    %2694 = vmatprep.subr.mxu0 0.0
    %2695 = vmatpush1.msra.mxu0 0.0
    %2696 = vmatprep.subr.mxu0 0.0
    %2697 = vmatpush1.msra.mxu0 0.0
    %2698 = vmatprep.subr.mxu0 0.0
    %2699 = vmatpush1.msra.mxu0 0.0
    %2700 = vmatprep.subr.mxu0 0.0
    %2701 = vmatpush1.msra.mxu0 0.0
    %2702 = vmatprep.subr.mxu0 0.0
    %2703 = vmatpush1.msra.mxu0 0.0
    %2704 = vmatprep.subr.mxu0 0.0
    %2705 = vmatpush1.msra.mxu0 0.0
    %2706 = vmatprep.subr.mxu0 0.0
    %2707 = vmatpush1.msra.mxu0 0.0
    %2708 = vmatprep.subr.mxu0 0.0
    %2709 = vmatpush1.msra.mxu0 0.0
    %2710 = vmatprep.subr.mxu0 0.0
    %2711 = vmatpush1.msra.mxu0 0.0
    %2712 = vmatprep.subr.mxu0 0.0
    %2713 = vmatpush1.msra.mxu0 0.0
    %2714 = vmatprep.subr.mxu0 0.0
    %2715 = vmatpush1.msra.mxu0 0.0
    %2716 = vmatprep.subr.mxu0 0.0
    %2717 = vmatpush1.msra.mxu0 0.0
    %2718 = vmatprep.subr.mxu0 0.0
    %2719 = vmatpush1.msra.mxu0 0.0
    %2720 = vmatprep.subr.mxu0 0.0
    %2721 = vmatpush1.msra.mxu0 0.0
    %2722 = vmatprep.subr.mxu0 0.0
    %2723 = vmatpush1.msra.mxu0 0.0
    %2724 = vmatprep.subr.mxu0 0.0
    %2725 = vmatpush1.msra.mxu0 0.0
    %2726 = vmatprep.subr.mxu0 0.0
    %2727 = vmatpush1.msra.mxu0 0.0
    %2728 = vmatprep.subr.mxu0 0.0
    %2729 = vmatpush1.msra.mxu0 0.0
    %2730 = vmatprep.subr.mxu0 0.0
    %2731 = vmatpush1.msra.mxu0 0.0
    %2732 = vmatprep.subr.mxu0 0.0
    %2733 = vmatpush1.msra.mxu0 0.0
    %2734 = vmatprep.subr.mxu0 0.0
    %2735 = vmatpush1.msra.mxu0 0.0
    %2736 = vmatprep.subr.mxu0 0.0
    %2737 = vmatpush1.msra.mxu0 0.0
    %2738 = vmatprep.subr.mxu0 0.0
    %2739 = vmatpush1.msra.mxu0 0.0
    %2740 = vmatprep.subr.mxu0 0.0
    %2741 = vmatpush1.msra.mxu0 0.0
    %2742 = vmatprep.mubr.f32.mxu0 0.0
    %2743 = vmatmul.mubr.f32.gmra.mrb[0].mxu0 %v2676
    %v2744 = vpop.f32.mrb[0].mxu0
    %v2745 = vadd.f32 0.0, %v2744
    %v2746 = vpop.f32.mrb[0].mxu0
    %2747 = vdwg.mxu0
    %2748 = vrot.lane.b32.xlu0 %v2082, 112
    %v2749 = vpop.permute.xlu0 %2748
    %2750 = vrot.lane.b32.xlu0 %v2082, 80
    %v2751 = vpop.permute.xlu0 %2750
    %v2752 = vsel %vm281, %v2749, 0
    %v2754 = vsel %vm281, %v2751, 0
    %2756 = vmatprep.subr.mxu0 0.0
    %2757 = vmatpush1.xpose.msra.mxu0 %v2754
    %2758 = vmatprep.subr.mxu0 0.0
    %2759 = vmatpush1.xpose.msra.mxu0 0.0
    %2760 = vmatprep.subr.mxu0 0.0
    %2761 = vmatpush1.xpose.msra.mxu0 0.0
    %2762 = vmatprep.subr.mxu0 0.0
    %2763 = vmatpush1.xpose.msra.mxu0 0.0
    %2764 = vmatprep.subr.mxu0 0.0
    %2765 = vmatpush1.xpose.msra.mxu0 0.0
    %2766 = vmatprep.subr.mxu0 0.0
    %2767 = vmatpush1.xpose.msra.mxu0 0.0
    %2768 = vmatprep.subr.mxu0 0.0
    %2769 = vmatpush1.xpose.msra.mxu0 0.0
    %2770 = vmatprep.subr.mxu0 0.0
    %2771 = vmatpush1.xpose.msra.mxu0 0.0
    %2772 = vmatprep.subr.mxu0 0.0
    %2773 = vmatpush1.xpose.msra.mxu0 0.0
    %2774 = vmatprep.subr.mxu0 0.0
    %2775 = vmatpush1.xpose.msra.mxu0 0.0
    %2776 = vmatprep.subr.mxu0 0.0
    %2777 = vmatpush1.xpose.msra.mxu0 0.0
    %2778 = vmatprep.subr.mxu0 0.0
    %2779 = vmatpush1.xpose.msra.mxu0 0.0
    %2780 = vmatprep.subr.mxu0 0.0
    %2781 = vmatpush1.xpose.msra.mxu0 0.0
    %2782 = vmatprep.subr.mxu0 0.0
    %2783 = vmatpush1.xpose.msra.mxu0 0.0
    %2784 = vmatprep.subr.mxu0 0.0
    %2785 = vmatpush1.xpose.msra.mxu0 0.0
    %2786 = vmatprep.subr.mxu0 0.0
    %2787 = vmatpush1.xpose.msra.mxu0 0.0
    %2788 = vmatprep.subr.mxu0 0.0
    %2789 = vmatpush1.xpose.msra.mxu0 0.0
    %2790 = vmatprep.subr.mxu0 0.0
    %2791 = vmatpush1.xpose.msra.mxu0 0.0
    %2792 = vmatprep.subr.mxu0 0.0
    %2793 = vmatpush1.xpose.msra.mxu0 0.0
    %2794 = vmatprep.subr.mxu0 0.0
    %2795 = vmatpush1.xpose.msra.mxu0 0.0
    %2796 = vmatprep.subr.mxu0 0.0
    %2797 = vmatpush1.xpose.msra.mxu0 0.0
    %2798 = vmatprep.subr.mxu0 0.0
    %2799 = vmatpush1.xpose.msra.mxu0 0.0
    %2800 = vmatprep.subr.mxu0 0.0
    %2801 = vmatpush1.xpose.msra.mxu0 0.0
    %2802 = vmatprep.subr.mxu0 0.0
    %2803 = vmatpush1.xpose.msra.mxu0 0.0
    %2804 = vmatprep.subr.mxu0 0.0
    %2805 = vmatpush1.xpose.msra.mxu0 0.0
    %2806 = vmatprep.subr.mxu0 0.0
    %2807 = vmatpush1.xpose.msra.mxu0 0.0
    %2808 = vmatprep.subr.mxu0 0.0
    %2809 = vmatpush1.xpose.msra.mxu0 0.0
    %2810 = vmatprep.subr.mxu0 0.0
    %2811 = vmatpush1.xpose.msra.mxu0 0.0
    %2812 = vmatprep.subr.mxu0 0.0
    %2813 = vmatpush1.xpose.msra.mxu0 0.0
    %2814 = vmatprep.subr.mxu0 0.0
    %2815 = vmatpush1.xpose.msra.mxu0 0.0
    %2816 = vmatprep.subr.mxu0 0.0
    %2817 = vmatpush1.xpose.msra.mxu0 0.0
    %2818 = vmatprep.subr.mxu0 0.0
    %2819 = vmatpush1.xpose.msra.mxu0 0.0
    %2820 = vmatprep.mubr.f32.mxu0 0.0
    %2821 = vmatmul.mubr.f32.gmra.mrb[0].mxu0 %v2752
    %v2822 = vpop.f32.mrb[0].mxu0
    %v2823 = vadd.f32 %v147, %v2822
    %v2824 = vpop.f32.mrb[0].mxu0
    %2825 = vdwg.mxu0
    %2826 = vrot.lane.b32.xlu0 %v2087, 112
    %v2827 = vpop.permute.xlu0 %2826
    %2828 = vrot.lane.b32.xlu0 %v2087, 80
    %v2829 = vpop.permute.xlu0 %2828
    %v2830 = vsel %vm281, %v2827, 0
    %v2832 = vsel %vm281, %v2829, 0
    %2834 = vmatprep.subr.mxu0 0.0
    %2835 = vmatpush1.xpose.msra.mxu0 %v2832
    %2836 = vmatprep.subr.mxu0 0.0
    %2837 = vmatpush1.xpose.msra.mxu0 0.0
    %2838 = vmatprep.subr.mxu0 0.0
    %2839 = vmatpush1.xpose.msra.mxu0 0.0
    %2840 = vmatprep.subr.mxu0 0.0
    %2841 = vmatpush1.xpose.msra.mxu0 0.0
    %2842 = vmatprep.subr.mxu0 0.0
    %2843 = vmatpush1.xpose.msra.mxu0 0.0
    %2844 = vmatprep.subr.mxu0 0.0
    %2845 = vmatpush1.xpose.msra.mxu0 0.0
    %2846 = vmatprep.subr.mxu0 0.0
    %2847 = vmatpush1.xpose.msra.mxu0 0.0
    %2848 = vmatprep.subr.mxu0 0.0
    %2849 = vmatpush1.xpose.msra.mxu0 0.0
    %2850 = vmatprep.subr.mxu0 0.0
    %2851 = vmatpush1.xpose.msra.mxu0 0.0
    %2852 = vmatprep.subr.mxu0 0.0
    %2853 = vmatpush1.xpose.msra.mxu0 0.0
    %2854 = vmatprep.subr.mxu0 0.0
    %2855 = vmatpush1.xpose.msra.mxu0 0.0
    %2856 = vmatprep.subr.mxu0 0.0
    %2857 = vmatpush1.xpose.msra.mxu0 0.0
    %2858 = vmatprep.subr.mxu0 0.0
    %2859 = vmatpush1.xpose.msra.mxu0 0.0
    %2860 = vmatprep.subr.mxu0 0.0
    %2861 = vmatpush1.xpose.msra.mxu0 0.0
    %2862 = vmatprep.subr.mxu0 0.0
    %2863 = vmatpush1.xpose.msra.mxu0 0.0
    %2864 = vmatprep.subr.mxu0 0.0
    %2865 = vmatpush1.xpose.msra.mxu0 0.0
    %2866 = vmatprep.subr.mxu0 0.0
    %2867 = vmatpush1.xpose.msra.mxu0 0.0
    %2868 = vmatprep.subr.mxu0 0.0
    %2869 = vmatpush1.xpose.msra.mxu0 0.0
    %2870 = vmatprep.subr.mxu0 0.0
    %2871 = vmatpush1.xpose.msra.mxu0 0.0
    %2872 = vmatprep.subr.mxu0 0.0
    %2873 = vmatpush1.xpose.msra.mxu0 0.0
    %2874 = vmatprep.subr.mxu0 0.0
    %2875 = vmatpush1.xpose.msra.mxu0 0.0
    %2876 = vmatprep.subr.mxu0 0.0
    %2877 = vmatpush1.xpose.msra.mxu0 0.0
    %2878 = vmatprep.subr.mxu0 0.0
    %2879 = vmatpush1.xpose.msra.mxu0 0.0
    %2880 = vmatprep.subr.mxu0 0.0
    %2881 = vmatpush1.xpose.msra.mxu0 0.0
    %2882 = vmatprep.subr.mxu0 0.0
    %2883 = vmatpush1.xpose.msra.mxu0 0.0
    %2884 = vmatprep.subr.mxu0 0.0
    %2885 = vmatpush1.xpose.msra.mxu0 0.0
    %2886 = vmatprep.subr.mxu0 0.0
    %2887 = vmatpush1.xpose.msra.mxu0 0.0
    %2888 = vmatprep.subr.mxu0 0.0
    %2889 = vmatpush1.xpose.msra.mxu0 0.0
    %2890 = vmatprep.subr.mxu0 0.0
    %2891 = vmatpush1.xpose.msra.mxu0 0.0
    %2892 = vmatprep.subr.mxu0 0.0
    %2893 = vmatpush1.xpose.msra.mxu0 0.0
    %2894 = vmatprep.subr.mxu0 0.0
    %2895 = vmatpush1.xpose.msra.mxu0 0.0
    %2896 = vmatprep.subr.mxu0 0.0
    %2897 = vmatpush1.xpose.msra.mxu0 0.0
    %2898 = vmatprep.mubr.f32.mxu0 0.0
    %2899 = vmatmul.mubr.f32.gmra.mrb[0].mxu0 %v2830
    %v2900 = vpop.f32.mrb[0].mxu0
    %v2901 = vadd.f32 %v147, %v2900
    %v2902 = vpop.f32.mrb[0].mxu0
    %2903 = vdwg.mxu0
    %v2904 = vsel %vm281, %v2823, -inf
    %2905 = vmax.xlane.f32.xlu0 %v2904
    %v2906 = vpop.xlane.xlu0 %2905
    %v2907 = vsel %vm281, %v2901, -inf
    %2908 = vmax.xlane.f32.xlu0 %v2907
    %v2909 = vpop.xlane.xlu0 %2908
    %v2910 = vsub.f32 %v2823, %v2906
    %v2911 = vsub.f32 %v2901, %v2909
    %v2912 = vmul.f32 %v2910, 1.442695
    %v2913 = vpow.pop %v2912
    %v2914 = vmul.f32 %v2911, 1.442695
    %v2915 = vpow.pop %v2914
    %v2916 = vsel %vm281, %v2913, 0.0
    %2917 = vadd.xlane.f32.xlu0 %v2916
    %v2918 = vpop.xlane.xlu0 %2917
    %v2919 = vsel %vm281, %v2915, 0.0
    %2920 = vadd.xlane.f32.xlu0 %v2919
    %v2921 = vpop.xlane.xlu0 %2920
    %v2922 = vrcp.pop %v2918
    %v2923 = vmul.f32 %v2913, %v2922
    %v2924 = vrcp.pop %v2921
    %v2925 = vmul.f32 %v2915, %v2924
    %2926 = vrot.lane.b32.xlu0 %v2082, 48
    %v2927 = vpop.permute.xlu0 %2926
    %v2930 = vsel %vm281, %v2923, 0
    %2932 = vmatprep.subr.mxu0 0.0
    %2933 = vmatpush1.msra.mxu0 %v2927
    %2934 = vmatprep.subr.mxu0 0.0
    %2935 = vmatpush1.msra.mxu0 0.0
    %2936 = vmatprep.subr.mxu0 0.0
    %2937 = vmatpush1.msra.mxu0 0.0
    %2938 = vmatprep.subr.mxu0 0.0
    %2939 = vmatpush1.msra.mxu0 0.0
    %2940 = vmatprep.subr.mxu0 0.0
    %2941 = vmatpush1.msra.mxu0 0.0
    %2942 = vmatprep.subr.mxu0 0.0
    %2943 = vmatpush1.msra.mxu0 0.0
    %2944 = vmatprep.subr.mxu0 0.0
    %2945 = vmatpush1.msra.mxu0 0.0
    %2946 = vmatprep.subr.mxu0 0.0
    %2947 = vmatpush1.msra.mxu0 0.0
    %2948 = vmatprep.subr.mxu0 0.0
    %2949 = vmatpush1.msra.mxu0 0.0
    %2950 = vmatprep.subr.mxu0 0.0
    %2951 = vmatpush1.msra.mxu0 0.0
    %2952 = vmatprep.subr.mxu0 0.0
    %2953 = vmatpush1.msra.mxu0 0.0
    %2954 = vmatprep.subr.mxu0 0.0
    %2955 = vmatpush1.msra.mxu0 0.0
    %2956 = vmatprep.subr.mxu0 0.0
    %2957 = vmatpush1.msra.mxu0 0.0
    %2958 = vmatprep.subr.mxu0 0.0
    %2959 = vmatpush1.msra.mxu0 0.0
    %2960 = vmatprep.subr.mxu0 0.0
    %2961 = vmatpush1.msra.mxu0 0.0
    %2962 = vmatprep.subr.mxu0 0.0
    %2963 = vmatpush1.msra.mxu0 0.0
    %2964 = vmatprep.subr.mxu0 0.0
    %2965 = vmatpush1.msra.mxu0 0.0
    %2966 = vmatprep.subr.mxu0 0.0
    %2967 = vmatpush1.msra.mxu0 0.0
    %2968 = vmatprep.subr.mxu0 0.0
    %2969 = vmatpush1.msra.mxu0 0.0
    %2970 = vmatprep.subr.mxu0 0.0
    %2971 = vmatpush1.msra.mxu0 0.0
    %2972 = vmatprep.subr.mxu0 0.0
    %2973 = vmatpush1.msra.mxu0 0.0
    %2974 = vmatprep.subr.mxu0 0.0
    %2975 = vmatpush1.msra.mxu0 0.0
    %2976 = vmatprep.subr.mxu0 0.0
    %2977 = vmatpush1.msra.mxu0 0.0
    %2978 = vmatprep.subr.mxu0 0.0
    %2979 = vmatpush1.msra.mxu0 0.0
    %2980 = vmatprep.subr.mxu0 0.0
    %2981 = vmatpush1.msra.mxu0 0.0
    %2982 = vmatprep.subr.mxu0 0.0
    %2983 = vmatpush1.msra.mxu0 0.0
    %2984 = vmatprep.subr.mxu0 0.0
    %2985 = vmatpush1.msra.mxu0 0.0
    %2986 = vmatprep.subr.mxu0 0.0
    %2987 = vmatpush1.msra.mxu0 0.0
    %2988 = vmatprep.subr.mxu0 0.0
    %2989 = vmatpush1.msra.mxu0 0.0
    %2990 = vmatprep.subr.mxu0 0.0
    %2991 = vmatpush1.msra.mxu0 0.0
    %2992 = vmatprep.subr.mxu0 0.0
    %2993 = vmatpush1.msra.mxu0 0.0
    %2994 = vmatprep.subr.mxu0 0.0
    %2995 = vmatpush1.msra.mxu0 0.0
    %2996 = vmatprep.mubr.f32.mxu0 0.0
    %2997 = vmatmul.mubr.f32.gmra.mrb[0].mxu0 %v2930
    %v2998 = vpop.f32.mrb[0].mxu0
    %v2999 = vadd.f32 0.0, %v2998
    %v3000 = vpop.f32.mrb[0].mxu0
    %3001 = vdwg.mxu0
    %3002 = vrot.lane.b32.xlu0 %v2087, 48
    %v3003 = vpop.permute.xlu0 %3002
    %v3006 = vsel %vm281, %v2925, 0
    %3008 = vmatprep.subr.mxu0 0.0
    %3009 = vmatpush1.msra.mxu0 %v3003
    %3010 = vmatprep.subr.mxu0 0.0
    %3011 = vmatpush1.msra.mxu0 0.0
    %3012 = vmatprep.subr.mxu0 0.0
    %3013 = vmatpush1.msra.mxu0 0.0
    %3014 = vmatprep.subr.mxu0 0.0
    %3015 = vmatpush1.msra.mxu0 0.0
    %3016 = vmatprep.subr.mxu0 0.0
    %3017 = vmatpush1.msra.mxu0 0.0
    %3018 = vmatprep.subr.mxu0 0.0
    %3019 = vmatpush1.msra.mxu0 0.0
    %3020 = vmatprep.subr.mxu0 0.0
    %3021 = vmatpush1.msra.mxu0 0.0
    %3022 = vmatprep.subr.mxu0 0.0
    %3023 = vmatpush1.msra.mxu0 0.0
    %3024 = vmatprep.subr.mxu0 0.0
    %3025 = vmatpush1.msra.mxu0 0.0
    %3026 = vmatprep.subr.mxu0 0.0
    %3027 = vmatpush1.msra.mxu0 0.0
    %3028 = vmatprep.subr.mxu0 0.0
    %3029 = vmatpush1.msra.mxu0 0.0
    %3030 = vmatprep.subr.mxu0 0.0
    %3031 = vmatpush1.msra.mxu0 0.0
    %3032 = vmatprep.subr.mxu0 0.0
    %3033 = vmatpush1.msra.mxu0 0.0
    %3034 = vmatprep.subr.mxu0 0.0
    %3035 = vmatpush1.msra.mxu0 0.0
    %3036 = vmatprep.subr.mxu0 0.0
    %3037 = vmatpush1.msra.mxu0 0.0
    %3038 = vmatprep.subr.mxu0 0.0
    %3039 = vmatpush1.msra.mxu0 0.0
    %3040 = vmatprep.subr.mxu0 0.0
    %3041 = vmatpush1.msra.mxu0 0.0
    %3042 = vmatprep.subr.mxu0 0.0
    %3043 = vmatpush1.msra.mxu0 0.0
    %3044 = vmatprep.subr.mxu0 0.0
    %3045 = vmatpush1.msra.mxu0 0.0
    %3046 = vmatprep.subr.mxu0 0.0
    %3047 = vmatpush1.msra.mxu0 0.0
    %3048 = vmatprep.subr.mxu0 0.0
    %3049 = vmatpush1.msra.mxu0 0.0
    %3050 = vmatprep.subr.mxu0 0.0
    %3051 = vmatpush1.msra.mxu0 0.0
    %3052 = vmatprep.subr.mxu0 0.0
    %3053 = vmatpush1.msra.mxu0 0.0
    %3054 = vmatprep.subr.mxu0 0.0
    %3055 = vmatpush1.msra.mxu0 0.0
    %3056 = vmatprep.subr.mxu0 0.0
    %3057 = vmatpush1.msra.mxu0 0.0
    %3058 = vmatprep.subr.mxu0 0.0
    %3059 = vmatpush1.msra.mxu0 0.0
    %3060 = vmatprep.subr.mxu0 0.0
    %3061 = vmatpush1.msra.mxu0 0.0
    %3062 = vmatprep.subr.mxu0 0.0
    %3063 = vmatpush1.msra.mxu0 0.0
    %3064 = vmatprep.subr.mxu0 0.0
    %3065 = vmatpush1.msra.mxu0 0.0
    %3066 = vmatprep.subr.mxu0 0.0
    %3067 = vmatpush1.msra.mxu0 0.0
    %3068 = vmatprep.subr.mxu0 0.0
    %3069 = vmatpush1.msra.mxu0 0.0
    %3070 = vmatprep.subr.mxu0 0.0
    %3071 = vmatpush1.msra.mxu0 0.0
    %3072 = vmatprep.mubr.f32.mxu0 0.0
    %3073 = vmatmul.mubr.f32.gmra.mrb[0].mxu0 %v3006
    %v3074 = vpop.f32.mrb[0].mxu0
    %v3075 = vadd.f32 0.0, %v3074
    %v3076 = vpop.f32.mrb[0].mxu0
    %3077 = vdwg.mxu0
    %3078 = vrot.lane.b32.xlu0 %v2082, 104
    %v3079 = vpop.permute.xlu0 %3078
    %3080 = vrot.lane.b32.xlu0 %v2082, 72
    %v3081 = vpop.permute.xlu0 %3080
    %v3082 = vsel %vm281, %v3079, 0
    %v3084 = vsel %vm281, %v3081, 0
    %3086 = vmatprep.subr.mxu0 0.0
    %3087 = vmatpush1.xpose.msra.mxu0 %v3084
    %3088 = vmatprep.subr.mxu0 0.0
    %3089 = vmatpush1.xpose.msra.mxu0 0.0
    %3090 = vmatprep.subr.mxu0 0.0
    %3091 = vmatpush1.xpose.msra.mxu0 0.0
    %3092 = vmatprep.subr.mxu0 0.0
    %3093 = vmatpush1.xpose.msra.mxu0 0.0
    %3094 = vmatprep.subr.mxu0 0.0
    %3095 = vmatpush1.xpose.msra.mxu0 0.0
    %3096 = vmatprep.subr.mxu0 0.0
    %3097 = vmatpush1.xpose.msra.mxu0 0.0
    %3098 = vmatprep.subr.mxu0 0.0
    %3099 = vmatpush1.xpose.msra.mxu0 0.0
    %3100 = vmatprep.subr.mxu0 0.0
    %3101 = vmatpush1.xpose.msra.mxu0 0.0
    %3102 = vmatprep.subr.mxu0 0.0
    %3103 = vmatpush1.xpose.msra.mxu0 0.0
    %3104 = vmatprep.subr.mxu0 0.0
    %3105 = vmatpush1.xpose.msra.mxu0 0.0
    %3106 = vmatprep.subr.mxu0 0.0
    %3107 = vmatpush1.xpose.msra.mxu0 0.0
    %3108 = vmatprep.subr.mxu0 0.0
    %3109 = vmatpush1.xpose.msra.mxu0 0.0
    %3110 = vmatprep.subr.mxu0 0.0
    %3111 = vmatpush1.xpose.msra.mxu0 0.0
    %3112 = vmatprep.subr.mxu0 0.0
    %3113 = vmatpush1.xpose.msra.mxu0 0.0
    %3114 = vmatprep.subr.mxu0 0.0
    %3115 = vmatpush1.xpose.msra.mxu0 0.0
    %3116 = vmatprep.subr.mxu0 0.0
    %3117 = vmatpush1.xpose.msra.mxu0 0.0
    %3118 = vmatprep.subr.mxu0 0.0
    %3119 = vmatpush1.xpose.msra.mxu0 0.0
    %3120 = vmatprep.subr.mxu0 0.0
    %3121 = vmatpush1.xpose.msra.mxu0 0.0
    %3122 = vmatprep.subr.mxu0 0.0
    %3123 = vmatpush1.xpose.msra.mxu0 0.0
    %3124 = vmatprep.subr.mxu0 0.0
    %3125 = vmatpush1.xpose.msra.mxu0 0.0
    %3126 = vmatprep.subr.mxu0 0.0
    %3127 = vmatpush1.xpose.msra.mxu0 0.0
    %3128 = vmatprep.subr.mxu0 0.0
    %3129 = vmatpush1.xpose.msra.mxu0 0.0
    %3130 = vmatprep.subr.mxu0 0.0
    %3131 = vmatpush1.xpose.msra.mxu0 0.0
    %3132 = vmatprep.subr.mxu0 0.0
    %3133 = vmatpush1.xpose.msra.mxu0 0.0
    %3134 = vmatprep.subr.mxu0 0.0
    %3135 = vmatpush1.xpose.msra.mxu0 0.0
    %3136 = vmatprep.subr.mxu0 0.0
    %3137 = vmatpush1.xpose.msra.mxu0 0.0
    %3138 = vmatprep.subr.mxu0 0.0
    %3139 = vmatpush1.xpose.msra.mxu0 0.0
    %3140 = vmatprep.subr.mxu0 0.0
    %3141 = vmatpush1.xpose.msra.mxu0 0.0
    %3142 = vmatprep.subr.mxu0 0.0
    %3143 = vmatpush1.xpose.msra.mxu0 0.0
    %3144 = vmatprep.subr.mxu0 0.0
    %3145 = vmatpush1.xpose.msra.mxu0 0.0
    %3146 = vmatprep.subr.mxu0 0.0
    %3147 = vmatpush1.xpose.msra.mxu0 0.0
    %3148 = vmatprep.subr.mxu0 0.0
    %3149 = vmatpush1.xpose.msra.mxu0 0.0
    %3150 = vmatprep.mubr.f32.mxu0 0.0
    %3151 = vmatmul.mubr.f32.gmra.mrb[0].mxu0 %v3082
    %v3152 = vpop.f32.mrb[0].mxu0
    %v3153 = vadd.f32 %v147, %v3152
    %v3154 = vpop.f32.mrb[0].mxu0
    %3155 = vdwg.mxu0
    %3156 = vrot.lane.b32.xlu0 %v2087, 104
    %v3157 = vpop.permute.xlu0 %3156
    %3158 = vrot.lane.b32.xlu0 %v2087, 72
    %v3159 = vpop.permute.xlu0 %3158
    %v3160 = vsel %vm281, %v3157, 0
    %v3162 = vsel %vm281, %v3159, 0
    %3164 = vmatprep.subr.mxu0 0.0
    %3165 = vmatpush1.xpose.msra.mxu0 %v3162
    %3166 = vmatprep.subr.mxu0 0.0
    %3167 = vmatpush1.xpose.msra.mxu0 0.0
    %3168 = vmatprep.subr.mxu0 0.0
    %3169 = vmatpush1.xpose.msra.mxu0 0.0
    %3170 = vmatprep.subr.mxu0 0.0
    %3171 = vmatpush1.xpose.msra.mxu0 0.0
    %3172 = vmatprep.subr.mxu0 0.0
    %3173 = vmatpush1.xpose.msra.mxu0 0.0
    %3174 = vmatprep.subr.mxu0 0.0
    %3175 = vmatpush1.xpose.msra.mxu0 0.0
    %3176 = vmatprep.subr.mxu0 0.0
    %3177 = vmatpush1.xpose.msra.mxu0 0.0
    %3178 = vmatprep.subr.mxu0 0.0
    %3179 = vmatpush1.xpose.msra.mxu0 0.0
    %3180 = vmatprep.subr.mxu0 0.0
    %3181 = vmatpush1.xpose.msra.mxu0 0.0
    %3182 = vmatprep.subr.mxu0 0.0
    %3183 = vmatpush1.xpose.msra.mxu0 0.0
    %3184 = vmatprep.subr.mxu0 0.0
    %3185 = vmatpush1.xpose.msra.mxu0 0.0
    %3186 = vmatprep.subr.mxu0 0.0
    %3187 = vmatpush1.xpose.msra.mxu0 0.0
    %3188 = vmatprep.subr.mxu0 0.0
    %3189 = vmatpush1.xpose.msra.mxu0 0.0
    %3190 = vmatprep.subr.mxu0 0.0
    %3191 = vmatpush1.xpose.msra.mxu0 0.0
    %3192 = vmatprep.subr.mxu0 0.0
    %3193 = vmatpush1.xpose.msra.mxu0 0.0
    %3194 = vmatprep.subr.mxu0 0.0
    %3195 = vmatpush1.xpose.msra.mxu0 0.0
    %3196 = vmatprep.subr.mxu0 0.0
    %3197 = vmatpush1.xpose.msra.mxu0 0.0
    %3198 = vmatprep.subr.mxu0 0.0
    %3199 = vmatpush1.xpose.msra.mxu0 0.0
    %3200 = vmatprep.subr.mxu0 0.0
    %3201 = vmatpush1.xpose.msra.mxu0 0.0
    %3202 = vmatprep.subr.mxu0 0.0
    %3203 = vmatpush1.xpose.msra.mxu0 0.0
    %3204 = vmatprep.subr.mxu0 0.0
    %3205 = vmatpush1.xpose.msra.mxu0 0.0
    %3206 = vmatprep.subr.mxu0 0.0
    %3207 = vmatpush1.xpose.msra.mxu0 0.0
    %3208 = vmatprep.subr.mxu0 0.0
    %3209 = vmatpush1.xpose.msra.mxu0 0.0
    %3210 = vmatprep.subr.mxu0 0.0
    %3211 = vmatpush1.xpose.msra.mxu0 0.0
    %3212 = vmatprep.subr.mxu0 0.0
    %3213 = vmatpush1.xpose.msra.mxu0 0.0
    %3214 = vmatprep.subr.mxu0 0.0
    %3215 = vmatpush1.xpose.msra.mxu0 0.0
    %3216 = vmatprep.subr.mxu0 0.0
    %3217 = vmatpush1.xpose.msra.mxu0 0.0
    %3218 = vmatprep.subr.mxu0 0.0
    %3219 = vmatpush1.xpose.msra.mxu0 0.0
    %3220 = vmatprep.subr.mxu0 0.0
    %3221 = vmatpush1.xpose.msra.mxu0 0.0
    %3222 = vmatprep.subr.mxu0 0.0
    %3223 = vmatpush1.xpose.msra.mxu0 0.0
    %3224 = vmatprep.subr.mxu0 0.0
    %3225 = vmatpush1.xpose.msra.mxu0 0.0
    %3226 = vmatprep.subr.mxu0 0.0
    %3227 = vmatpush1.xpose.msra.mxu0 0.0
    %3228 = vmatprep.mubr.f32.mxu0 0.0
    %3229 = vmatmul.mubr.f32.gmra.mrb[0].mxu0 %v3160
    %v3230 = vpop.f32.mrb[0].mxu0
    %v3231 = vadd.f32 %v147, %v3230
    %v3232 = vpop.f32.mrb[0].mxu0
    %3233 = vdwg.mxu0
    %v3234 = vsel %vm281, %v3153, -inf
    %3235 = vmax.xlane.f32.xlu0 %v3234
    %v3236 = vpop.xlane.xlu0 %3235
    %v3237 = vsel %vm281, %v3231, -inf
    %3238 = vmax.xlane.f32.xlu0 %v3237
    %v3239 = vpop.xlane.xlu0 %3238
    %v3240 = vsub.f32 %v3153, %v3236
    %v3241 = vsub.f32 %v3231, %v3239
    %v3242 = vmul.f32 %v3240, 1.442695
    %v3243 = vpow.pop %v3242
    %v3244 = vmul.f32 %v3241, 1.442695
    %v3245 = vpow.pop %v3244
    %v3246 = vsel %vm281, %v3243, 0.0
    %3247 = vadd.xlane.f32.xlu0 %v3246
    %v3248 = vpop.xlane.xlu0 %3247
    %v3249 = vsel %vm281, %v3245, 0.0
    %3250 = vadd.xlane.f32.xlu0 %v3249
    %v3251 = vpop.xlane.xlu0 %3250
    %v3252 = vrcp.pop %v3248
    %v3253 = vmul.f32 %v3243, %v3252
    %v3254 = vrcp.pop %v3251
    %v3255 = vmul.f32 %v3245, %v3254
    %3256 = vrot.lane.b32.xlu0 %v2082, 40
    %v3257 = vpop.permute.xlu0 %3256
    %v3260 = vsel %vm281, %v3253, 0
    %3262 = vmatprep.subr.mxu0 0.0
    %3263 = vmatpush1.msra.mxu0 %v3257
    %3264 = vmatprep.subr.mxu0 0.0
    %3265 = vmatpush1.msra.mxu0 0.0
    %3266 = vmatprep.subr.mxu0 0.0
    %3267 = vmatpush1.msra.mxu0 0.0
    %3268 = vmatprep.subr.mxu0 0.0
    %3269 = vmatpush1.msra.mxu0 0.0
    %3270 = vmatprep.subr.mxu0 0.0
    %3271 = vmatpush1.msra.mxu0 0.0
    %3272 = vmatprep.subr.mxu0 0.0
    %3273 = vmatpush1.msra.mxu0 0.0
    %3274 = vmatprep.subr.mxu0 0.0
    %3275 = vmatpush1.msra.mxu0 0.0
    %3276 = vmatprep.subr.mxu0 0.0
    %3277 = vmatpush1.msra.mxu0 0.0
    %3278 = vmatprep.subr.mxu0 0.0
    %3279 = vmatpush1.msra.mxu0 0.0
    %3280 = vmatprep.subr.mxu0 0.0
    %3281 = vmatpush1.msra.mxu0 0.0
    %3282 = vmatprep.subr.mxu0 0.0
    %3283 = vmatpush1.msra.mxu0 0.0
    %3284 = vmatprep.subr.mxu0 0.0
    %3285 = vmatpush1.msra.mxu0 0.0
    %3286 = vmatprep.subr.mxu0 0.0
    %3287 = vmatpush1.msra.mxu0 0.0
    %3288 = vmatprep.subr.mxu0 0.0
    %3289 = vmatpush1.msra.mxu0 0.0
    %3290 = vmatprep.subr.mxu0 0.0
    %3291 = vmatpush1.msra.mxu0 0.0
    %3292 = vmatprep.subr.mxu0 0.0
    %3293 = vmatpush1.msra.mxu0 0.0
    %3294 = vmatprep.subr.mxu0 0.0
    %3295 = vmatpush1.msra.mxu0 0.0
    %3296 = vmatprep.subr.mxu0 0.0
    %3297 = vmatpush1.msra.mxu0 0.0
    %3298 = vmatprep.subr.mxu0 0.0
    %3299 = vmatpush1.msra.mxu0 0.0
    %3300 = vmatprep.subr.mxu0 0.0
    %3301 = vmatpush1.msra.mxu0 0.0
    %3302 = vmatprep.subr.mxu0 0.0
    %3303 = vmatpush1.msra.mxu0 0.0
    %3304 = vmatprep.subr.mxu0 0.0
    %3305 = vmatpush1.msra.mxu0 0.0
    %3306 = vmatprep.subr.mxu0 0.0
    %3307 = vmatpush1.msra.mxu0 0.0
    %3308 = vmatprep.subr.mxu0 0.0
    %3309 = vmatpush1.msra.mxu0 0.0
    %3310 = vmatprep.subr.mxu0 0.0
    %3311 = vmatpush1.msra.mxu0 0.0
    %3312 = vmatprep.subr.mxu0 0.0
    %3313 = vmatpush1.msra.mxu0 0.0
    %3314 = vmatprep.subr.mxu0 0.0
    %3315 = vmatpush1.msra.mxu0 0.0
    %3316 = vmatprep.subr.mxu0 0.0
    %3317 = vmatpush1.msra.mxu0 0.0
    %3318 = vmatprep.subr.mxu0 0.0
    %3319 = vmatpush1.msra.mxu0 0.0
    %3320 = vmatprep.subr.mxu0 0.0
    %3321 = vmatpush1.msra.mxu0 0.0
    %3322 = vmatprep.subr.mxu0 0.0
    %3323 = vmatpush1.msra.mxu0 0.0
    %3324 = vmatprep.subr.mxu0 0.0
    %3325 = vmatpush1.msra.mxu0 0.0
    %3326 = vmatprep.mubr.f32.mxu0 0.0
    %3327 = vmatmul.mubr.f32.gmra.mrb[0].mxu0 %v3260
    %v3328 = vpop.f32.mrb[0].mxu0
    %v3329 = vadd.f32 0.0, %v3328
    %v3330 = vpop.f32.mrb[0].mxu0
    %3331 = vdwg.mxu0
    %3332 = vrot.lane.b32.xlu0 %v2087, 40
    %v3333 = vpop.permute.xlu0 %3332
    %v3336 = vsel %vm281, %v3255, 0
    %3338 = vmatprep.subr.mxu0 0.0
    %3339 = vmatpush1.msra.mxu0 %v3333
    %3340 = vmatprep.subr.mxu0 0.0
    %3341 = vmatpush1.msra.mxu0 0.0
    %3342 = vmatprep.subr.mxu0 0.0
    %3343 = vmatpush1.msra.mxu0 0.0
    %3344 = vmatprep.subr.mxu0 0.0
    %3345 = vmatpush1.msra.mxu0 0.0
    %3346 = vmatprep.subr.mxu0 0.0
    %3347 = vmatpush1.msra.mxu0 0.0
    %3348 = vmatprep.subr.mxu0 0.0
    %3349 = vmatpush1.msra.mxu0 0.0
    %3350 = vmatprep.subr.mxu0 0.0
    %3351 = vmatpush1.msra.mxu0 0.0
    %3352 = vmatprep.subr.mxu0 0.0
    %3353 = vmatpush1.msra.mxu0 0.0
    %3354 = vmatprep.subr.mxu0 0.0
    %3355 = vmatpush1.msra.mxu0 0.0
    %3356 = vmatprep.subr.mxu0 0.0
    %3357 = vmatpush1.msra.mxu0 0.0
    %3358 = vmatprep.subr.mxu0 0.0
    %3359 = vmatpush1.msra.mxu0 0.0
    %3360 = vmatprep.subr.mxu0 0.0
    %3361 = vmatpush1.msra.mxu0 0.0
    %3362 = vmatprep.subr.mxu0 0.0
    %3363 = vmatpush1.msra.mxu0 0.0
    %3364 = vmatprep.subr.mxu0 0.0
    %3365 = vmatpush1.msra.mxu0 0.0
    %3366 = vmatprep.subr.mxu0 0.0
    %3367 = vmatpush1.msra.mxu0 0.0
    %3368 = vmatprep.subr.mxu0 0.0
    %3369 = vmatpush1.msra.mxu0 0.0
    %3370 = vmatprep.subr.mxu0 0.0
    %3371 = vmatpush1.msra.mxu0 0.0
    %3372 = vmatprep.subr.mxu0 0.0
    %3373 = vmatpush1.msra.mxu0 0.0
    %3374 = vmatprep.subr.mxu0 0.0
    %3375 = vmatpush1.msra.mxu0 0.0
    %3376 = vmatprep.subr.mxu0 0.0
    %3377 = vmatpush1.msra.mxu0 0.0
    %3378 = vmatprep.subr.mxu0 0.0
    %3379 = vmatpush1.msra.mxu0 0.0
    %3380 = vmatprep.subr.mxu0 0.0
    %3381 = vmatpush1.msra.mxu0 0.0
    %3382 = vmatprep.subr.mxu0 0.0
    %3383 = vmatpush1.msra.mxu0 0.0
    %3384 = vmatprep.subr.mxu0 0.0
    %3385 = vmatpush1.msra.mxu0 0.0
    %3386 = vmatprep.subr.mxu0 0.0
    %3387 = vmatpush1.msra.mxu0 0.0
    %3388 = vmatprep.subr.mxu0 0.0
    %3389 = vmatpush1.msra.mxu0 0.0
    %3390 = vmatprep.subr.mxu0 0.0
    %3391 = vmatpush1.msra.mxu0 0.0
    %3392 = vmatprep.subr.mxu0 0.0
    %3393 = vmatpush1.msra.mxu0 0.0
    %3394 = vmatprep.subr.mxu0 0.0
    %3395 = vmatpush1.msra.mxu0 0.0
    %3396 = vmatprep.subr.mxu0 0.0
    %3397 = vmatpush1.msra.mxu0 0.0
    %3398 = vmatprep.subr.mxu0 0.0
    %3399 = vmatpush1.msra.mxu0 0.0
    %3400 = vmatprep.subr.mxu0 0.0
    %3401 = vmatpush1.msra.mxu0 0.0
    %3402 = vmatprep.mubr.f32.mxu0 0.0
    %3403 = vmatmul.mubr.f32.gmra.mrb[0].mxu0 %v3336
    %v3404 = vpop.f32.mrb[0].mxu0
    %v3405 = vadd.f32 0.0, %v3404
    %v3406 = vpop.f32.mrb[0].mxu0
    %3407 = vdwg.mxu0
    %3410 = vrot.lane.b32.xlu0 %v2669, 8
    %v3411 = vpop.permute.xlu0 %3410
    %3412 = vrot.lane.b32.xlu0 %v2745, 8
    %v3413 = vpop.permute.xlu0 %3412
    %3418 = vrot.lane.b32.xlu0 %v2999, 16
    %v3419 = vpop.permute.xlu0 %3418
    %3420 = vrot.lane.b32.xlu0 %v3075, 16
    %v3421 = vpop.permute.xlu0 %3420
    %3426 = vrot.lane.b32.xlu0 %v3329, 24
    %v3427 = vpop.permute.xlu0 %3426
    %3428 = vrot.lane.b32.xlu0 %v3405, 24
    %v3429 = vpop.permute.xlu0 %3428
    %v3432 = vsel %vm281, %v2339, %v3411
    %v3433 = vsel %vm281, %v2415, %v3413
    %v3434 = vsel %vm1623, %v3432, %v3419
    %v3435 = vsel %vm1623, %v3433, %v3421
    %v3436 = vsel %vm1626, %v3434, %v3427
    %v3437 = vsel %vm1626, %v3435, %v3429
    %s3438 = scalar_lea.vmem [#allocation10], 32
    %v3439 = vld [vmem:[%s3438] sm:$0xff]
    %v3440 = vld [vmem:[%s3438 + $0x8] sm:$0xff]
    %v3441 = vld [vmem:[%s3438 + $0x10] sm:$0xff]
    %v3442 = vld [vmem:[%s3438 + $0x18] sm:$0xff]
    %v3443 = vlaneseq
    %v3444 = vshrl.u32 %v3443, 7
    %v3445 = vsub.s32 4, %v3444
    %v3446 = vrot.slane %v1961, %v3445
    %v3448 = vsel %vm149, %v3436, 0
    %v3451 = vsel %vm149, %v3437, 0
    %3453 = vmatprep.subr.mxu0 0.0
    %3454 = vmatpush1.msra.mxu0 %v3439
    %3455 = vmatprep.subr.mxu0 0.0
    %3456 = vmatpush1.msra.mxu0 %v3440
    %3457 = vmatprep.subr.mxu0 0.0
    %3458 = vmatpush1.msra.mxu0 %v3441
    %3459 = vmatprep.subr.mxu0 0.0
    %3460 = vmatpush1.msra.mxu0 %v3442
    %3461 = vmatprep.subr.mxu0 0.0
    %3462 = vmatpush1.msra.mxu0 0.0
    %3463 = vmatprep.subr.mxu0 0.0
    %3464 = vmatpush1.msra.mxu0 0.0
    %3465 = vmatprep.subr.mxu0 0.0
    %3466 = vmatpush1.msra.mxu0 0.0
    %3467 = vmatprep.subr.mxu0 0.0
    %3468 = vmatpush1.msra.mxu0 0.0
    %3469 = vmatprep.subr.mxu0 0.0
    %3470 = vmatpush1.msra.mxu0 0.0
    %3471 = vmatprep.subr.mxu0 0.0
    %3472 = vmatpush1.msra.mxu0 0.0
    %3473 = vmatprep.subr.mxu0 0.0
    %3474 = vmatpush1.msra.mxu0 0.0
    %3475 = vmatprep.subr.mxu0 0.0
    %3476 = vmatpush1.msra.mxu0 0.0
    %3477 = vmatprep.subr.mxu0 0.0
    %3478 = vmatpush1.msra.mxu0 0.0
    %3479 = vmatprep.subr.mxu0 0.0
    %3480 = vmatpush1.msra.mxu0 0.0
    %3481 = vmatprep.subr.mxu0 0.0
    %3482 = vmatpush1.msra.mxu0 0.0
    %3483 = vmatprep.subr.mxu0 0.0
    %3484 = vmatpush1.msra.mxu0 0.0
    %3485 = vmatprep.subr.mxu0 0.0
    %3486 = vmatpush1.msra.mxu0 0.0
    %3487 = vmatprep.subr.mxu0 0.0
    %3488 = vmatpush1.msra.mxu0 0.0
    %3489 = vmatprep.subr.mxu0 0.0
    %3490 = vmatpush1.msra.mxu0 0.0
    %3491 = vmatprep.subr.mxu0 0.0
    %3492 = vmatpush1.msra.mxu0 0.0
    %3493 = vmatprep.subr.mxu0 0.0
    %3494 = vmatpush1.msra.mxu0 0.0
    %3495 = vmatprep.subr.mxu0 0.0
    %3496 = vmatpush1.msra.mxu0 0.0
    %3497 = vmatprep.subr.mxu0 0.0
    %3498 = vmatpush1.msra.mxu0 0.0
    %3499 = vmatprep.subr.mxu0 0.0
    %3500 = vmatpush1.msra.mxu0 0.0
    %3501 = vmatprep.subr.mxu0 0.0
    %3502 = vmatpush1.msra.mxu0 0.0
    %3503 = vmatprep.subr.mxu0 0.0
    %3504 = vmatpush1.msra.mxu0 0.0
    %3505 = vmatprep.subr.mxu0 0.0
    %3506 = vmatpush1.msra.mxu0 0.0
    %3507 = vmatprep.subr.mxu0 0.0
    %3508 = vmatpush1.msra.mxu0 0.0
    %3509 = vmatprep.subr.mxu0 0.0
    %3510 = vmatpush1.msra.mxu0 0.0
    %3511 = vmatprep.subr.mxu0 0.0
    %3512 = vmatpush1.msra.mxu0 0.0
    %3513 = vmatprep.subr.mxu0 0.0
    %3514 = vmatpush1.msra.mxu0 0.0
    %3515 = vmatprep.subr.mxu0 0.0
    %3516 = vmatpush1.msra.mxu0 0.0
    %3517 = vmatprep.mubr.f32.mxu0 0.0
    %3518 = vmatmul.mubr.f32.gmra.mrb[0].mxu0 %v3448
    %v3519 = vpop.f32.mrb[0].mxu0
    %v3520 = vadd.f32 %v3446, %v3519
    %v3521 = vpop.f32.mrb[0].mxu0
    %3522 = vmatprep.mubr.f32.mxu0 0.0
    %3523 = vmatmul.mubr.f32.gmra.mrb[0].mxu0 %v3451
    %v3524 = vpop.f32.mrb[0].mxu0
    %v3525 = vadd.f32 %v3446, %v3524
    %v3526 = vpop.f32.mrb[0].mxu0
    %3527 = vdwg.mxu0
    %v3528 = vadd.f32 %v1958, %v3520
    %v3529 = vadd.f32 %v1959, %v3525
    %v3530 = vsel %vm149, %v3528, 0.0
    %3531 = vadd.xlane.f32.xlu0 %v3530
    %v3532 = vpop.xlane.xlu0 %3531
    %v3533 = vsel %vm149, %v3529, 0.0
    %3534 = vadd.xlane.f32.xlu0 %v3533
    %v3535 = vpop.xlane.xlu0 %3534
    %v3536 = vmul.f32 %v3532, %v156
    %v3537 = vmul.f32 %v3535, %v156
    %v3538 = vsub.f32 %v3528, %v3536
    %v3539 = vsub.f32 %v3529, %v3537
    %v3540 = vmul.f32 %v3538, %v3538
    %v3541 = vmul.f32 %v3539, %v3539
    %v3542 = vsel %vm149, %v3540, 0.0
    %3543 = vadd.xlane.f32.xlu0 %v3542
    %v3544 = vpop.xlane.xlu0 %3543
    %v3545 = vsel %vm149, %v3541, 0.0
    %3546 = vadd.xlane.f32.xlu0 %v3545
    %v3547 = vpop.xlane.xlu0 %3546
    %v3548 = vmul.f32 %v3544, %v156
    %v3549 = vmul.f32 %v3547, %v156
    %v3550 = vadd.f32 %v3548, 1e-05
    %v3551 = vadd.f32 %v3549, 1e-05
    %v3552 = vrsqrt.pop %v3550
    %v3553 = vrsqrt.pop %v3551
    %v3554 = vmul.f32 %v3538, %v3552
    %v3555 = vmul.f32 %v3539, %v3553
    %v3556 = vlaneseq
    %v3557 = vshrl.u32 %v3556, 7
    %v3558 = vsub.s32 2, %v3557
    %v3559 = vrot.slane %v1961, %v3558
    %v3560 = vmul.f32 %v3554, %v3559
    %v3561 = vmul.f32 %v3555, %v3559
    %v3562 = vlaneseq
    %v3563 = vshrl.u32 %v3562, 7
    %v3564 = vsub.s32 3, %v3563
    %v3565 = vrot.slane %v1961, %v3564
    %v3566 = vadd.f32 %v3560, %v3565
    %v3567 = vadd.f32 %v3561, %v3565
    %s3568 = scalar_lea.vmem [#allocation12], 32
    %v3569 = vld [vmem:[%s3568] sm:$0xff]
    %v3570 = vld [vmem:[%s3568 + $0x8] sm:$0xff]
    %v3571 = vld [vmem:[%s3568 + $0x10] sm:$0xff]
    %v3572 = vld [vmem:[%s3568 + $0x18] sm:$0xff]
    %v3573 = vlaneseq
    %v3574 = vshrl.u32 %v3573, 7
    %v3575 = vsub.s32 7, %v3574
    %v3576 = vrot.slane %v1961, %v3575
    %v3578 = vsel %vm149, %v3566, 0
    %v3581 = vsel %vm149, %v3567, 0
    %3583 = vmatprep.subr.mxu0 0.0
    %3584 = vmatpush1.msra.mxu0 %v3569
    %3585 = vmatprep.subr.mxu0 0.0
    %3586 = vmatpush1.msra.mxu0 %v3570
    %3587 = vmatprep.subr.mxu0 0.0
    %3588 = vmatpush1.msra.mxu0 %v3571
    %3589 = vmatprep.subr.mxu0 0.0
    %3590 = vmatpush1.msra.mxu0 %v3572
    %3591 = vmatprep.subr.mxu0 0.0
    %3592 = vmatpush1.msra.mxu0 0.0
    %3593 = vmatprep.subr.mxu0 0.0
    %3594 = vmatpush1.msra.mxu0 0.0
    %3595 = vmatprep.subr.mxu0 0.0
    %3596 = vmatpush1.msra.mxu0 0.0
    %3597 = vmatprep.subr.mxu0 0.0
    %3598 = vmatpush1.msra.mxu0 0.0
    %3599 = vmatprep.subr.mxu0 0.0
    %3600 = vmatpush1.msra.mxu0 0.0
    %3601 = vmatprep.subr.mxu0 0.0
    %3602 = vmatpush1.msra.mxu0 0.0
    %3603 = vmatprep.subr.mxu0 0.0
    %3604 = vmatpush1.msra.mxu0 0.0
    %3605 = vmatprep.subr.mxu0 0.0
    %3606 = vmatpush1.msra.mxu0 0.0
    %3607 = vmatprep.subr.mxu0 0.0
    %3608 = vmatpush1.msra.mxu0 0.0
    %3609 = vmatprep.subr.mxu0 0.0
    %3610 = vmatpush1.msra.mxu0 0.0
    %3611 = vmatprep.subr.mxu0 0.0
    %3612 = vmatpush1.msra.mxu0 0.0
    %3613 = vmatprep.subr.mxu0 0.0
    %3614 = vmatpush1.msra.mxu0 0.0
    %3615 = vmatprep.subr.mxu0 0.0
    %3616 = vmatpush1.msra.mxu0 0.0
    %3617 = vmatprep.subr.mxu0 0.0
    %3618 = vmatpush1.msra.mxu0 0.0
    %3619 = vmatprep.subr.mxu0 0.0
    %3620 = vmatpush1.msra.mxu0 0.0
    %3621 = vmatprep.subr.mxu0 0.0
    %3622 = vmatpush1.msra.mxu0 0.0
    %3623 = vmatprep.subr.mxu0 0.0
    %3624 = vmatpush1.msra.mxu0 0.0
    %3625 = vmatprep.subr.mxu0 0.0
    %3626 = vmatpush1.msra.mxu0 0.0
    %3627 = vmatprep.subr.mxu0 0.0
    %3628 = vmatpush1.msra.mxu0 0.0
    %3629 = vmatprep.subr.mxu0 0.0
    %3630 = vmatpush1.msra.mxu0 0.0
    %3631 = vmatprep.subr.mxu0 0.0
    %3632 = vmatpush1.msra.mxu0 0.0
    %3633 = vmatprep.subr.mxu0 0.0
    %3634 = vmatpush1.msra.mxu0 0.0
    %3635 = vmatprep.subr.mxu0 0.0
    %3636 = vmatpush1.msra.mxu0 0.0
    %3637 = vmatprep.subr.mxu0 0.0
    %3638 = vmatpush1.msra.mxu0 0.0
    %3639 = vmatprep.subr.mxu0 0.0
    %3640 = vmatpush1.msra.mxu0 0.0
    %3641 = vmatprep.subr.mxu0 0.0
    %3642 = vmatpush1.msra.mxu0 0.0
    %3643 = vmatprep.subr.mxu0 0.0
    %3644 = vmatpush1.msra.mxu0 0.0
    %3645 = vmatprep.subr.mxu0 0.0
    %3646 = vmatpush1.msra.mxu0 0.0
    %3647 = vmatprep.mubr.f32.mxu0 0.0
    %3648 = vmatmul.mubr.f32.gmra.mrb[0].mxu0 %v3578
    %v3649 = vpop.f32.mrb[0].mxu0
    %v3650 = vadd.f32 %v3576, %v3649
    %v3651 = vpop.f32.mrb[0].mxu0
    %3652 = vmatprep.mubr.f32.mxu0 0.0
    %3653 = vmatmul.mubr.f32.gmra.mrb[0].mxu0 %v3581
    %v3654 = vpop.f32.mrb[0].mxu0
    %v3655 = vadd.f32 %v3576, %v3654
    %v3656 = vpop.f32.mrb[0].mxu0
    %3657 = vdwg.mxu0
    %v3658 = vmul.f32 %v3650, 1.702
    %v3659 = vmul.f32 %v3655, 1.702
    %v3660 = vxor.u32 %v3658, 2147483648
    %v3661 = vxor.u32 %v3659, 2147483648
    %v3662 = vmul.f32 %v3660, 1.442695
    %v3663 = vpow.pop %v3662
    %v3664 = vmul.f32 %v3661, 1.442695
    %v3665 = vpow.pop %v3664
    %v3666 = vadd.f32 %v3663, 1.0
    %v3667 = vadd.f32 %v3665, 1.0
    %v3668 = vrcp.pop %v3666
    %v3669 = vmul.f32 1.0, %v3668
    %v3670 = vrcp.pop %v3667
    %v3671 = vmul.f32 1.0, %v3670
    %v3672 = vmul.f32 %v3650, %v3669
    %v3673 = vmul.f32 %v3655, %v3671
    %s3674 = scalar_lea.vmem [#allocation13], 128
    %v3675 = vld [vmem:[%s3674] sm:$0xff]
    %v3676 = vld [vmem:[%s3674 + $0x8] sm:$0xff]
    %v3677 = vld [vmem:[%s3674 + $0x10] sm:$0xff]
    %v3678 = vld [vmem:[%s3674 + $0x18] sm:$0xff]
    %v3679 = vld [vmem:[%s3674 + $0x20] sm:$0xff]
    %v3680 = vld [vmem:[%s3674 + $0x28] sm:$0xff]
    %v3681 = vld [vmem:[%s3674 + $0x30] sm:$0xff]
    %v3682 = vld [vmem:[%s3674 + $0x38] sm:$0xff]
    %v3683 = vld [vmem:[%s3674 + $0x40] sm:$0xff]
    %v3684 = vld [vmem:[%s3674 + $0x48] sm:$0xff]
    %v3685 = vld [vmem:[%s3674 + $0x50] sm:$0xff]
    %v3686 = vld [vmem:[%s3674 + $0x58] sm:$0xff]
    %v3687 = vld [vmem:[%s3674 + $0x60] sm:$0xff]
    %v3688 = vld [vmem:[%s3674 + $0x68] sm:$0xff]
    %v3689 = vld [vmem:[%s3674 + $0x70] sm:$0xff]
    %v3690 = vld [vmem:[%s3674 + $0x78] sm:$0xff]
    %v3691 = vlaneseq
    %v3692 = vshrl.u32 %v3691, 7
    %v3693 = vsub.s32 5, %v3692
    %v3694 = vrot.slane %v1961, %v3693
    %3695 = vmatprep.subr.mxu0 0.0
    %3696 = vmatpush1.msra.mxu0 %v3675
    %3697 = vmatprep.subr.mxu0 0.0
    %3698 = vmatpush1.msra.mxu0 %v3676
    %3699 = vmatprep.subr.mxu0 0.0
    %3700 = vmatpush1.msra.mxu0 %v3677
    %3701 = vmatprep.subr.mxu0 0.0
    %3702 = vmatpush1.msra.mxu0 %v3678
    %3703 = vmatprep.subr.mxu0 0.0
    %3704 = vmatpush1.msra.mxu0 %v3679
    %3705 = vmatprep.subr.mxu0 0.0
    %3706 = vmatpush1.msra.mxu0 %v3680
    %3707 = vmatprep.subr.mxu0 0.0
    %3708 = vmatpush1.msra.mxu0 %v3681
    %3709 = vmatprep.subr.mxu0 0.0
    %3710 = vmatpush1.msra.mxu0 %v3682
    %3711 = vmatprep.subr.mxu0 0.0
    %3712 = vmatpush1.msra.mxu0 %v3683
    %3713 = vmatprep.subr.mxu0 0.0
    %3714 = vmatpush1.msra.mxu0 %v3684
    %3715 = vmatprep.subr.mxu0 0.0
    %3716 = vmatpush1.msra.mxu0 %v3685
    %3717 = vmatprep.subr.mxu0 0.0
    %3718 = vmatpush1.msra.mxu0 %v3686
    %3719 = vmatprep.subr.mxu0 0.0
    %3720 = vmatpush1.msra.mxu0 %v3687
    %3721 = vmatprep.subr.mxu0 0.0
    %3722 = vmatpush1.msra.mxu0 %v3688
    %3723 = vmatprep.subr.mxu0 0.0
    %3724 = vmatpush1.msra.mxu0 %v3689
    %3725 = vmatprep.subr.mxu0 0.0
    %3726 = vmatpush1.msra.mxu0 %v3690
    %3727 = vmatprep.subr.mxu0 0.0
    %3728 = vmatpush1.msra.mxu0 0.0
    %3729 = vmatprep.subr.mxu0 0.0
    %3730 = vmatpush1.msra.mxu0 0.0
    %3731 = vmatprep.subr.mxu0 0.0
    %3732 = vmatpush1.msra.mxu0 0.0
    %3733 = vmatprep.subr.mxu0 0.0
    %3734 = vmatpush1.msra.mxu0 0.0
    %3735 = vmatprep.subr.mxu0 0.0
    %3736 = vmatpush1.msra.mxu0 0.0
    %3737 = vmatprep.subr.mxu0 0.0
    %3738 = vmatpush1.msra.mxu0 0.0
    %3739 = vmatprep.subr.mxu0 0.0
    %3740 = vmatpush1.msra.mxu0 0.0
    %3741 = vmatprep.subr.mxu0 0.0
    %3742 = vmatpush1.msra.mxu0 0.0
    %3743 = vmatprep.subr.mxu0 0.0
    %3744 = vmatpush1.msra.mxu0 0.0
    %3745 = vmatprep.subr.mxu0 0.0
    %3746 = vmatpush1.msra.mxu0 0.0
    %3747 = vmatprep.subr.mxu0 0.0
    %3748 = vmatpush1.msra.mxu0 0.0
    %3749 = vmatprep.subr.mxu0 0.0
    %3750 = vmatpush1.msra.mxu0 0.0
    %3751 = vmatprep.subr.mxu0 0.0
    %3752 = vmatpush1.msra.mxu0 0.0
    %3753 = vmatprep.subr.mxu0 0.0
    %3754 = vmatpush1.msra.mxu0 0.0
    %3755 = vmatprep.subr.mxu0 0.0
    %3756 = vmatpush1.msra.mxu0 0.0
    %3757 = vmatprep.subr.mxu0 0.0
    %3758 = vmatpush1.msra.mxu0 0.0
    %3759 = vmatprep.mubr.f32.mxu0 0.0
    %3760 = vmatmul.mubr.f32.gmra.mrb[0].mxu0 %v3672
    %v3761 = vpop.f32.mrb[0].mxu0
    %v3762 = vadd.f32 %v3694, %v3761
    %v3763 = vpop.f32.mrb[0].mxu0
    %3764 = vmatprep.mubr.f32.mxu0 0.0
    %3765 = vmatmul.mubr.f32.gmra.mrb[0].mxu0 %v3673
    %v3766 = vpop.f32.mrb[0].mxu0
    %v3767 = vadd.f32 %v3694, %v3766
    %v3768 = vpop.f32.mrb[0].mxu0
    %3769 = vdwg.mxu0
    %v3770 = vadd.f32 %v3528, %v3762
    %v3771 = vadd.f32 %v3529, %v3767
    %s3772 = sld [smem:[#allocation8]]
    %v3773 = vlaneseq
    %v3774 = vshrl.u32 %v3773, 7
    %v3775 = vstv %s3772
    %vm3776 = vcmp.eq.s32.totalorder %v3774, %v3775
    %v3777 = vsel %vm3776, 1, 0
    %v3778 = vcvt.s32.f32 %v3777
    %v3779 = vmul.f32 %v3770, %v3778
    %v3780 = vsel %vm149, %v3779, 0.0
    %v3781 = vrot.slane %v3780, 4
    %v3782 = vadd.f32 %v3780, %v3781
    %v3783 = vrot.slane %v3782, 2
    %v3784 = vadd.f32 %v3782, %v3783
    %v3785 = vrot.slane %v3784, 1
    %v3786 = vadd.f32 %v3784, %v3785
    %s3787 = sld [smem:[#allocation8 + $0x1]]
    %v3788 = vstv %s3787
    %vm3789 = vcmp.eq.s32.totalorder %v3774, %v3788
    %v3790 = vsel %vm3789, 1, 0
    %v3791 = vcvt.s32.f32 %v3790
    %v3792 = vmul.f32 %v3771, %v3791
    %v3793 = vsel %vm149, %v3792, 0.0
    %v3794 = vrot.slane %v3793, 4
    %v3795 = vadd.f32 %v3793, %v3794
    %v3796 = vrot.slane %v3795, 2
    %v3797 = vadd.f32 %v3795, %v3796
    %v3798 = vrot.slane %v3797, 1
    %v3799 = vadd.f32 %v3797, %v3798
    %vm3800 = vcmask 1040384
    %v3801 = vsel %vm3800, %v3786, %v3799
    %s3802 = scalar_lea.vmem [#allocation15], 16
    %v3803 = vld [vmem:[%s3802] sm:$0xff]
    %vm3804 = vcmask 254976
    %v3805 = vsel %vm3804, %v3801, 0.0
    %3806 = vadd.xlane.f32.xlu0 %v3805
    %v3807 = vpop.xlane.xlu0 %3806
    %v3808 = vmul.f32 %v3807, %v156
    %v3809 = vsub.f32 %v3801, %v3808
    %v3810 = vmul.f32 %v3809, %v3809
    %v3811 = vsel %vm3804, %v3810, 0.0
    %3812 = vadd.xlane.f32.xlu0 %v3811
    %v3813 = vpop.xlane.xlu0 %3812
    %v3814 = vmul.f32 %v3813, %v156
    %v3815 = vadd.f32 %v3814, 1e-05
    %v3816 = vrsqrt.pop %v3815
    %v3817 = vmul.f32 %v3809, %v3816
    %v3818 = vlaneseq
    %v3819 = vshrl.u32 %v3818, 7
    %v3820 = vsub.s32 0, %v3819
    %v3821 = vrot.slane %v3803, %v3820
    %v3822 = vmul.f32 %v3817, %v3821
    %v3823 = vlaneseq
    %v3824 = vshrl.u32 %v3823, 7
    %v3825 = vsub.s32 1, %v3824
    %v3826 = vrot.slane %v3803, %v3825
    %v3827 = vadd.f32 %v3822, %v3826
    %v3828 = vld [vmem:[%s9] sm:$0xff]
    %v3829 = vld [vmem:[%s9 + $0x8] sm:$0xff]
    %v3830 = vld [vmem:[%s9 + $0x10] sm:$0xff]
    %v3831 = vld [vmem:[%s9 + $0x18] sm:$0xff]
    %v3833 = vsel %vm149, %v3827, 0
    %3835 = vmatprep.subr.mxu0 0.0
    %3836 = vmatpush1.msra.mxu0 %v3828
    %3837 = vmatprep.subr.mxu0 0.0
    %3838 = vmatpush1.msra.mxu0 %v3829
    %3839 = vmatprep.subr.mxu0 0.0
    %3840 = vmatpush1.msra.mxu0 %v3830
    %3841 = vmatprep.subr.mxu0 0.0
    %3842 = vmatpush1.msra.mxu0 %v3831
    %3843 = vmatprep.subr.mxu0 0.0
    %3844 = vmatpush1.msra.mxu0 0.0
    %3845 = vmatprep.subr.mxu0 0.0
    %3846 = vmatpush1.msra.mxu0 0.0
    %3847 = vmatprep.subr.mxu0 0.0
    %3848 = vmatpush1.msra.mxu0 0.0
    %3849 = vmatprep.subr.mxu0 0.0
    %3850 = vmatpush1.msra.mxu0 0.0
    %3851 = vmatprep.subr.mxu0 0.0
    %3852 = vmatpush1.msra.mxu0 0.0
    %3853 = vmatprep.subr.mxu0 0.0
    %3854 = vmatpush1.msra.mxu0 0.0
    %3855 = vmatprep.subr.mxu0 0.0
    %3856 = vmatpush1.msra.mxu0 0.0
    %3857 = vmatprep.subr.mxu0 0.0
    %3858 = vmatpush1.msra.mxu0 0.0
    %3859 = vmatprep.subr.mxu0 0.0
    %3860 = vmatpush1.msra.mxu0 0.0
    %3861 = vmatprep.subr.mxu0 0.0
    %3862 = vmatpush1.msra.mxu0 0.0
    %3863 = vmatprep.subr.mxu0 0.0
    %3864 = vmatpush1.msra.mxu0 0.0
    %3865 = vmatprep.subr.mxu0 0.0
    %3866 = vmatpush1.msra.mxu0 0.0
    %3867 = vmatprep.subr.mxu0 0.0
    %3868 = vmatpush1.msra.mxu0 0.0
    %3869 = vmatprep.subr.mxu0 0.0
    %3870 = vmatpush1.msra.mxu0 0.0
    %3871 = vmatprep.subr.mxu0 0.0
    %3872 = vmatpush1.msra.mxu0 0.0
    %3873 = vmatprep.subr.mxu0 0.0
    %3874 = vmatpush1.msra.mxu0 0.0
    %3875 = vmatprep.subr.mxu0 0.0
    %3876 = vmatpush1.msra.mxu0 0.0
    %3877 = vmatprep.subr.mxu0 0.0
    %3878 = vmatpush1.msra.mxu0 0.0
    %3879 = vmatprep.subr.mxu0 0.0
    %3880 = vmatpush1.msra.mxu0 0.0
    %3881 = vmatprep.subr.mxu0 0.0
    %3882 = vmatpush1.msra.mxu0 0.0
    %3883 = vmatprep.subr.mxu0 0.0
    %3884 = vmatpush1.msra.mxu0 0.0
    %3885 = vmatprep.subr.mxu0 0.0
    %3886 = vmatpush1.msra.mxu0 0.0
    %3887 = vmatprep.subr.mxu0 0.0
    %3888 = vmatpush1.msra.mxu0 0.0
    %3889 = vmatprep.subr.mxu0 0.0
    %3890 = vmatpush1.msra.mxu0 0.0
    %3891 = vmatprep.subr.mxu0 0.0
    %3892 = vmatpush1.msra.mxu0 0.0
    %3893 = vmatprep.subr.mxu0 0.0
    %3894 = vmatpush1.msra.mxu0 0.0
    %3895 = vmatprep.subr.mxu0 0.0
    %3896 = vmatpush1.msra.mxu0 0.0
    %3897 = vmatprep.subr.mxu0 0.0
    %3898 = vmatpush1.msra.mxu0 0.0
    %3899 = vmatprep.mubr.f32.mxu0 0.0
    %3900 = vmatmul.mubr.f32.gmra.mrb[0].mxu0 %v3833
    %v3901 = vpop.f32.mrb[0].mxu0
    %v3902 = vadd.f32 0.0, %v3901
    %v3903 = vpop.f32.mrb[0].mxu0
    %3904 = vdwg.mxu0
    %vm3905 = vcmask 123904
    %3906 = vst.msk [vmem:[#allocation16] sm:$0x3] %vm3905, %v3902
    // Predicated region
    $region74: #{_lambda_.1} parent=1 // pred_check
      _
    $region75: #{_lambda_.1} parent=1 // pred_check_branch
      %3908 = sbr.rel (0) target = $region77
    $region76: #{_lambda_.1} parent=1 // pred_region
      %s3910 = ssub.s32 32, 32
      %3911 = vsyncadd [#allocation4], %s3910
      %s3913 = sshll.u32 [#allocation16], 4
      %s3914 = int_to_ptr.vmem [resolvable:$true] %s3913
      %3916 = dma.vmem_to_hbm [thread:$0]  %s3914, 32, %s10, [#allocation4]
    $region77: #{_lambda_.1} parent=1 // pred_fallthru
      _
    // Predicated region
    $region78: #{_lambda_.1} parent=1 // pred_check
      _
    $region79: #{_lambda_.1} parent=1 // pred_check_branch
      %3918 = sbr.rel (0) target = $region81
    $region80: #{_lambda_.1} parent=1 // pred_region
      %3919 = dma.done [#allocation4], 32
    $region81: #{_lambda_.1} parent=1 // pred_fallthru
      _
    %3920 = vsyncpa [#allocation3], 1
    %3921 = vsyncpa [#allocation7], 1
    %3922 = vsyncpa [#allocation11], 1
    %3923 = vsyncpa [#allocation14], 1
    %3924 = vsyncpa [#allocation4], 1
    %3925 = vsyncpa [#allocation5], 1

</llo_original>
